<compile_context>
chip_gen: v7x
topology: tpu7x:2x2x1
jax: 0.10.0
libtpu: 0.0.40
codegen_flags: <defaults>
</compile_context>

<pallas_src>
import numpy as np

import jax
import jax.numpy as jnp
from jax import lax
from jax.experimental import pallas as pl
from jax.experimental.pallas import tpu as pltpu

NDF = 8            # opts.NDF
EMBED = 16         # embed_size (opts.CONDITIONAL == True)
BN_EPS = 1e-5
LEAK = 0.2
VMEM_LIMIT = 16 * 1024 * 1024   # explicit budget, plenty of headroom on v7x


# ------------------------------ Pallas kernels ------------------------------

def conv_leaky_kernel(p_ref, w_ref, o_ref):
    # (Cout, K) @ (K, rows) -> (Cout, rows), fused LeakyReLU(0.2); bf16 out.
    y = jnp.dot(w_ref[...], p_ref[...], preferred_element_type=jnp.float32)
    o_ref[...] = jnp.where(y > 0, y, LEAK * y).astype(o_ref.dtype)


def conv_bn_leaky_kernel(p_ref, w_ref, g_ref, b_ref, o_ref):
    # conv matmul + training-mode BatchNorm (stats over rows) + LeakyReLU.
    y = jnp.dot(w_ref[...], p_ref[...], preferred_element_type=jnp.float32)
    mean = jnp.mean(y, axis=1, keepdims=True)
    var = jnp.mean((y - mean) ** 2, axis=1, keepdims=True)      # biased var
    yn = (y - mean) * lax.rsqrt(var + BN_EPS) * g_ref[...] + b_ref[...]
    o_ref[...] = jnp.where(yn > 0, yn, LEAK * yn).astype(o_ref.dtype)


def conv34_head_kernel(p3_ref, w3_ref, g3_ref, b3_ref, gmat_ref, w4t_ref,
                       g4_ref, b4_ref, wz_ref, wemb_ref, embt_ref, o_ref):
    """conv3 + BN + leaky + in-kernel conv4 (gather-matmul im2col) + BN +
    leaky + NCHW-flatten linear head + sigmoid, all fused in one body."""
    n_batch = embt_ref.shape[1]
    c4 = w4t_ref.shape[1]
    s4 = gmat_ref.shape[2] // n_batch          # 16 = 4x4 output positions

    # ---- conv3 + BN + LeakyReLU -------------------------------------------
    y3 = jnp.dot(w3_ref[...], p3_ref[...], preferred_element_type=jnp.float32)
    m3 = jnp.mean(y3, axis=1, keepdims=True)
    v3 = jnp.mean((y3 - m3) ** 2, axis=1, keepdims=True)
    y3 = (y3 - m3) * lax.rsqrt(v3 + BN_EPS) * g3_ref[...] + b3_ref[...]
    a3 = jnp.where(y3 > 0, y3, LEAK * y3).astype(jnp.bfloat16)   # (C3, N*64)

    # ---- conv4: in-kernel im2col via 16 per-tap 0/1 gather matmuls ---------
    # gmat[t] is a (N*64, N*16) selection matrix; a3 @ gmat[t] == the tap-t
    # patch rows (exact: each output element picks at most one a3 value).
    y4 = jnp.zeros((c4, n_batch * s4), jnp.float32)
    for t in range(16):
        pt = jnp.dot(a3, gmat_ref[t], preferred_element_type=jnp.float32)
        y4 = y4 + jnp.dot(w4t_ref[t], pt.astype(jnp.bfloat16),
                          preferred_element_type=jnp.float32)

    # ---- BN4 + LeakyReLU ----------------------------------------------------
    m4 = jnp.mean(y4, axis=1, keepdims=True)
    v4 = jnp.mean((y4 - m4) ** 2, axis=1, keepdims=True)
    y4 = (y4 - m4) * lax.rsqrt(v4 + BN_EPS) * g4_ref[...] + b4_ref[...]
    a4 = jnp.where(y4 > 0, y4, LEAK * y4)                        # (C4, N*16) f32

    # ---- linear head + sigmoid ---------------------------------------------
    # NCHW flatten folded into wz (C4, 16); per-sample reduce over a static
    # lane slice (no wrapper-side tile/eye/repeat, no sel matmul).
    wz = wz_ref[...]                                             # (C4, 16)
    e_log = jnp.dot(wemb_ref[...], embt_ref[...],
                    preferred_element_type=jnp.float32)          # (1, N)
    lane = lax.broadcasted_iota(jnp.int32, (1, n_batch), 1)
    z_log = jnp.zeros((1, n_batch), jnp.float32)
    for n in range(n_batch):                                     # N is static
        zn = jnp.sum(a4[:, n * s4:(n + 1) * s4] * wz, axis=1, keepdims=True)
        zn = jnp.sum(zn, axis=0, keepdims=True)                  # (1, 1)
        z_log = jnp.where(lane == n, zn, z_log)
    o_ref[...] = jax.nn.sigmoid(z_log + e_log)


# ------------------------------ pallas_call glue -----------------------------

def _full_spec(shape):
    # single grid point, full-array block (block_shape == array dims)
    return pl.BlockSpec(shape, lambda i: (0,) * len(shape))


def _call(kernel, out_shape, out_dtype, *args):
    return pl.pallas_call(
        kernel,
        out_shape=jax.ShapeDtypeStruct(out_shape, out_dtype),
        grid=(1,),
        in_specs=[_full_spec(a.shape) for a in args],
        out_specs=_full_spec(out_shape),
        compiler_params=pltpu.CompilerParams(
            dimension_semantics=("arbitrary",),
            vmem_limit_bytes=VMEM_LIMIT),
    )(*args)


def im2col_T(x_cnhw):
    """4x4 / stride-2 / pad-1 patches of a (C,N,H,W) tensor -> (C*16, N*Ho*Wo).

    Row k = c*16 + (kh*4 + kw); column r = n*Ho*Wo + ho*Wo + wo, matching the
    PyTorch weight reshape (Cout, Cin*4*4) and the NCHW flatten order.  Keeps
    the input dtype (bf16 activations stay bf16)."""
    C, N, H, W = x_cnhw.shape
    Ho, Wo = H // 2, W // 2
    xp = jnp.pad(x_cnhw, ((0, 0), (0, 0), (1, 1), (1, 1)))
    cols = []
    for i in range(4):
        for j in range(4):
            cols.append(xp[:, :, i:i + 2 * Ho:2, j:j + 2 * Wo:2])  # (C,N,Ho,Wo)
    pat = jnp.stack(cols, axis=1)                                  # (C,16,N,Ho,Wo)
    return pat.reshape(C * 16, N * Ho * Wo), (N, Ho, Wo)


def _conv4_gather_mats(n_batch):
    """Trace-time constant: (16, N*8*8, N*4*4) 0/1 gather matrices so that
    act3(C3, N*64) @ G[t] == conv4's im2col patch rows for tap t (zero where
    the tap falls in the pad border)."""
    h = w = 8
    ho = wo = 4
    g = np.zeros((16, n_batch * h * w, n_batch * ho * wo), np.float32)
    for kh in range(4):
        for kw in range(4):
            t = kh * 4 + kw
            for n in range(n_batch):
                for oh in range(ho):
                    for ow in range(wo):
                        ih = 2 * oh + kh - 1
                        iw = 2 * ow + kw - 1
                        if 0 <= ih < h and 0 <= iw < w:
                            g[t, n * h * w + ih * w + iw,
                              n * ho * wo + oh * wo + ow] = 1.0
    return jnp.asarray(g, dtype=jnp.bfloat16)


def discriminator_forward(x_nchw, emb, params):
    n_batch = x_nchw.shape[0]
    x = jnp.transpose(x_nchw, (1, 0, 2, 3)).astype(jnp.bfloat16)   # (3,N,H,W)

    # ----- conv1 + LeakyReLU (no BN); K stays 48, grid=(1,) ------------------
    p1, (N, Ho, Wo) = im2col_T(x)                                  # (48, N*1024)
    w1 = params["conv1"].reshape(NDF, -1).astype(jnp.bfloat16)     # (8, 48)
    y1 = _call(conv_leaky_kernel, (NDF, N * Ho * Wo), jnp.bfloat16, p1, w1)
    x1 = y1.reshape(NDF, N, Ho, Wo)

    # ----- conv2 + BatchNorm + LeakyReLU -------------------------------------
    p2, (N, Ho, Wo) = im2col_T(x1)                                 # (128, N*256)
    w2 = params["conv2"].reshape(NDF * 2, -1).astype(jnp.bfloat16)
    g2 = params["bn2_gamma"].reshape(-1, 1)
    b2 = params["bn2_beta"].reshape(-1, 1)
    y2 = _call(conv_bn_leaky_kernel, (NDF * 2, N * Ho * Wo), jnp.bfloat16,
               p2, w2, g2, b2)
    x2 = y2.reshape(NDF * 2, N, Ho, Wo)

    # ----- conv3 + conv4 + BN + leaky + linear head + sigmoid: one kernel ----
    p3, (N, Ho, Wo) = im2col_T(x2)                                 # (256, N*64)
    w3 = params["conv3"].reshape(NDF * 4, -1).astype(jnp.bfloat16)
    g3 = params["bn3_gamma"].reshape(-1, 1)
    b3 = params["bn3_beta"].reshape(-1, 1)
    gmat = _conv4_gather_mats(n_batch)                             # (16, N*64, N*16)
    w4t = params["conv4"].transpose(2, 3, 0, 1).reshape(16, NDF * 8, NDF * 4)
    w4t = w4t.astype(jnp.bfloat16)                                 # (16, 64, 32)
    g4 = params["bn4_gamma"].reshape(-1, 1)
    b4 = params["bn4_beta"].reshape(-1, 1)
    wl = params["linear"].astype(jnp.float32)                      # (1, 1024+EMBED)
    c4s = NDF * 8 * 16
    wz = wl[0, :c4s].reshape(NDF * 8, 16)                          # (64, 16)
    wemb = wl[:, c4s:]                                             # (1, EMBED)
    embt = emb.astype(jnp.float32).T                               # (EMBED, N)
    out = _call(conv34_head_kernel, (1, n_batch), jnp.float32,
                p3, w3, g3, b3, gmat, w4t, g4, b4, wz, wemb, embt)
    return out.T                                                   # (N, 1)


# -------------------------------- reference ----------------------------------

def reference_forward(x, emb, params):
    def conv(h, w):
        return lax.conv_general_dilated(
            h, w, (2, 2), ((1, 1), (1, 1)),
            dimension_numbers=("NCHW", "OIHW", "NCHW"),
            precision=lax.Precision.HIGHEST)

    def leaky(h):
        return jnp.where(h > 0, h, LEAK * h)

    def bn(h, g, b):
        mean = jnp.mean(h, axis=(0, 2, 3), keepdims=True)
        var = jnp.mean((h - mean) ** 2, axis=(0, 2, 3), keepdims=True)
        return ((h - mean) / jnp.sqrt(var + BN_EPS)
                * g.reshape(1, -1, 1, 1) + b.reshape(1, -1, 1, 1))

    h = leaky(conv(x, params["conv1"]))
    h = leaky(bn(conv(h, params["conv2"]), params["bn2_gamma"], params["bn2_beta"]))
    h = leaky(bn(conv(h, params["conv3"]), params["bn3_gamma"], params["bn3_beta"]))
    h = leaky(bn(conv(h, params["conv4"]), params["bn4_gamma"], params["bn4_beta"]))
    z = h.reshape(h.shape[0], -1)
    zemb = jnp.concatenate([z, emb], axis=-1)
    return jax.nn.sigmoid(zemb @ params["linear"].T)


# ----------------------------------- main -------------------------------------

if __name__ == "__main__":
    key = jax.random.PRNGKey(0)
    ks = jax.random.split(key, 14)

    params = {
        "conv1": 0.02 * jax.random.normal(ks[0], (NDF, 3, 4, 4), jnp.float32),
        "conv2": 0.02 * jax.random.normal(ks[1], (NDF * 2, NDF, 4, 4), jnp.float32),
        "conv3": 0.02 * jax.random.normal(ks[2], (NDF * 4, NDF * 2, 4, 4), jnp.float32),
        "conv4": 0.02 * jax.random.normal(ks[3], (NDF * 8, NDF * 4, 4, 4), jnp.float32),
        "bn2_gamma": 1.0 + 0.1 * jax.random.normal(ks[4], (NDF * 2,), jnp.float32),
        "bn2_beta": 0.1 * jax.random.normal(ks[5], (NDF * 2,), jnp.float32),
        "bn3_gamma": 1.0 + 0.1 * jax.random.normal(ks[6], (NDF * 4,), jnp.float32),
        "bn3_beta": 0.1 * jax.random.normal(ks[7], (NDF * 4,), jnp.float32),
        "bn4_gamma": 1.0 + 0.1 * jax.random.normal(ks[8], (NDF * 8,), jnp.float32),
        "bn4_beta": 0.1 * jax.random.normal(ks[9], (NDF * 8,), jnp.float32),
        "linear": 0.02 * jax.random.normal(ks[10], (1, 4 * 4 * NDF * 8 + EMBED),
                                           jnp.float32),
    }

    # input spatial size must be 64 so that 4 stride-2 convs give 4x4 maps
    x = jax.random.normal(ks[11], (2, 3, 64, 64), jnp.float32)     # NCHW
    emb = jax.random.normal(ks[12], (2, EMBED), jnp.float32)

    fwd = jax.jit(discriminator_forward)
    out = jax.block_until_ready(fwd(x, emb, params))
    ref = jax.block_until_ready(jax.jit(reference_forward)(x, emb, params))

    assert out.shape == (2, 1), out.shape
    # tolerance accounts for bf16 MXU inputs (f32 accumulation / elementwise)
    assert jnp.allclose(out, ref, rtol=1e-2, atol=1e-2), (out, ref)
    print("KERNEL_OK")
</pallas_src>

<mosaic_0001>
module attributes {stable_mosaic.version = 11 : i64} {
  func.func @conv_leaky_kernel(%arg0: i32, %arg1: memref<48x2048xbf16, #tpu.memory_space<vmem>>, %arg2: memref<8x48xbf16, #tpu.memory_space<vmem>>, %arg3: memref<8x2048xbf16, #tpu.memory_space<vmem>>) attributes {dimension_semantics = [#tpu.dimension_semantics<arbitrary>], iteration_bounds = array<i64: 1>, scalar_prefetch = 0 : i64, scratch_operands = 0 : i64, tpu.core_type = #tpu.core_type<tc>, window_params = [{pipeline_mode = #tpu.pipeline_mode<synchronous>, transform_indices = @transform_0, window_bounds = array<i64: 48, 2048>}, {pipeline_mode = #tpu.pipeline_mode<synchronous>, transform_indices = @transform_1, window_bounds = array<i64: 8, 48>}, {pipeline_mode = #tpu.pipeline_mode<synchronous>, transform_indices = @transform_2, window_bounds = array<i64: 8, 2048>}]} {
    %c0 = arith.constant 0 : index
    %c0_0 = arith.constant 0 : index
    %0 = vector.load %arg2[%c0, %c0_0] : memref<8x48xbf16, #tpu.memory_space<vmem>>, vector<8x48xbf16>
    %c0_1 = arith.constant 0 : index
    %c0_2 = arith.constant 0 : index
    %1 = vector.load %arg1[%c0_1, %c0_2] : memref<48x2048xbf16, #tpu.memory_space<vmem>>, vector<48x2048xbf16>
    %cst = arith.constant dense<0.000000e+00> : vector<8x2048xf32>
    %2 = tpu.matmul %0, %1, %cst {dimension_numbers = #tpu.dot_dimension_numbers<[1], [0], [0], [1], [0, 0, 1, 1], [], []>} : vector<8x48xbf16>, vector<48x2048xbf16>, vector<8x2048xf32> -> vector<8x2048xf32>
    %cst_3 = arith.constant 0.000000e+00 : f32
    %3 = vector.broadcast %cst_3 : f32 to vector<8x2048xf32>
    %4 = arith.cmpf ogt, %2, %3 : vector<8x2048xf32>
    %cst_4 = arith.constant 2.000000e-01 : f32
    %5 = vector.broadcast %cst_4 : f32 to vector<8x2048xf32>
    %6 = arith.mulf %5, %2 : vector<8x2048xf32>
    %7 = arith.select %4, %2, %6 : vector<8x2048xi1>, vector<8x2048xf32>
    %8 = arith.truncf %7 : vector<8x2048xf32> to vector<8x2048xbf16>
    %c0_5 = arith.constant 0 : index
    %c0_6 = arith.constant 0 : index
    %9 = vector.load %arg3[%c0_5, %c0_6] : memref<8x2048xbf16, #tpu.memory_space<vmem>>, vector<8x2048xbf16>
    tpu.vector_store %arg3[%c0_5, %c0_6], %8 {strides = array<i32>} : memref<8x2048xbf16, #tpu.memory_space<vmem>>, vector<8x2048xbf16>,
    return
  }
  func.func @transform_0(%arg0: i32) -> (i32, i32) {
    %c0_i32 = arith.constant 0 : i32
    %c0_i32_0 = arith.constant 0 : i32
    %c0_i32_1 = arith.constant 0 : i32
    return %c0_i32, %c0_i32_0 : i32, i32
  }
  func.func @transform_1(%arg0: i32) -> (i32, i32) {
    %c0_i32 = arith.constant 0 : i32
    %c0_i32_0 = arith.constant 0 : i32
    %c0_i32_1 = arith.constant 0 : i32
    return %c0_i32, %c0_i32_0 : i32, i32
  }
  func.func @transform_2(%arg0: i32) -> (i32, i32) {
    %c0_i32 = arith.constant 0 : i32
    %c0_i32_0 = arith.constant 0 : i32
    %c0_i32_1 = arith.constant 0 : i32
    return %c0_i32, %c0_i32_0 : i32, i32
  }
}

module attributes {stable_mosaic.version = 11 : i64} {
  func.func @conv_bn_leaky_kernel(%arg0: i32, %arg1: memref<128x512xbf16, #tpu.memory_space<vmem>>, %arg2: memref<16x128xbf16, #tpu.memory_space<vmem>>, %arg3: memref<16x1xf32, #tpu.memory_space<vmem>>, %arg4: memref<16x1xf32, #tpu.memory_space<vmem>>, %arg5: memref<16x512xbf16, #tpu.memory_space<vmem>>) attributes {dimension_semantics = [#tpu.dimension_semantics<arbitrary>], iteration_bounds = array<i64: 1>, scalar_prefetch = 0 : i64, scratch_operands = 0 : i64, tpu.core_type = #tpu.core_type<tc>, window_params = [{pipeline_mode = #tpu.pipeline_mode<synchronous>, transform_indices = @transform_0, window_bounds = array<i64: 128, 512>}, {pipeline_mode = #tpu.pipeline_mode<synchronous>, transform_indices = @transform_1, window_bounds = array<i64: 16, 128>}, {pipeline_mode = #tpu.pipeline_mode<synchronous>, transform_indices = @transform_2, window_bounds = array<i64: 16, 1>}, {pipeline_mode = #tpu.pipeline_mode<synchronous>, transform_indices = @transform_3, window_bounds = array<i64: 16, 1>}, {pipeline_mode = #tpu.pipeline_mode<synchronous>, transform_indices = @transform_4, window_bounds = array<i64: 16, 512>}]} {
    %c0 = arith.constant 0 : index
    %c0_0 = arith.constant 0 : index
    %0 = vector.load %arg2[%c0, %c0_0] : memref<16x128xbf16, #tpu.memory_space<vmem>>, vector<16x128xbf16>
    %c0_1 = arith.constant 0 : index
    %c0_2 = arith.constant 0 : index
    %1 = vector.load %arg1[%c0_1, %c0_2] : memref<128x512xbf16, #tpu.memory_space<vmem>>, vector<128x512xbf16>
    %cst = arith.constant dense<0.000000e+00> : vector<16x512xf32>
    %2 = tpu.matmul %0, %1, %cst {dimension_numbers = #tpu.dot_dimension_numbers<[1], [0], [0], [1], [0, 0, 1, 1], [], []>} : vector<16x128xbf16>, vector<128x512xbf16>, vector<16x512xf32> -> vector<16x512xf32>
    %cst_3 = arith.constant dense<0.000000e+00> : vector<16xf32>
    %3 = vector.multi_reduction <add>, %2, %cst_3 [1] : vector<16x512xf32> to vector<16xf32>
    %4 = vector.shape_cast %3 : vector<16xf32> to vector<16x1xf32>
    %cst_4 = arith.constant 5.120000e+02 : f32
    %5 = vector.broadcast %cst_4 : f32 to vector<16x1xf32>
    %6 = arith.divf %4, %5 : vector<16x1xf32>
    %7 = vector.broadcast %6 : vector<16x1xf32> to vector<16x512xf32>
    %8 = arith.subf %2, %7 : vector<16x512xf32>
    %9 = arith.mulf %8, %8 : vector<16x512xf32>
    %cst_5 = arith.constant dense<0.000000e+00> : vector<16xf32>
    %10 = vector.multi_reduction <add>, %9, %cst_5 [1] : vector<16x512xf32> to vector<16xf32>
    %11 = vector.shape_cast %10 : vector<16xf32> to vector<16x1xf32>
    %cst_6 = arith.constant 5.120000e+02 : f32
    %12 = vector.broadcast %cst_6 : f32 to vector<16x1xf32>
    %13 = arith.divf %11, %12 : vector<16x1xf32>
    %14 = vector.broadcast %6 : vector<16x1xf32> to vector<16x512xf32>
    %15 = arith.subf %2, %14 : vector<16x512xf32>
    %cst_7 = arith.constant 9.99999974E-6 : f32
    %16 = vector.broadcast %cst_7 : f32 to vector<16x1xf32>
    %17 = arith.addf %13, %16 : vector<16x1xf32>
    %18 = math.rsqrt %17 : vector<16x1xf32>
    %19 = vector.broadcast %18 : vector<16x1xf32> to vector<16x512xf32>
    %20 = arith.mulf %15, %19 : vector<16x512xf32>
    %c0_8 = arith.constant 0 : index
    %c0_9 = arith.constant 0 : index
    %21 = vector.load %arg3[%c0_8, %c0_9] : memref<16x1xf32, #tpu.memory_space<vmem>>, vector<16x1xf32>
    %22 = vector.broadcast %21 : vector<16x1xf32> to vector<16x512xf32>
    %23 = arith.mulf %20, %22 : vector<16x512xf32>
    %c0_10 = arith.constant 0 : index
    %c0_11 = arith.constant 0 : index
    %24 = vector.load %arg4[%c0_10, %c0_11] : memref<16x1xf32, #tpu.memory_space<vmem>>, vector<16x1xf32>
    %25 = vector.broadcast %24 : vector<16x1xf32> to vector<16x512xf32>
    %26 = arith.addf %23, %25 : vector<16x512xf32>
    %cst_12 = arith.constant 0.000000e+00 : f32
    %27 = vector.broadcast %cst_12 : f32 to vector<16x512xf32>
    %28 = arith.cmpf ogt, %26, %27 : vector<16x512xf32>
    %cst_13 = arith.constant 2.000000e-01 : f32
    %29 = vector.broadcast %cst_13 : f32 to vector<16x512xf32>
    %30 = arith.mulf %29, %26 : vector<16x512xf32>
    %31 = arith.select %28, %26, %30 : vector<16x512xi1>, vector<16x512xf32>
    %32 = arith.truncf %31 : vector<16x512xf32> to vector<16x512xbf16>
    %c0_14 = arith.constant 0 : index
    %c0_15 = arith.constant 0 : index
    %33 = vector.load %arg5[%c0_14, %c0_15] : memref<16x512xbf16, #tpu.memory_space<vmem>>, vector<16x512xbf16>
    tpu.vector_store %arg5[%c0_14, %c0_15], %32 {strides = array<i32>} : memref<16x512xbf16, #tpu.memory_space<vmem>>, vector<16x512xbf16>,
    return
  }
  func.func @transform_0(%arg0: i32) -> (i32, i32) {
    %c0_i32 = arith.constant 0 : i32
    %c0_i32_0 = arith.constant 0 : i32
    %c0_i32_1 = arith.constant 0 : i32
    return %c0_i32, %c0_i32_0 : i32, i32
  }
  func.func @transform_1(%arg0: i32) -> (i32, i32) {
    %c0_i32 = arith.constant 0 : i32
    %c0_i32_0 = arith.constant 0 : i32
    %c0_i32_1 = arith.constant 0 : i32
    return %c0_i32, %c0_i32_0 : i32, i32
  }
  func.func @transform_2(%arg0: i32) -> (i32, i32) {
    %c0_i32 = arith.constant 0 : i32
    %c0_i32_0 = arith.constant 0 : i32
    %c0_i32_1 = arith.constant 0 : i32
    return %c0_i32, %c0_i32_0 : i32, i32
  }
  func.func @transform_3(%arg0: i32) -> (i32, i32) {
    %c0_i32 = arith.constant 0 : i32
    %c0_i32_0 = arith.constant 0 : i32
    %c0_i32_1 = arith.constant 0 : i32
    return %c0_i32, %c0_i32_0 : i32, i32
  }
  func.func @transform_4(%arg0: i32) -> (i32, i32) {
    %c0_i32 = arith.constant 0 : i32
    %c0_i32_0 = arith.constant 0 : i32
    %c0_i32_1 = arith.constant 0 : i32
    return %c0_i32, %c0_i32_0 : i32, i32
  }
}

module attributes {stable_mosaic.version = 11 : i64} {
  func.func @conv34_head_kernel(%arg0: i32, %arg1: memref<256x128xbf16, #tpu.memory_space<vmem>>, %arg2: memref<32x256xbf16, #tpu.memory_space<vmem>>, %arg3: memref<32x1xf32, #tpu.memory_space<vmem>>, %arg4: memref<32x1xf32, #tpu.memory_space<vmem>>, %arg5: memref<16x128x32xbf16, #tpu.memory_space<vmem>>, %arg6: memref<16x64x32xbf16, #tpu.memory_space<vmem>>, %arg7: memref<64x1xf32, #tpu.memory_space<vmem>>, %arg8: memref<64x1xf32, #tpu.memory_space<vmem>>, %arg9: memref<64x16xf32, #tpu.memory_space<vmem>>, %arg10: memref<1x16xf32, #tpu.memory_space<vmem>>, %arg11: memref<16x2xf32, #tpu.memory_space<vmem>>, %arg12: memref<1x2xf32, #tpu.memory_space<vmem>>) attributes {dimension_semantics = [#tpu.dimension_semantics<arbitrary>], iteration_bounds = array<i64: 1>, scalar_prefetch = 0 : i64, scratch_operands = 0 : i64, tpu.core_type = #tpu.core_type<tc>, window_params = [{pipeline_mode = #tpu.pipeline_mode<synchronous>, transform_indices = @transform_0, window_bounds = array<i64: 256, 128>}, {pipeline_mode = #tpu.pipeline_mode<synchronous>, transform_indices = @transform_1, window_bounds = array<i64: 32, 256>}, {pipeline_mode = #tpu.pipeline_mode<synchronous>, transform_indices = @transform_2, window_bounds = array<i64: 32, 1>}, {pipeline_mode = #tpu.pipeline_mode<synchronous>, transform_indices = @transform_3, window_bounds = array<i64: 32, 1>}, {pipeline_mode = #tpu.pipeline_mode<synchronous>, transform_indices = @transform_4, window_bounds = array<i64: 16, 128, 32>}, {pipeline_mode = #tpu.pipeline_mode<synchronous>, transform_indices = @transform_5, window_bounds = array<i64: 16, 64, 32>}, {pipeline_mode = #tpu.pipeline_mode<synchronous>, transform_indices = @transform_6, window_bounds = array<i64: 64, 1>}, {pipeline_mode = #tpu.pipeline_mode<synchronous>, transform_indices = @transform_7, window_bounds = array<i64: 64, 1>}, {pipeline_mode = #tpu.pipeline_mode<synchronous>, transform_indices = @transform_8, window_bounds = array<i64: 64, 16>}, {pipeline_mode = #tpu.pipeline_mode<synchronous>, transform_indices = @transform_9, window_bounds = array<i64: 1, 16>}, {pipeline_mode = #tpu.pipeline_mode<synchronous>, transform_indices = @transform_10, window_bounds = array<i64: 16, 2>}, {pipeline_mode = #tpu.pipeline_mode<synchronous>, transform_indices = @transform_11, window_bounds = array<i64: 1, 2>}]} {
    %c0 = arith.constant 0 : index
    %c0_0 = arith.constant 0 : index
    %0 = vector.load %arg2[%c0, %c0_0] : memref<32x256xbf16, #tpu.memory_space<vmem>>, vector<32x256xbf16>
    %c0_1 = arith.constant 0 : index
    %c0_2 = arith.constant 0 : index
    %1 = vector.load %arg1[%c0_1, %c0_2] : memref<256x128xbf16, #tpu.memory_space<vmem>>, vector<256x128xbf16>
    %cst = arith.constant dense<0.000000e+00> : vector<32x128xf32>
    %2 = tpu.matmul %0, %1, %cst {dimension_numbers = #tpu.dot_dimension_numbers<[1], [0], [0], [1], [0, 0, 1, 1], [], []>} : vector<32x256xbf16>, vector<256x128xbf16>, vector<32x128xf32> -> vector<32x128xf32>
    %cst_3 = arith.constant dense<0.000000e+00> : vector<32xf32>
    %3 = vector.multi_reduction <add>, %2, %cst_3 [1] : vector<32x128xf32> to vector<32xf32>
    %4 = vector.shape_cast %3 : vector<32xf32> to vector<32x1xf32>
    %cst_4 = arith.constant 1.280000e+02 : f32
    %5 = vector.broadcast %cst_4 : f32 to vector<32x1xf32>
    %6 = arith.divf %4, %5 : vector<32x1xf32>
    %7 = vector.broadcast %6 : vector<32x1xf32> to vector<32x128xf32>
    %8 = arith.subf %2, %7 : vector<32x128xf32>
    %9 = arith.mulf %8, %8 : vector<32x128xf32>
    %cst_5 = arith.constant dense<0.000000e+00> : vector<32xf32>
    %10 = vector.multi_reduction <add>, %9, %cst_5 [1] : vector<32x128xf32> to vector<32xf32>
    %11 = vector.shape_cast %10 : vector<32xf32> to vector<32x1xf32>
    %cst_6 = arith.constant 1.280000e+02 : f32
    %12 = vector.broadcast %cst_6 : f32 to vector<32x1xf32>
    %13 = arith.divf %11, %12 : vector<32x1xf32>
    %14 = vector.broadcast %6 : vector<32x1xf32> to vector<32x128xf32>
    %15 = arith.subf %2, %14 : vector<32x128xf32>
    %cst_7 = arith.constant 9.99999974E-6 : f32
    %16 = vector.broadcast %cst_7 : f32 to vector<32x1xf32>
    %17 = arith.addf %13, %16 : vector<32x1xf32>
    %18 = math.rsqrt %17 : vector<32x1xf32>
    %19 = vector.broadcast %18 : vector<32x1xf32> to vector<32x128xf32>
    %20 = arith.mulf %15, %19 : vector<32x128xf32>
    %c0_8 = arith.constant 0 : index
    %c0_9 = arith.constant 0 : index
    %21 = vector.load %arg3[%c0_8, %c0_9] : memref<32x1xf32, #tpu.memory_space<vmem>>, vector<32x1xf32>
    %22 = vector.broadcast %21 : vector<32x1xf32> to vector<32x128xf32>
    %23 = arith.mulf %20, %22 : vector<32x128xf32>
    %c0_10 = arith.constant 0 : index
    %c0_11 = arith.constant 0 : index
    %24 = vector.load %arg4[%c0_10, %c0_11] : memref<32x1xf32, #tpu.memory_space<vmem>>, vector<32x1xf32>
    %25 = vector.broadcast %24 : vector<32x1xf32> to vector<32x128xf32>
    %26 = arith.addf %23, %25 : vector<32x128xf32>
    %cst_12 = arith.constant 0.000000e+00 : f32
    %27 = vector.broadcast %cst_12 : f32 to vector<32x128xf32>
    %28 = arith.cmpf ogt, %26, %27 : vector<32x128xf32>
    %cst_13 = arith.constant 2.000000e-01 : f32
    %29 = vector.broadcast %cst_13 : f32 to vector<32x128xf32>
    %30 = arith.mulf %29, %26 : vector<32x128xf32>
    %31 = arith.select %28, %26, %30 : vector<32x128xi1>, vector<32x128xf32>
    %32 = arith.truncf %31 : vector<32x128xf32> to vector<32x128xbf16>
    %cst_14 = arith.constant 0.000000e+00 : f32
    %33 = vector.broadcast %cst_14 : f32 to vector<64x32xf32>
    %c0_15 = arith.constant 0 : index
    %c0_16 = arith.constant 0 : index
    %c0_17 = arith.constant 0 : index
    %34 = vector.load %arg5[%c0_15, %c0_16, %c0_17] : memref<16x128x32xbf16, #tpu.memory_space<vmem>>, vector<1x128x32xbf16>
    %35 = vector.shape_cast %34 : vector<1x128x32xbf16> to vector<128x32xbf16>
    %cst_18 = arith.constant dense<0.000000e+00> : vector<32x32xf32>
    %36 = tpu.matmul %32, %35, %cst_18 {dimension_numbers = #tpu.dot_dimension_numbers<[1], [0], [0], [1], [0, 0, 1, 1], [], []>} : vector<32x128xbf16>, vector<128x32xbf16>, vector<32x32xf32> -> vector<32x32xf32>
    %c0_19 = arith.constant 0 : index
    %c0_20 = arith.constant 0 : index
    %c0_21 = arith.constant 0 : index
    %37 = vector.load %arg6[%c0_19, %c0_20, %c0_21] : memref<16x64x32xbf16, #tpu.memory_space<vmem>>, vector<1x64x32xbf16>
    %38 = vector.shape_cast %37 : vector<1x64x32xbf16> to vector<64x32xbf16>
    %39 = arith.truncf %36 : vector<32x32xf32> to vector<32x32xbf16>
    %cst_22 = arith.constant dense<0.000000e+00> : vector<64x32xf32>
    %40 = tpu.matmul %38, %39, %cst_22 {dimension_numbers = #tpu.dot_dimension_numbers<[1], [0], [0], [1], [0, 0, 1, 1], [], []>} : vector<64x32xbf16>, vector<32x32xbf16>, vector<64x32xf32> -> vector<64x32xf32>
    %41 = arith.addf %33, %40 : vector<64x32xf32>
    %c1 = arith.constant 1 : index
    %c0_23 = arith.constant 0 : index
    %c0_24 = arith.constant 0 : index
    %42 = vector.load %arg5[%c1, %c0_23, %c0_24] : memref<16x128x32xbf16, #tpu.memory_space<vmem>>, vector<1x128x32xbf16>
    %43 = vector.shape_cast %42 : vector<1x128x32xbf16> to vector<128x32xbf16>
    %cst_25 = arith.constant dense<0.000000e+00> : vector<32x32xf32>
    %44 = tpu.matmul %32, %43, %cst_25 {dimension_numbers = #tpu.dot_dimension_numbers<[1], [0], [0], [1], [0, 0, 1, 1], [], []>} : vector<32x128xbf16>, vector<128x32xbf16>, vector<32x32xf32> -> vector<32x32xf32>
    %c1_26 = arith.constant 1 : index
    %c0_27 = arith.constant 0 : index
    %c0_28 = arith.constant 0 : index
    %45 = vector.load %arg6[%c1_26, %c0_27, %c0_28] : memref<16x64x32xbf16, #tpu.memory_space<vmem>>, vector<1x64x32xbf16>
    %46 = vector.shape_cast %45 : vector<1x64x32xbf16> to vector<64x32xbf16>
    %47 = arith.truncf %44 : vector<32x32xf32> to vector<32x32xbf16>
    %cst_29 = arith.constant dense<0.000000e+00> : vector<64x32xf32>
    %48 = tpu.matmul %46, %47, %cst_29 {dimension_numbers = #tpu.dot_dimension_numbers<[1], [0], [0], [1], [0, 0, 1, 1], [], []>} : vector<64x32xbf16>, vector<32x32xbf16>, vector<64x32xf32> -> vector<64x32xf32>
    %49 = arith.addf %41, %48 : vector<64x32xf32>
    %c2 = arith.constant 2 : index
    %c0_30 = arith.constant 0 : index
    %c0_31 = arith.constant 0 : index
    %50 = vector.load %arg5[%c2, %c0_30, %c0_31] : memref<16x128x32xbf16, #tpu.memory_space<vmem>>, vector<1x128x32xbf16>
    %51 = vector.shape_cast %50 : vector<1x128x32xbf16> to vector<128x32xbf16>
    %cst_32 = arith.constant dense<0.000000e+00> : vector<32x32xf32>
    %52 = tpu.matmul %32, %51, %cst_32 {dimension_numbers = #tpu.dot_dimension_numbers<[1], [0], [0], [1], [0, 0, 1, 1], [], []>} : vector<32x128xbf16>, vector<128x32xbf16>, vector<32x32xf32> -> vector<32x32xf32>
    %c2_33 = arith.constant 2 : index
    %c0_34 = arith.constant 0 : index
    %c0_35 = arith.constant 0 : index
    %53 = vector.load %arg6[%c2_33, %c0_34, %c0_35] : memref<16x64x32xbf16, #tpu.memory_space<vmem>>, vector<1x64x32xbf16>
    %54 = vector.shape_cast %53 : vector<1x64x32xbf16> to vector<64x32xbf16>
    %55 = arith.truncf %52 : vector<32x32xf32> to vector<32x32xbf16>
    %cst_36 = arith.constant dense<0.000000e+00> : vector<64x32xf32>
    %56 = tpu.matmul %54, %55, %cst_36 {dimension_numbers = #tpu.dot_dimension_numbers<[1], [0], [0], [1], [0, 0, 1, 1], [], []>} : vector<64x32xbf16>, vector<32x32xbf16>, vector<64x32xf32> -> vector<64x32xf32>
    %57 = arith.addf %49, %56 : vector<64x32xf32>
    %c3 = arith.constant 3 : index
    %c0_37 = arith.constant 0 : index
    %c0_38 = arith.constant 0 : index
    %58 = vector.load %arg5[%c3, %c0_37, %c0_38] : memref<16x128x32xbf16, #tpu.memory_space<vmem>>, vector<1x128x32xbf16>
    %59 = vector.shape_cast %58 : vector<1x128x32xbf16> to vector<128x32xbf16>
    %cst_39 = arith.constant dense<0.000000e+00> : vector<32x32xf32>
    %60 = tpu.matmul %32, %59, %cst_39 {dimension_numbers = #tpu.dot_dimension_numbers<[1], [0], [0], [1], [0, 0, 1, 1], [], []>} : vector<32x128xbf16>, vector<128x32xbf16>, vector<32x32xf32> -> vector<32x32xf32>
    %c3_40 = arith.constant 3 : index
    %c0_41 = arith.constant 0 : index
    %c0_42 = arith.constant 0 : index
    %61 = vector.load %arg6[%c3_40, %c0_41, %c0_42] : memref<16x64x32xbf16, #tpu.memory_space<vmem>>, vector<1x64x32xbf16>
    %62 = vector.shape_cast %61 : vector<1x64x32xbf16> to vector<64x32xbf16>
    %63 = arith.truncf %60 : vector<32x32xf32> to vector<32x32xbf16>
    %cst_43 = arith.constant dense<0.000000e+00> : vector<64x32xf32>
    %64 = tpu.matmul %62, %63, %cst_43 {dimension_numbers = #tpu.dot_dimension_numbers<[1], [0], [0], [1], [0, 0, 1, 1], [], []>} : vector<64x32xbf16>, vector<32x32xbf16>, vector<64x32xf32> -> vector<64x32xf32>
    %65 = arith.addf %57, %64 : vector<64x32xf32>
    %c4 = arith.constant 4 : index
    %c0_44 = arith.constant 0 : index
    %c0_45 = arith.constant 0 : index
    %66 = vector.load %arg5[%c4, %c0_44, %c0_45] : memref<16x128x32xbf16, #tpu.memory_space<vmem>>, vector<1x128x32xbf16>
    %67 = vector.shape_cast %66 : vector<1x128x32xbf16> to vector<128x32xbf16>
    %cst_46 = arith.constant dense<0.000000e+00> : vector<32x32xf32>
    %68 = tpu.matmul %32, %67, %cst_46 {dimension_numbers = #tpu.dot_dimension_numbers<[1], [0], [0], [1], [0, 0, 1, 1], [], []>} : vector<32x128xbf16>, vector<128x32xbf16>, vector<32x32xf32> -> vector<32x32xf32>
    %c4_47 = arith.constant 4 : index
    %c0_48 = arith.constant 0 : index
    %c0_49 = arith.constant 0 : index
    %69 = vector.load %arg6[%c4_47, %c0_48, %c0_49] : memref<16x64x32xbf16, #tpu.memory_space<vmem>>, vector<1x64x32xbf16>
    %70 = vector.shape_cast %69 : vector<1x64x32xbf16> to vector<64x32xbf16>
    %71 = arith.truncf %68 : vector<32x32xf32> to vector<32x32xbf16>
    %cst_50 = arith.constant dense<0.000000e+00> : vector<64x32xf32>
    %72 = tpu.matmul %70, %71, %cst_50 {dimension_numbers = #tpu.dot_dimension_numbers<[1], [0], [0], [1], [0, 0, 1, 1], [], []>} : vector<64x32xbf16>, vector<32x32xbf16>, vector<64x32xf32> -> vector<64x32xf32>
    %73 = arith.addf %65, %72 : vector<64x32xf32>
    %c5 = arith.constant 5 : index
    %c0_51 = arith.constant 0 : index
    %c0_52 = arith.constant 0 : index
    %74 = vector.load %arg5[%c5, %c0_51, %c0_52] : memref<16x128x32xbf16, #tpu.memory_space<vmem>>, vector<1x128x32xbf16>
    %75 = vector.shape_cast %74 : vector<1x128x32xbf16> to vector<128x32xbf16>
    %cst_53 = arith.constant dense<0.000000e+00> : vector<32x32xf32>
    %76 = tpu.matmul %32, %75, %cst_53 {dimension_numbers = #tpu.dot_dimension_numbers<[1], [0], [0], [1], [0, 0, 1, 1], [], []>} : vector<32x128xbf16>, vector<128x32xbf16>, vector<32x32xf32> -> vector<32x32xf32>
    %c5_54 = arith.constant 5 : index
    %c0_55 = arith.constant 0 : index
    %c0_56 = arith.constant 0 : index
    %77 = vector.load %arg6[%c5_54, %c0_55, %c0_56] : memref<16x64x32xbf16, #tpu.memory_space<vmem>>, vector<1x64x32xbf16>
    %78 = vector.shape_cast %77 : vector<1x64x32xbf16> to vector<64x32xbf16>
    %79 = arith.truncf %76 : vector<32x32xf32> to vector<32x32xbf16>
    %cst_57 = arith.constant dense<0.000000e+00> : vector<64x32xf32>
    %80 = tpu.matmul %78, %79, %cst_57 {dimension_numbers = #tpu.dot_dimension_numbers<[1], [0], [0], [1], [0, 0, 1, 1], [], []>} : vector<64x32xbf16>, vector<32x32xbf16>, vector<64x32xf32> -> vector<64x32xf32>
    %81 = arith.addf %73, %80 : vector<64x32xf32>
    %c6 = arith.constant 6 : index
    %c0_58 = arith.constant 0 : index
    %c0_59 = arith.constant 0 : index
    %82 = vector.load %arg5[%c6, %c0_58, %c0_59] : memref<16x128x32xbf16, #tpu.memory_space<vmem>>, vector<1x128x32xbf16>
    %83 = vector.shape_cast %82 : vector<1x128x32xbf16> to vector<128x32xbf16>
    %cst_60 = arith.constant dense<0.000000e+00> : vector<32x32xf32>
    %84 = tpu.matmul %32, %83, %cst_60 {dimension_numbers = #tpu.dot_dimension_numbers<[1], [0], [0], [1], [0, 0, 1, 1], [], []>} : vector<32x128xbf16>, vector<128x32xbf16>, vector<32x32xf32> -> vector<32x32xf32>
    %c6_61 = arith.constant 6 : index
    %c0_62 = arith.constant 0 : index
    %c0_63 = arith.constant 0 : index
    %85 = vector.load %arg6[%c6_61, %c0_62, %c0_63] : memref<16x64x32xbf16, #tpu.memory_space<vmem>>, vector<1x64x32xbf16>
    %86 = vector.shape_cast %85 : vector<1x64x32xbf16> to vector<64x32xbf16>
    %87 = arith.truncf %84 : vector<32x32xf32> to vector<32x32xbf16>
    %cst_64 = arith.constant dense<0.000000e+00> : vector<64x32xf32>
    %88 = tpu.matmul %86, %87, %cst_64 {dimension_numbers = #tpu.dot_dimension_numbers<[1], [0], [0], [1], [0, 0, 1, 1], [], []>} : vector<64x32xbf16>, vector<32x32xbf16>, vector<64x32xf32> -> vector<64x32xf32>
    %89 = arith.addf %81, %88 : vector<64x32xf32>
    %c7 = arith.constant 7 : index
    %c0_65 = arith.constant 0 : index
    %c0_66 = arith.constant 0 : index
    %90 = vector.load %arg5[%c7, %c0_65, %c0_66] : memref<16x128x32xbf16, #tpu.memory_space<vmem>>, vector<1x128x32xbf16>
    %91 = vector.shape_cast %90 : vector<1x128x32xbf16> to vector<128x32xbf16>
    %cst_67 = arith.constant dense<0.000000e+00> : vector<32x32xf32>
    %92 = tpu.matmul %32, %91, %cst_67 {dimension_numbers = #tpu.dot_dimension_numbers<[1], [0], [0], [1], [0, 0, 1, 1], [], []>} : vector<32x128xbf16>, vector<128x32xbf16>, vector<32x32xf32> -> vector<32x32xf32>
    %c7_68 = arith.constant 7 : index
    %c0_69 = arith.constant 0 : index
    %c0_70 = arith.constant 0 : index
    %93 = vector.load %arg6[%c7_68, %c0_69, %c0_70] : memref<16x64x32xbf16, #tpu.memory_space<vmem>>, vector<1x64x32xbf16>
    %94 = vector.shape_cast %93 : vector<1x64x32xbf16> to vector<64x32xbf16>
    %95 = arith.truncf %92 : vector<32x32xf32> to vector<32x32xbf16>
    %cst_71 = arith.constant dense<0.000000e+00> : vector<64x32xf32>
    %96 = tpu.matmul %94, %95, %cst_71 {dimension_numbers = #tpu.dot_dimension_numbers<[1], [0], [0], [1], [0, 0, 1, 1], [], []>} : vector<64x32xbf16>, vector<32x32xbf16>, vector<64x32xf32> -> vector<64x32xf32>
    %97 = arith.addf %89, %96 : vector<64x32xf32>
    %c8 = arith.constant 8 : index
    %c0_72 = arith.constant 0 : index
    %c0_73 = arith.constant 0 : index
    %98 = vector.load %arg5[%c8, %c0_72, %c0_73] : memref<16x128x32xbf16, #tpu.memory_space<vmem>>, vector<1x128x32xbf16>
    %99 = vector.shape_cast %98 : vector<1x128x32xbf16> to vector<128x32xbf16>
    %cst_74 = arith.constant dense<0.000000e+00> : vector<32x32xf32>
    %100 = tpu.matmul %32, %99, %cst_74 {dimension_numbers = #tpu.dot_dimension_numbers<[1], [0], [0], [1], [0, 0, 1, 1], [], []>} : vector<32x128xbf16>, vector<128x32xbf16>, vector<32x32xf32> -> vector<32x32xf32>
    %c8_75 = arith.constant 8 : index
    %c0_76 = arith.constant 0 : index
    %c0_77 = arith.constant 0 : index
    %101 = vector.load %arg6[%c8_75, %c0_76, %c0_77] : memref<16x64x32xbf16, #tpu.memory_space<vmem>>, vector<1x64x32xbf16>
    %102 = vector.shape_cast %101 : vector<1x64x32xbf16> to vector<64x32xbf16>
    %103 = arith.truncf %100 : vector<32x32xf32> to vector<32x32xbf16>
    %cst_78 = arith.constant dense<0.000000e+00> : vector<64x32xf32>
    %104 = tpu.matmul %102, %103, %cst_78 {dimension_numbers = #tpu.dot_dimension_numbers<[1], [0], [0], [1], [0, 0, 1, 1], [], []>} : vector<64x32xbf16>, vector<32x32xbf16>, vector<64x32xf32> -> vector<64x32xf32>
    %105 = arith.addf %97, %104 : vector<64x32xf32>
    %c9 = arith.constant 9 : index
    %c0_79 = arith.constant 0 : index
    %c0_80 = arith.constant 0 : index
    %106 = vector.load %arg5[%c9, %c0_79, %c0_80] : memref<16x128x32xbf16, #tpu.memory_space<vmem>>, vector<1x128x32xbf16>
    %107 = vector.shape_cast %106 : vector<1x128x32xbf16> to vector<128x32xbf16>
    %cst_81 = arith.constant dense<0.000000e+00> : vector<32x32xf32>
    %108 = tpu.matmul %32, %107, %cst_81 {dimension_numbers = #tpu.dot_dimension_numbers<[1], [0], [0], [1], [0, 0, 1, 1], [], []>} : vector<32x128xbf16>, vector<128x32xbf16>, vector<32x32xf32> -> vector<32x32xf32>
    %c9_82 = arith.constant 9 : index
    %c0_83 = arith.constant 0 : index
    %c0_84 = arith.constant 0 : index
    %109 = vector.load %arg6[%c9_82, %c0_83, %c0_84] : memref<16x64x32xbf16, #tpu.memory_space<vmem>>, vector<1x64x32xbf16>
    %110 = vector.shape_cast %109 : vector<1x64x32xbf16> to vector<64x32xbf16>
    %111 = arith.truncf %108 : vector<32x32xf32> to vector<32x32xbf16>
    %cst_85 = arith.constant dense<0.000000e+00> : vector<64x32xf32>
    %112 = tpu.matmul %110, %111, %cst_85 {dimension_numbers = #tpu.dot_dimension_numbers<[1], [0], [0], [1], [0, 0, 1, 1], [], []>} : vector<64x32xbf16>, vector<32x32xbf16>, vector<64x32xf32> -> vector<64x32xf32>
    %113 = arith.addf %105, %112 : vector<64x32xf32>
    %c10 = arith.constant 10 : index
    %c0_86 = arith.constant 0 : index
    %c0_87 = arith.constant 0 : index
    %114 = vector.load %arg5[%c10, %c0_86, %c0_87] : memref<16x128x32xbf16, #tpu.memory_space<vmem>>, vector<1x128x32xbf16>
    %115 = vector.shape_cast %114 : vector<1x128x32xbf16> to vector<128x32xbf16>
    %cst_88 = arith.constant dense<0.000000e+00> : vector<32x32xf32>
    %116 = tpu.matmul %32, %115, %cst_88 {dimension_numbers = #tpu.dot_dimension_numbers<[1], [0], [0], [1], [0, 0, 1, 1], [], []>} : vector<32x128xbf16>, vector<128x32xbf16>, vector<32x32xf32> -> vector<32x32xf32>
    %c10_89 = arith.constant 10 : index
    %c0_90 = arith.constant 0 : index
    %c0_91 = arith.constant 0 : index
    %117 = vector.load %arg6[%c10_89, %c0_90, %c0_91] : memref<16x64x32xbf16, #tpu.memory_space<vmem>>, vector<1x64x32xbf16>
    %118 = vector.shape_cast %117 : vector<1x64x32xbf16> to vector<64x32xbf16>
    %119 = arith.truncf %116 : vector<32x32xf32> to vector<32x32xbf16>
    %cst_92 = arith.constant dense<0.000000e+00> : vector<64x32xf32>
    %120 = tpu.matmul %118, %119, %cst_92 {dimension_numbers = #tpu.dot_dimension_numbers<[1], [0], [0], [1], [0, 0, 1, 1], [], []>} : vector<64x32xbf16>, vector<32x32xbf16>, vector<64x32xf32> -> vector<64x32xf32>
    %121 = arith.addf %113, %120 : vector<64x32xf32>
    %c11 = arith.constant 11 : index
    %c0_93 = arith.constant 0 : index
    %c0_94 = arith.constant 0 : index
    %122 = vector.load %arg5[%c11, %c0_93, %c0_94] : memref<16x128x32xbf16, #tpu.memory_space<vmem>>, vector<1x128x32xbf16>
    %123 = vector.shape_cast %122 : vector<1x128x32xbf16> to vector<128x32xbf16>
    %cst_95 = arith.constant dense<0.000000e+00> : vector<32x32xf32>
    %124 = tpu.matmul %32, %123, %cst_95 {dimension_numbers = #tpu.dot_dimension_numbers<[1], [0], [0], [1], [0, 0, 1, 1], [], []>} : vector<32x128xbf16>, vector<128x32xbf16>, vector<32x32xf32> -> vector<32x32xf32>
    %c11_96 = arith.constant 11 : index
    %c0_97 = arith.constant 0 : index
    %c0_98 = arith.constant 0 : index
    %125 = vector.load %arg6[%c11_96, %c0_97, %c0_98] : memref<16x64x32xbf16, #tpu.memory_space<vmem>>, vector<1x64x32xbf16>
    %126 = vector.shape_cast %125 : vector<1x64x32xbf16> to vector<64x32xbf16>
    %127 = arith.truncf %124 : vector<32x32xf32> to vector<32x32xbf16>
    %cst_99 = arith.constant dense<0.000000e+00> : vector<64x32xf32>
    %128 = tpu.matmul %126, %127, %cst_99 {dimension_numbers = #tpu.dot_dimension_numbers<[1], [0], [0], [1], [0, 0, 1, 1], [], []>} : vector<64x32xbf16>, vector<32x32xbf16>, vector<64x32xf32> -> vector<64x32xf32>
    %129 = arith.addf %121, %128 : vector<64x32xf32>
    %c12 = arith.constant 12 : index
    %c0_100 = arith.constant 0 : index
    %c0_101 = arith.constant 0 : index
    %130 = vector.load %arg5[%c12, %c0_100, %c0_101] : memref<16x128x32xbf16, #tpu.memory_space<vmem>>, vector<1x128x32xbf16>
    %131 = vector.shape_cast %130 : vector<1x128x32xbf16> to vector<128x32xbf16>
    %cst_102 = arith.constant dense<0.000000e+00> : vector<32x32xf32>
    %132 = tpu.matmul %32, %131, %cst_102 {dimension_numbers = #tpu.dot_dimension_numbers<[1], [0], [0], [1], [0, 0, 1, 1], [], []>} : vector<32x128xbf16>, vector<128x32xbf16>, vector<32x32xf32> -> vector<32x32xf32>
    %c12_103 = arith.constant 12 : index
    %c0_104 = arith.constant 0 : index
    %c0_105 = arith.constant 0 : index
    %133 = vector.load %arg6[%c12_103, %c0_104, %c0_105] : memref<16x64x32xbf16, #tpu.memory_space<vmem>>, vector<1x64x32xbf16>
    %134 = vector.shape_cast %133 : vector<1x64x32xbf16> to vector<64x32xbf16>
    %135 = arith.truncf %132 : vector<32x32xf32> to vector<32x32xbf16>
    %cst_106 = arith.constant dense<0.000000e+00> : vector<64x32xf32>
    %136 = tpu.matmul %134, %135, %cst_106 {dimension_numbers = #tpu.dot_dimension_numbers<[1], [0], [0], [1], [0, 0, 1, 1], [], []>} : vector<64x32xbf16>, vector<32x32xbf16>, vector<64x32xf32> -> vector<64x32xf32>
    %137 = arith.addf %129, %136 : vector<64x32xf32>
    %c13 = arith.constant 13 : index
    %c0_107 = arith.constant 0 : index
    %c0_108 = arith.constant 0 : index
    %138 = vector.load %arg5[%c13, %c0_107, %c0_108] : memref<16x128x32xbf16, #tpu.memory_space<vmem>>, vector<1x128x32xbf16>
    %139 = vector.shape_cast %138 : vector<1x128x32xbf16> to vector<128x32xbf16>
    %cst_109 = arith.constant dense<0.000000e+00> : vector<32x32xf32>
    %140 = tpu.matmul %32, %139, %cst_109 {dimension_numbers = #tpu.dot_dimension_numbers<[1], [0], [0], [1], [0, 0, 1, 1], [], []>} : vector<32x128xbf16>, vector<128x32xbf16>, vector<32x32xf32> -> vector<32x32xf32>
    %c13_110 = arith.constant 13 : index
    %c0_111 = arith.constant 0 : index
    %c0_112 = arith.constant 0 : index
    %141 = vector.load %arg6[%c13_110, %c0_111, %c0_112] : memref<16x64x32xbf16, #tpu.memory_space<vmem>>, vector<1x64x32xbf16>
    %142 = vector.shape_cast %141 : vector<1x64x32xbf16> to vector<64x32xbf16>
    %143 = arith.truncf %140 : vector<32x32xf32> to vector<32x32xbf16>
    %cst_113 = arith.constant dense<0.000000e+00> : vector<64x32xf32>
    %144 = tpu.matmul %142, %143, %cst_113 {dimension_numbers = #tpu.dot_dimension_numbers<[1], [0], [0], [1], [0, 0, 1, 1], [], []>} : vector<64x32xbf16>, vector<32x32xbf16>, vector<64x32xf32> -> vector<64x32xf32>
    %145 = arith.addf %137, %144 : vector<64x32xf32>
    %c14 = arith.constant 14 : index
    %c0_114 = arith.constant 0 : index
    %c0_115 = arith.constant 0 : index
    %146 = vector.load %arg5[%c14, %c0_114, %c0_115] : memref<16x128x32xbf16, #tpu.memory_space<vmem>>, vector<1x128x32xbf16>
    %147 = vector.shape_cast %146 : vector<1x128x32xbf16> to vector<128x32xbf16>
    %cst_116 = arith.constant dense<0.000000e+00> : vector<32x32xf32>
    %148 = tpu.matmul %32, %147, %cst_116 {dimension_numbers = #tpu.dot_dimension_numbers<[1], [0], [0], [1], [0, 0, 1, 1], [], []>} : vector<32x128xbf16>, vector<128x32xbf16>, vector<32x32xf32> -> vector<32x32xf32>
    %c14_117 = arith.constant 14 : index
    %c0_118 = arith.constant 0 : index
    %c0_119 = arith.constant 0 : index
    %149 = vector.load %arg6[%c14_117, %c0_118, %c0_119] : memref<16x64x32xbf16, #tpu.memory_space<vmem>>, vector<1x64x32xbf16>
    %150 = vector.shape_cast %149 : vector<1x64x32xbf16> to vector<64x32xbf16>
    %151 = arith.truncf %148 : vector<32x32xf32> to vector<32x32xbf16>
    %cst_120 = arith.constant dense<0.000000e+00> : vector<64x32xf32>
    %152 = tpu.matmul %150, %151, %cst_120 {dimension_numbers = #tpu.dot_dimension_numbers<[1], [0], [0], [1], [0, 0, 1, 1], [], []>} : vector<64x32xbf16>, vector<32x32xbf16>, vector<64x32xf32> -> vector<64x32xf32>
    %153 = arith.addf %145, %152 : vector<64x32xf32>
    %c15 = arith.constant 15 : index
    %c0_121 = arith.constant 0 : index
    %c0_122 = arith.constant 0 : index
    %154 = vector.load %arg5[%c15, %c0_121, %c0_122] : memref<16x128x32xbf16, #tpu.memory_space<vmem>>, vector<1x128x32xbf16>
    %155 = vector.shape_cast %154 : vector<1x128x32xbf16> to vector<128x32xbf16>
    %cst_123 = arith.constant dense<0.000000e+00> : vector<32x32xf32>
    %156 = tpu.matmul %32, %155, %cst_123 {dimension_numbers = #tpu.dot_dimension_numbers<[1], [0], [0], [1], [0, 0, 1, 1], [], []>} : vector<32x128xbf16>, vector<128x32xbf16>, vector<32x32xf32> -> vector<32x32xf32>
    %c15_124 = arith.constant 15 : index
    %c0_125 = arith.constant 0 : index
    %c0_126 = arith.constant 0 : index
    %157 = vector.load %arg6[%c15_124, %c0_125, %c0_126] : memref<16x64x32xbf16, #tpu.memory_space<vmem>>, vector<1x64x32xbf16>
    %158 = vector.shape_cast %157 : vector<1x64x32xbf16> to vector<64x32xbf16>
    %159 = arith.truncf %156 : vector<32x32xf32> to vector<32x32xbf16>
    %cst_127 = arith.constant dense<0.000000e+00> : vector<64x32xf32>
    %160 = tpu.matmul %158, %159, %cst_127 {dimension_numbers = #tpu.dot_dimension_numbers<[1], [0], [0], [1], [0, 0, 1, 1], [], []>} : vector<64x32xbf16>, vector<32x32xbf16>, vector<64x32xf32> -> vector<64x32xf32>
    %161 = arith.addf %153, %160 : vector<64x32xf32>
    %cst_128 = arith.constant dense<0.000000e+00> : vector<64xf32>
    %162 = vector.multi_reduction <add>, %161, %cst_128 [1] : vector<64x32xf32> to vector<64xf32>
    %163 = vector.shape_cast %162 : vector<64xf32> to vector<64x1xf32>
    %cst_129 = arith.constant 3.200000e+01 : f32
    %164 = vector.broadcast %cst_129 : f32 to vector<64x1xf32>
    %165 = arith.divf %163, %164 : vector<64x1xf32>
    %166 = vector.broadcast %165 : vector<64x1xf32> to vector<64x32xf32>
    %167 = arith.subf %161, %166 : vector<64x32xf32>
    %168 = arith.mulf %167, %167 : vector<64x32xf32>
    %cst_130 = arith.constant dense<0.000000e+00> : vector<64xf32>
    %169 = vector.multi_reduction <add>, %168, %cst_130 [1] : vector<64x32xf32> to vector<64xf32>
    %170 = vector.shape_cast %169 : vector<64xf32> to vector<64x1xf32>
    %cst_131 = arith.constant 3.200000e+01 : f32
    %171 = vector.broadcast %cst_131 : f32 to vector<64x1xf32>
    %172 = arith.divf %170, %171 : vector<64x1xf32>
    %173 = vector.broadcast %165 : vector<64x1xf32> to vector<64x32xf32>
    %174 = arith.subf %161, %173 : vector<64x32xf32>
    %cst_132 = arith.constant 9.99999974E-6 : f32
    %175 = vector.broadcast %cst_132 : f32 to vector<64x1xf32>
    %176 = arith.addf %172, %175 : vector<64x1xf32>
    %177 = math.rsqrt %176 : vector<64x1xf32>
    %178 = vector.broadcast %177 : vector<64x1xf32> to vector<64x32xf32>
    %179 = arith.mulf %174, %178 : vector<64x32xf32>
    %c0_133 = arith.constant 0 : index
    %c0_134 = arith.constant 0 : index
    %180 = vector.load %arg7[%c0_133, %c0_134] : memref<64x1xf32, #tpu.memory_space<vmem>>, vector<64x1xf32>
    %181 = vector.broadcast %180 : vector<64x1xf32> to vector<64x32xf32>
    %182 = arith.mulf %179, %181 : vector<64x32xf32>
    %c0_135 = arith.constant 0 : index
    %c0_136 = arith.constant 0 : index
    %183 = vector.load %arg8[%c0_135, %c0_136] : memref<64x1xf32, #tpu.memory_space<vmem>>, vector<64x1xf32>
    %184 = vector.broadcast %183 : vector<64x1xf32> to vector<64x32xf32>
    %185 = arith.addf %182, %184 : vector<64x32xf32>
    %cst_137 = arith.constant 0.000000e+00 : f32
    %186 = vector.broadcast %cst_137 : f32 to vector<64x32xf32>
    %187 = arith.cmpf ogt, %185, %186 : vector<64x32xf32>
    %cst_138 = arith.constant 2.000000e-01 : f32
    %188 = vector.broadcast %cst_138 : f32 to vector<64x32xf32>
    %189 = arith.mulf %188, %185 : vector<64x32xf32>
    %190 = arith.select %187, %185, %189 : vector<64x32xi1>, vector<64x32xf32>
    %c0_139 = arith.constant 0 : index
    %c0_140 = arith.constant 0 : index
    %191 = vector.load %arg9[%c0_139, %c0_140] : memref<64x16xf32, #tpu.memory_space<vmem>>, vector<64x16xf32>
    %c0_141 = arith.constant 0 : index
    %c0_142 = arith.constant 0 : index
    %192 = vector.load %arg10[%c0_141, %c0_142] : memref<1x16xf32, #tpu.memory_space<vmem>>, vector<1x16xf32>
    %c0_143 = arith.constant 0 : index
    %c0_144 = arith.constant 0 : index
    %193 = vector.load %arg11[%c0_143, %c0_144] : memref<16x2xf32, #tpu.memory_space<vmem>>, vector<16x2xf32>
    %cst_145 = arith.constant dense<0.000000e+00> : vector<1x2xf32>
    %194 = tpu.matmul %192, %193, %cst_145 {dimension_numbers = #tpu.dot_dimension_numbers<[1], [0], [0], [1], [0, 0, 1, 1], [], []>} : vector<1x16xf32>, vector<16x2xf32>, vector<1x2xf32> -> vector<1x2xf32>
    %195 = tpu.iota {dimensions = array<i32: 1>} : vector<1x2xi32>
    %cst_146 = arith.constant 0.000000e+00 : f32
    %196 = vector.broadcast %cst_146 : f32 to vector<1x2xf32>
    %197 = vector.extract_strided_slice %190 {offsets = [0, 0], sizes = [64, 16], strides = [1, 1]} : vector<64x32xf32> to vector<64x16xf32>
    %198 = arith.mulf %197, %191 : vector<64x16xf32>
    %cst_147 = arith.constant dense<0.000000e+00> : vector<64xf32>
    %199 = vector.multi_reduction <add>, %198, %cst_147 [1] : vector<64x16xf32> to vector<64xf32>
    %200 = vector.shape_cast %199 : vector<64xf32> to vector<64x1xf32>
    %cst_148 = arith.constant dense<0.000000e+00> : vector<1xf32>
    %201 = vector.multi_reduction <add>, %200, %cst_148 [0] : vector<64x1xf32> to vector<1xf32>
    %202 = vector.shape_cast %201 : vector<1xf32> to vector<1x1xf32>
    %c0_i32 = arith.constant 0 : i32
    %203 = vector.broadcast %c0_i32 : i32 to vector<1x2xi32>
    %204 = arith.cmpi eq, %195, %203 : vector<1x2xi32>
    %205 = vector.shape_cast %202 : vector<1x1xf32> to vector<1x1xf32>
    %206 = vector.broadcast %205 : vector<1x1xf32> to vector<1x2xf32>
    %207 = arith.select %204, %206, %196 : vector<1x2xi1>, vector<1x2xf32>
    %208 = vector.extract_strided_slice %190 {offsets = [0, 16], sizes = [64, 16], strides = [1, 1]} : vector<64x32xf32> to vector<64x16xf32>
    %209 = arith.mulf %208, %191 : vector<64x16xf32>
    %cst_149 = arith.constant dense<0.000000e+00> : vector<64xf32>
    %210 = vector.multi_reduction <add>, %209, %cst_149 [1] : vector<64x16xf32> to vector<64xf32>
    %211 = vector.shape_cast %210 : vector<64xf32> to vector<64x1xf32>
    %cst_150 = arith.constant dense<0.000000e+00> : vector<1xf32>
    %212 = vector.multi_reduction <add>, %211, %cst_150 [0] : vector<64x1xf32> to vector<1xf32>
    %213 = vector.shape_cast %212 : vector<1xf32> to vector<1x1xf32>
    %c1_i32 = arith.constant 1 : i32
    %214 = vector.broadcast %c1_i32 : i32 to vector<1x2xi32>
    %215 = arith.cmpi eq, %195, %214 : vector<1x2xi32>
    %216 = vector.shape_cast %213 : vector<1x1xf32> to vector<1x1xf32>
    %217 = vector.broadcast %216 : vector<1x1xf32> to vector<1x2xf32>
    %218 = arith.select %215, %217, %207 : vector<1x2xi1>, vector<1x2xf32>
    %219 = arith.addf %218, %194 : vector<1x2xf32>
    %220 = arith.negf %219 : vector<1x2xf32>
    %221 = math.exp %220 : vector<1x2xf32>
    %cst_151 = arith.constant 1.000000e+00 : f32
    %222 = vector.broadcast %cst_151 : f32 to vector<1x2xf32>
    %223 = arith.addf %222, %221 : vector<1x2xf32>
    %224 = arith.divf %222, %223 : vector<1x2xf32>
    %c0_152 = arith.constant 0 : index
    %c0_153 = arith.constant 0 : index
    %225 = vector.load %arg12[%c0_152, %c0_153] : memref<1x2xf32, #tpu.memory_space<vmem>>, vector<1x2xf32>
    tpu.vector_store %arg12[%c0_152, %c0_153], %224 {strides = array<i32>} : memref<1x2xf32, #tpu.memory_space<vmem>>, vector<1x2xf32>,
    return
  }
  func.func @transform_0(%arg0: i32) -> (i32, i32) {
    %c0_i32 = arith.constant 0 : i32
    %c0_i32_0 = arith.constant 0 : i32
    %c0_i32_1 = arith.constant 0 : i32
    return %c0_i32, %c0_i32_0 : i32, i32
  }
  func.func @transform_1(%arg0: i32) -> (i32, i32) {
    %c0_i32 = arith.constant 0 : i32
    %c0_i32_0 = arith.constant 0 : i32
    %c0_i32_1 = arith.constant 0 : i32
    return %c0_i32, %c0_i32_0 : i32, i32
  }
  func.func @transform_2(%arg0: i32) -> (i32, i32) {
    %c0_i32 = arith.constant 0 : i32
    %c0_i32_0 = arith.constant 0 : i32
    %c0_i32_1 = arith.constant 0 : i32
    return %c0_i32, %c0_i32_0 : i32, i32
  }
  func.func @transform_3(%arg0: i32) -> (i32, i32) {
    %c0_i32 = arith.constant 0 : i32
    %c0_i32_0 = arith.constant 0 : i32
    %c0_i32_1 = arith.constant 0 : i32
    return %c0_i32, %c0_i32_0 : i32, i32
  }
  func.func @transform_4(%arg0: i32) -> (i32, i32, i32) {
    %c0_i32 = arith.constant 0 : i32
    %c0_i32_0 = arith.constant 0 : i32
    %c0_i32_1 = arith.constant 0 : i32
    %c0_i32_2 = arith.constant 0 : i32
    return %c0_i32, %c0_i32_0, %c0_i32_1 : i32, i32, i32
  }
  func.func @transform_5(%arg0: i32) -> (i32, i32, i32) {
    %c0_i32 = arith.constant 0 : i32
    %c0_i32_0 = arith.constant 0 : i32
    %c0_i32_1 = arith.constant 0 : i32
    %c0_i32_2 = arith.constant 0 : i32
    return %c0_i32, %c0_i32_0, %c0_i32_1 : i32, i32, i32
  }
  func.func @transform_6(%arg0: i32) -> (i32, i32) {
    %c0_i32 = arith.constant 0 : i32
    %c0_i32_0 = arith.constant 0 : i32
    %c0_i32_1 = arith.constant 0 : i32
    return %c0_i32, %c0_i32_0 : i32, i32
  }
  func.func @transform_7(%arg0: i32) -> (i32, i32) {
    %c0_i32 = arith.constant 0 : i32
    %c0_i32_0 = arith.constant 0 : i32
    %c0_i32_1 = arith.constant 0 : i32
    return %c0_i32, %c0_i32_0 : i32, i32
  }
  func.func @transform_8(%arg0: i32) -> (i32, i32) {
    %c0_i32 = arith.constant 0 : i32
    %c0_i32_0 = arith.constant 0 : i32
    %c0_i32_1 = arith.constant 0 : i32
    return %c0_i32, %c0_i32_0 : i32, i32
  }
  func.func @transform_9(%arg0: i32) -> (i32, i32) {
    %c0_i32 = arith.constant 0 : i32
    %c0_i32_0 = arith.constant 0 : i32
    %c0_i32_1 = arith.constant 0 : i32
    return %c0_i32, %c0_i32_0 : i32, i32
  }
  func.func @transform_10(%arg0: i32) -> (i32, i32) {
    %c0_i32 = arith.constant 0 : i32
    %c0_i32_0 = arith.constant 0 : i32
    %c0_i32_1 = arith.constant 0 : i32
    return %c0_i32, %c0_i32_0 : i32, i32
  }
  func.func @transform_11(%arg0: i32) -> (i32, i32) {
    %c0_i32 = arith.constant 0 : i32
    %c0_i32_0 = arith.constant 0 : i32
    %c0_i32_1 = arith.constant 0 : i32
    return %c0_i32, %c0_i32_0 : i32, i32
  }
}

</mosaic_0001>

<llo_original>
// kernel: discriminator_forward.3
$region0: #{discriminator_forward.3}
  #allocation0 [shape = 'u32[]', space=smem, size = 0x4, offset = 0x4, fixed_abs, tag = 'smem constant byte address 0x4 - core index']
  #allocation1 [shape = 'u32[144,128]{1,0:T(1,128)}', space=vmem, size = 0x12000, scoped, tag = 'internal scratch']
  %s0 = inlined_call_operand.vmem [shape: bf16[48,2048], index: 0, kind: input, shape index: {}]
  %s1 = inlined_call_operand.vmem [shape: bf16[8,48], index: 1, kind: input, shape index: {}]
  %s2 = inlined_call_operand.vmem [shape: bf16[8,2048], index: 2, kind: output, shape index: {}]
  %s3 = sld [smem:[#allocation0]]
  $region18: #{discriminator_forward.3} parent=0
    _
  %s5 = ssub.s32 1, %s3
  %s6 = scalar_select 0, %s5, %s3
  // Predicated region
  $region2: #{discriminator_forward.3} parent=0 // pred_check
    _
  $region3: #{discriminator_forward.3} parent=0 // pred_check_branch
    %8 = sbr.rel (0) target = $region5
  $region4: #{discriminator_forward.3} parent=0 // pred_region
    _
  $region5: #{discriminator_forward.3} parent=0 // pred_fallthru
    _
  // Predicated region
  $region6: #{discriminator_forward.3} parent=0 // pred_check
    _
  $region7: #{discriminator_forward.3} parent=0 // pred_check_branch
    %10 = sbr.rel (0) target = $region9
  $region8: #{discriminator_forward.3} parent=0 // pred_region
    _
  $region9: #{discriminator_forward.3} parent=0 // pred_fallthru
    _
  %v12 = vld [vmem:[%s1] sm:$0xf]
  %v13 = vld [vmem:[%s0] sm:$0xff]
  %v14 = vld [vmem:[%s0 + $0x8] sm:$0xff]
  %v15 = vld [vmem:[%s0 + $0x10] sm:$0xff]
  %v16 = vld [vmem:[%s0 + $0x18] sm:$0xff]
  %v17 = vld [vmem:[%s0 + $0x20] sm:$0xff]
  %v18 = vld [vmem:[%s0 + $0x28] sm:$0xff]
  %v19 = vld [vmem:[%s0 + $0x30] sm:$0xff]
  %v20 = vld [vmem:[%s0 + $0x38] sm:$0xff]
  %v21 = vld [vmem:[%s0 + $0x40] sm:$0xff]
  %v22 = vld [vmem:[%s0 + $0x48] sm:$0xff]
  %v23 = vld [vmem:[%s0 + $0x50] sm:$0xff]
  %v24 = vld [vmem:[%s0 + $0x58] sm:$0xff]
  %v25 = vld [vmem:[%s0 + $0x60] sm:$0xff]
  %v26 = vld [vmem:[%s0 + $0x68] sm:$0xff]
  %v27 = vld [vmem:[%s0 + $0x70] sm:$0xff]
  %v28 = vld [vmem:[%s0 + $0x78] sm:$0xff]
  %v29 = vld [vmem:[%s0 + $0x80] sm:$0xff]
  %v30 = vld [vmem:[%s0 + $0x88] sm:$0xff]
  %v31 = vld [vmem:[%s0 + $0x90] sm:$0xff]
  %v32 = vld [vmem:[%s0 + $0x98] sm:$0xff]
  %v33 = vld [vmem:[%s0 + $0xa0] sm:$0xff]
  %v34 = vld [vmem:[%s0 + $0xa8] sm:$0xff]
  %v35 = vld [vmem:[%s0 + $0xb0] sm:$0xff]
  %v36 = vld [vmem:[%s0 + $0xb8] sm:$0xff]
  %v37 = vld [vmem:[%s0 + $0xc0] sm:$0xff]
  %v38 = vld [vmem:[%s0 + $0xc8] sm:$0xff]
  %v39 = vld [vmem:[%s0 + $0xd0] sm:$0xff]
  %v40 = vld [vmem:[%s0 + $0xd8] sm:$0xff]
  %v41 = vld [vmem:[%s0 + $0xe0] sm:$0xff]
  %v42 = vld [vmem:[%s0 + $0xe8] sm:$0xff]
  %v43 = vld [vmem:[%s0 + $0xf0] sm:$0xff]
  %v44 = vld [vmem:[%s0 + $0xf8] sm:$0xff]
  %v45 = vld [vmem:[%s0 + $0x100] sm:$0xff]
  %v46 = vld [vmem:[%s0 + $0x108] sm:$0xff]
  %v47 = vld [vmem:[%s0 + $0x110] sm:$0xff]
  %v48 = vld [vmem:[%s0 + $0x118] sm:$0xff]
  %v49 = vld [vmem:[%s0 + $0x120] sm:$0xff]
  %v50 = vld [vmem:[%s0 + $0x128] sm:$0xff]
  %v51 = vld [vmem:[%s0 + $0x130] sm:$0xff]
  %v52 = vld [vmem:[%s0 + $0x138] sm:$0xff]
  %v53 = vld [vmem:[%s0 + $0x140] sm:$0xff]
  %v54 = vld [vmem:[%s0 + $0x148] sm:$0xff]
  %v55 = vld [vmem:[%s0 + $0x150] sm:$0xff]
  %v56 = vld [vmem:[%s0 + $0x158] sm:$0xff]
  %v57 = vld [vmem:[%s0 + $0x160] sm:$0xff]
  %v58 = vld [vmem:[%s0 + $0x168] sm:$0xff]
  %v59 = vld [vmem:[%s0 + $0x170] sm:$0xff]
  %v60 = vld [vmem:[%s0 + $0x178] sm:$0xff]
  %v109 = vunpack.c.l.b16 %v13
  %v110 = vunpack.c.h.b16 %v13
  %v111 = vunpack.c.l.b16 %v14
  %v112 = vunpack.c.h.b16 %v14
  %v113 = vunpack.c.l.b16 %v15
  %v114 = vunpack.c.h.b16 %v15
  %v115 = vunpack.c.l.b16 %v16
  %v116 = vunpack.c.h.b16 %v16
  %v117 = vunpack.c.l.b16 %v17
  %v118 = vunpack.c.h.b16 %v17
  %v119 = vunpack.c.l.b16 %v18
  %v120 = vunpack.c.h.b16 %v18
  %v121 = vunpack.c.l.b16 %v19
  %v122 = vunpack.c.h.b16 %v19
  %v123 = vunpack.c.l.b16 %v20
  %v124 = vunpack.c.h.b16 %v20
  %v125 = vunpack.c.l.b16 %v21
  %v126 = vunpack.c.h.b16 %v21
  %v127 = vunpack.c.l.b16 %v22
  %v128 = vunpack.c.h.b16 %v22
  %v129 = vunpack.c.l.b16 %v23
  %v130 = vunpack.c.h.b16 %v23
  %v131 = vunpack.c.l.b16 %v24
  %v132 = vunpack.c.h.b16 %v24
  %v133 = vunpack.c.l.b16 %v25
  %v134 = vunpack.c.h.b16 %v25
  %v135 = vunpack.c.l.b16 %v26
  %v136 = vunpack.c.h.b16 %v26
  %v137 = vunpack.c.l.b16 %v27
  %v138 = vunpack.c.h.b16 %v27
  %v139 = vunpack.c.l.b16 %v28
  %v140 = vunpack.c.h.b16 %v28
  %v141 = vunpack.c.l.b16 %v29
  %v142 = vunpack.c.h.b16 %v29
  %v143 = vunpack.c.l.b16 %v30
  %v144 = vunpack.c.h.b16 %v30
  %v145 = vunpack.c.l.b16 %v31
  %v146 = vunpack.c.h.b16 %v31
  %v147 = vunpack.c.l.b16 %v32
  %v148 = vunpack.c.h.b16 %v32
  %v149 = vunpack.c.l.b16 %v33
  %v150 = vunpack.c.h.b16 %v33
  %v151 = vunpack.c.l.b16 %v34
  %v152 = vunpack.c.h.b16 %v34
  %v153 = vunpack.c.l.b16 %v35
  %v154 = vunpack.c.h.b16 %v35
  %v155 = vunpack.c.l.b16 %v36
  %v156 = vunpack.c.h.b16 %v36
  %v157 = vunpack.c.l.b16 %v37
  %v158 = vunpack.c.h.b16 %v37
  %v159 = vunpack.c.l.b16 %v38
  %v160 = vunpack.c.h.b16 %v38
  %v161 = vunpack.c.l.b16 %v39
  %v162 = vunpack.c.h.b16 %v39
  %v163 = vunpack.c.l.b16 %v40
  %v164 = vunpack.c.h.b16 %v40
  %v165 = vunpack.c.l.b16 %v41
  %v166 = vunpack.c.h.b16 %v41
  %v167 = vunpack.c.l.b16 %v42
  %v168 = vunpack.c.h.b16 %v42
  %v169 = vunpack.c.l.b16 %v43
  %v170 = vunpack.c.h.b16 %v43
  %v171 = vunpack.c.l.b16 %v44
  %v172 = vunpack.c.h.b16 %v44
  %v173 = vunpack.c.l.b16 %v45
  %v174 = vunpack.c.h.b16 %v45
  %v175 = vunpack.c.l.b16 %v46
  %v176 = vunpack.c.h.b16 %v46
  %v177 = vunpack.c.l.b16 %v47
  %v178 = vunpack.c.h.b16 %v47
  %v179 = vunpack.c.l.b16 %v48
  %v180 = vunpack.c.h.b16 %v48
  %v181 = vunpack.c.l.b16 %v49
  %v182 = vunpack.c.h.b16 %v49
  %v183 = vunpack.c.l.b16 %v50
  %v184 = vunpack.c.h.b16 %v50
  %v185 = vunpack.c.l.b16 %v51
  %v186 = vunpack.c.h.b16 %v51
  %v187 = vunpack.c.l.b16 %v52
  %v188 = vunpack.c.h.b16 %v52
  %v189 = vunpack.c.l.b16 %v53
  %v190 = vunpack.c.h.b16 %v53
  %v191 = vunpack.c.l.b16 %v54
  %v192 = vunpack.c.h.b16 %v54
  %v193 = vunpack.c.l.b16 %v55
  %v194 = vunpack.c.h.b16 %v55
  %v195 = vunpack.c.l.b16 %v56
  %v196 = vunpack.c.h.b16 %v56
  %v197 = vunpack.c.l.b16 %v57
  %v198 = vunpack.c.h.b16 %v57
  %v199 = vunpack.c.l.b16 %v58
  %v200 = vunpack.c.h.b16 %v58
  %v201 = vunpack.c.l.b16 %v59
  %v202 = vunpack.c.h.b16 %v59
  %v203 = vunpack.c.l.b16 %v60
  %v204 = vunpack.c.h.b16 %v60
  %v205 = vpack.c.b16 %v125, %v109
  %v206 = vpack.c.b16 %v126, %v110
  %v207 = vpack.c.b16 %v127, %v111
  %v208 = vpack.c.b16 %v128, %v112
  %v209 = vpack.c.b16 %v129, %v113
  %v210 = vpack.c.b16 %v130, %v114
  %v211 = vpack.c.b16 %v131, %v115
  %v212 = vpack.c.b16 %v132, %v116
  %v213 = vpack.c.b16 %v133, %v117
  %v214 = vpack.c.b16 %v134, %v118
  %v215 = vpack.c.b16 %v135, %v119
  %v216 = vpack.c.b16 %v136, %v120
  %v217 = vpack.c.b16 %v137, %v121
  %v218 = vpack.c.b16 %v138, %v122
  %v219 = vpack.c.b16 %v139, %v123
  %v220 = vpack.c.b16 %v140, %v124
  %v221 = vpack.c.b16 %v157, %v141
  %v222 = vpack.c.b16 %v158, %v142
  %v223 = vpack.c.b16 %v159, %v143
  %v224 = vpack.c.b16 %v160, %v144
  %v225 = vpack.c.b16 %v161, %v145
  %v226 = vpack.c.b16 %v162, %v146
  %v227 = vpack.c.b16 %v163, %v147
  %v228 = vpack.c.b16 %v164, %v148
  %v229 = vpack.c.b16 %v165, %v149
  %v230 = vpack.c.b16 %v166, %v150
  %v231 = vpack.c.b16 %v167, %v151
  %v232 = vpack.c.b16 %v168, %v152
  %v233 = vpack.c.b16 %v169, %v153
  %v234 = vpack.c.b16 %v170, %v154
  %v235 = vpack.c.b16 %v171, %v155
  %v236 = vpack.c.b16 %v172, %v156
  %v237 = vpack.c.b16 %v189, %v173
  %v238 = vpack.c.b16 %v190, %v174
  %v239 = vpack.c.b16 %v191, %v175
  %v240 = vpack.c.b16 %v192, %v176
  %v241 = vpack.c.b16 %v193, %v177
  %v242 = vpack.c.b16 %v194, %v178
  %v243 = vpack.c.b16 %v195, %v179
  %v244 = vpack.c.b16 %v196, %v180
  %v245 = vpack.c.b16 %v197, %v181
  %v246 = vpack.c.b16 %v198, %v182
  %v247 = vpack.c.b16 %v199, %v183
  %v248 = vpack.c.b16 %v200, %v184
  %v249 = vpack.c.b16 %v201, %v185
  %v250 = vpack.c.b16 %v202, %v186
  %v251 = vpack.c.b16 %v203, %v187
  %v252 = vpack.c.b16 %v204, %v188
  %vm301 = vcmask 392192
  %v303 = vsel %vm301, %v12, 0
  %305 = vmatprep.subr.bf16.mxu0 %v206
  %306 = vmatpush1.bf16.msra.mxu0 %v205
  %307 = vmatprep.subr.bf16.mxu0 %v222
  %308 = vmatpush1.bf16.msra.mxu0 %v221
  %309 = vmatprep.subr.bf16.mxu0 %v238
  %310 = vmatpush1.bf16.msra.mxu0 %v237
  %311 = vmatprep.subr.bf16.mxu0 0
  %312 = vmatpush1.bf16.msra.mxu0 0
  %313 = vmatprep.subr.bf16.mxu0 0
  %314 = vmatpush1.bf16.msra.mxu0 0
  %315 = vmatprep.subr.bf16.mxu0 0
  %316 = vmatpush1.bf16.msra.mxu0 0
  %317 = vmatprep.subr.bf16.mxu0 0
  %318 = vmatpush1.bf16.msra.mxu0 0
  %319 = vmatprep.subr.bf16.mxu0 0
  %320 = vmatpush1.bf16.msra.mxu0 0
  %321 = vmatprep.subr.bf16.mxu0 0
  %322 = vmatpush1.bf16.msra.mxu0 0
  %323 = vmatprep.subr.bf16.mxu0 0
  %324 = vmatpush1.bf16.msra.mxu0 0
  %325 = vmatprep.subr.bf16.mxu0 0
  %326 = vmatpush1.bf16.msra.mxu0 0
  %327 = vmatprep.subr.bf16.mxu0 0
  %328 = vmatpush1.bf16.msra.mxu0 0
  %329 = vmatprep.subr.bf16.mxu0 0
  %330 = vmatpush1.bf16.msra.mxu0 0
  %331 = vmatprep.subr.bf16.mxu0 0
  %332 = vmatpush1.bf16.msra.mxu0 0
  %333 = vmatprep.subr.bf16.mxu0 0
  %334 = vmatpush1.bf16.msra.mxu0 0
  %335 = vmatprep.subr.bf16.mxu0 0
  %336 = vmatpush1.bf16.msra.mxu0 0
  %337 = vmatprep.mubr.bf16.mxu0 0
  %338 = vmatmul.mubr.bf16.gmra.mrb[0].mxu0 %v303
  %v339 = vpop.f32.mrb[0].mxu0
  %v340 = vadd.f32 0.0, %v339
  %v341 = vpop.f32.mrb[0].mxu0
  %v342 = vadd.f32 0.0, %v341
  %v343 = vpop.f32.mrb[0].mxu0
  %v344 = vpop.f32.mrb[0].mxu0
  %345 = vdwg.mxu0
  %346 = vmatprep.subr.bf16.mxu0 %v208
  %347 = vmatpush1.bf16.msra.mxu0 %v207
  %348 = vmatprep.subr.bf16.mxu0 %v224
  %349 = vmatpush1.bf16.msra.mxu0 %v223
  %350 = vmatprep.subr.bf16.mxu0 %v240
  %351 = vmatpush1.bf16.msra.mxu0 %v239
  %352 = vmatprep.subr.bf16.mxu0 0
  %353 = vmatpush1.bf16.msra.mxu0 0
  %354 = vmatprep.subr.bf16.mxu0 0
  %355 = vmatpush1.bf16.msra.mxu0 0
  %356 = vmatprep.subr.bf16.mxu0 0
  %357 = vmatpush1.bf16.msra.mxu0 0
  %358 = vmatprep.subr.bf16.mxu0 0
  %359 = vmatpush1.bf16.msra.mxu0 0
  %360 = vmatprep.subr.bf16.mxu0 0
  %361 = vmatpush1.bf16.msra.mxu0 0
  %362 = vmatprep.subr.bf16.mxu0 0
  %363 = vmatpush1.bf16.msra.mxu0 0
  %364 = vmatprep.subr.bf16.mxu0 0
  %365 = vmatpush1.bf16.msra.mxu0 0
  %366 = vmatprep.subr.bf16.mxu0 0
  %367 = vmatpush1.bf16.msra.mxu0 0
  %368 = vmatprep.subr.bf16.mxu0 0
  %369 = vmatpush1.bf16.msra.mxu0 0
  %370 = vmatprep.subr.bf16.mxu0 0
  %371 = vmatpush1.bf16.msra.mxu0 0
  %372 = vmatprep.subr.bf16.mxu0 0
  %373 = vmatpush1.bf16.msra.mxu0 0
  %374 = vmatprep.subr.bf16.mxu0 0
  %375 = vmatpush1.bf16.msra.mxu0 0
  %376 = vmatprep.subr.bf16.mxu0 0
  %377 = vmatpush1.bf16.msra.mxu0 0
  %378 = vmatprep.mubr.bf16.mxu0 0
  %379 = vmatmul.mubr.bf16.gmra.mrb[0].mxu0 %v303
  %v380 = vpop.f32.mrb[0].mxu0
  %v381 = vadd.f32 0.0, %v380
  %v382 = vpop.f32.mrb[0].mxu0
  %v383 = vadd.f32 0.0, %v382
  %v384 = vpop.f32.mrb[0].mxu0
  %v385 = vpop.f32.mrb[0].mxu0
  %386 = vdwg.mxu0
  %387 = vmatprep.subr.bf16.mxu0 %v210
  %388 = vmatpush1.bf16.msra.mxu0 %v209
  %389 = vmatprep.subr.bf16.mxu0 %v226
  %390 = vmatpush1.bf16.msra.mxu0 %v225
  %391 = vmatprep.subr.bf16.mxu0 %v242
  %392 = vmatpush1.bf16.msra.mxu0 %v241
  %393 = vmatprep.subr.bf16.mxu0 0
  %394 = vmatpush1.bf16.msra.mxu0 0
  %395 = vmatprep.subr.bf16.mxu0 0
  %396 = vmatpush1.bf16.msra.mxu0 0
  %397 = vmatprep.subr.bf16.mxu0 0
  %398 = vmatpush1.bf16.msra.mxu0 0
  %399 = vmatprep.subr.bf16.mxu0 0
  %400 = vmatpush1.bf16.msra.mxu0 0
  %401 = vmatprep.subr.bf16.mxu0 0
  %402 = vmatpush1.bf16.msra.mxu0 0
  %403 = vmatprep.subr.bf16.mxu0 0
  %404 = vmatpush1.bf16.msra.mxu0 0
  %405 = vmatprep.subr.bf16.mxu0 0
  %406 = vmatpush1.bf16.msra.mxu0 0
  %407 = vmatprep.subr.bf16.mxu0 0
  %408 = vmatpush1.bf16.msra.mxu0 0
  %409 = vmatprep.subr.bf16.mxu0 0
  %410 = vmatpush1.bf16.msra.mxu0 0
  %411 = vmatprep.subr.bf16.mxu0 0
  %412 = vmatpush1.bf16.msra.mxu0 0
  %413 = vmatprep.subr.bf16.mxu0 0
  %414 = vmatpush1.bf16.msra.mxu0 0
  %415 = vmatprep.subr.bf16.mxu0 0
  %416 = vmatpush1.bf16.msra.mxu0 0
  %417 = vmatprep.subr.bf16.mxu0 0
  %418 = vmatpush1.bf16.msra.mxu0 0
  %419 = vmatprep.mubr.bf16.mxu0 0
  %420 = vmatmul.mubr.bf16.gmra.mrb[0].mxu0 %v303
  %v421 = vpop.f32.mrb[0].mxu0
  %v422 = vadd.f32 0.0, %v421
  %v423 = vpop.f32.mrb[0].mxu0
  %v424 = vadd.f32 0.0, %v423
  %v425 = vpop.f32.mrb[0].mxu0
  %v426 = vpop.f32.mrb[0].mxu0
  %427 = vdwg.mxu0
  %428 = vmatprep.subr.bf16.mxu0 %v212
  %429 = vmatpush1.bf16.msra.mxu0 %v211
  %430 = vmatprep.subr.bf16.mxu0 %v228
  %431 = vmatpush1.bf16.msra.mxu0 %v227
  %432 = vmatprep.subr.bf16.mxu0 %v244
  %433 = vmatpush1.bf16.msra.mxu0 %v243
  %434 = vmatprep.subr.bf16.mxu0 0
  %435 = vmatpush1.bf16.msra.mxu0 0
  %436 = vmatprep.subr.bf16.mxu0 0
  %437 = vmatpush1.bf16.msra.mxu0 0
  %438 = vmatprep.subr.bf16.mxu0 0
  %439 = vmatpush1.bf16.msra.mxu0 0
  %440 = vmatprep.subr.bf16.mxu0 0
  %441 = vmatpush1.bf16.msra.mxu0 0
  %442 = vmatprep.subr.bf16.mxu0 0
  %443 = vmatpush1.bf16.msra.mxu0 0
  %444 = vmatprep.subr.bf16.mxu0 0
  %445 = vmatpush1.bf16.msra.mxu0 0
  %446 = vmatprep.subr.bf16.mxu0 0
  %447 = vmatpush1.bf16.msra.mxu0 0
  %448 = vmatprep.subr.bf16.mxu0 0
  %449 = vmatpush1.bf16.msra.mxu0 0
  %450 = vmatprep.subr.bf16.mxu0 0
  %451 = vmatpush1.bf16.msra.mxu0 0
  %452 = vmatprep.subr.bf16.mxu0 0
  %453 = vmatpush1.bf16.msra.mxu0 0
  %454 = vmatprep.subr.bf16.mxu0 0
  %455 = vmatpush1.bf16.msra.mxu0 0
  %456 = vmatprep.subr.bf16.mxu0 0
  %457 = vmatpush1.bf16.msra.mxu0 0
  %458 = vmatprep.subr.bf16.mxu0 0
  %459 = vmatpush1.bf16.msra.mxu0 0
  %460 = vmatprep.mubr.bf16.mxu0 0
  %461 = vmatmul.mubr.bf16.gmra.mrb[0].mxu0 %v303
  %v462 = vpop.f32.mrb[0].mxu0
  %v463 = vadd.f32 0.0, %v462
  %v464 = vpop.f32.mrb[0].mxu0
  %v465 = vadd.f32 0.0, %v464
  %v466 = vpop.f32.mrb[0].mxu0
  %v467 = vpop.f32.mrb[0].mxu0
  %468 = vdwg.mxu0
  %469 = vmatprep.subr.bf16.mxu0 %v214
  %470 = vmatpush1.bf16.msra.mxu0 %v213
  %471 = vmatprep.subr.bf16.mxu0 %v230
  %472 = vmatpush1.bf16.msra.mxu0 %v229
  %473 = vmatprep.subr.bf16.mxu0 %v246
  %474 = vmatpush1.bf16.msra.mxu0 %v245
  %475 = vmatprep.subr.bf16.mxu0 0
  %476 = vmatpush1.bf16.msra.mxu0 0
  %477 = vmatprep.subr.bf16.mxu0 0
  %478 = vmatpush1.bf16.msra.mxu0 0
  %479 = vmatprep.subr.bf16.mxu0 0
  %480 = vmatpush1.bf16.msra.mxu0 0
  %481 = vmatprep.subr.bf16.mxu0 0
  %482 = vmatpush1.bf16.msra.mxu0 0
  %483 = vmatprep.subr.bf16.mxu0 0
  %484 = vmatpush1.bf16.msra.mxu0 0
  %485 = vmatprep.subr.bf16.mxu0 0
  %486 = vmatpush1.bf16.msra.mxu0 0
  %487 = vmatprep.subr.bf16.mxu0 0
  %488 = vmatpush1.bf16.msra.mxu0 0
  %489 = vmatprep.subr.bf16.mxu0 0
  %490 = vmatpush1.bf16.msra.mxu0 0
  %491 = vmatprep.subr.bf16.mxu0 0
  %492 = vmatpush1.bf16.msra.mxu0 0
  %493 = vmatprep.subr.bf16.mxu0 0
  %494 = vmatpush1.bf16.msra.mxu0 0
  %495 = vmatprep.subr.bf16.mxu0 0
  %496 = vmatpush1.bf16.msra.mxu0 0
  %497 = vmatprep.subr.bf16.mxu0 0
  %498 = vmatpush1.bf16.msra.mxu0 0
  %499 = vmatprep.subr.bf16.mxu0 0
  %500 = vmatpush1.bf16.msra.mxu0 0
  %501 = vmatprep.mubr.bf16.mxu0 0
  %502 = vmatmul.mubr.bf16.gmra.mrb[0].mxu0 %v303
  %v503 = vpop.f32.mrb[0].mxu0
  %v504 = vadd.f32 0.0, %v503
  %v505 = vpop.f32.mrb[0].mxu0
  %v506 = vadd.f32 0.0, %v505
  %v507 = vpop.f32.mrb[0].mxu0
  %v508 = vpop.f32.mrb[0].mxu0
  %509 = vdwg.mxu0
  %510 = vmatprep.subr.bf16.mxu0 %v216
  %511 = vmatpush1.bf16.msra.mxu0 %v215
  %512 = vmatprep.subr.bf16.mxu0 %v232
  %513 = vmatpush1.bf16.msra.mxu0 %v231
  %514 = vmatprep.subr.bf16.mxu0 %v248
  %515 = vmatpush1.bf16.msra.mxu0 %v247
  %516 = vmatprep.subr.bf16.mxu0 0
  %517 = vmatpush1.bf16.msra.mxu0 0
  %518 = vmatprep.subr.bf16.mxu0 0
  %519 = vmatpush1.bf16.msra.mxu0 0
  %520 = vmatprep.subr.bf16.mxu0 0
  %521 = vmatpush1.bf16.msra.mxu0 0
  %522 = vmatprep.subr.bf16.mxu0 0
  %523 = vmatpush1.bf16.msra.mxu0 0
  %524 = vmatprep.subr.bf16.mxu0 0
  %525 = vmatpush1.bf16.msra.mxu0 0
  %526 = vmatprep.subr.bf16.mxu0 0
  %527 = vmatpush1.bf16.msra.mxu0 0
  %528 = vmatprep.subr.bf16.mxu0 0
  %529 = vmatpush1.bf16.msra.mxu0 0
  %530 = vmatprep.subr.bf16.mxu0 0
  %531 = vmatpush1.bf16.msra.mxu0 0
  %532 = vmatprep.subr.bf16.mxu0 0
  %533 = vmatpush1.bf16.msra.mxu0 0
  %534 = vmatprep.subr.bf16.mxu0 0
  %535 = vmatpush1.bf16.msra.mxu0 0
  %536 = vmatprep.subr.bf16.mxu0 0
  %537 = vmatpush1.bf16.msra.mxu0 0
  %538 = vmatprep.subr.bf16.mxu0 0
  %539 = vmatpush1.bf16.msra.mxu0 0
  %540 = vmatprep.subr.bf16.mxu0 0
  %541 = vmatpush1.bf16.msra.mxu0 0
  %542 = vmatprep.mubr.bf16.mxu0 0
  %543 = vmatmul.mubr.bf16.gmra.mrb[0].mxu0 %v303
  %v544 = vpop.f32.mrb[0].mxu0
  %v545 = vadd.f32 0.0, %v544
  %v546 = vpop.f32.mrb[0].mxu0
  %v547 = vadd.f32 0.0, %v546
  %v548 = vpop.f32.mrb[0].mxu0
  %v549 = vpop.f32.mrb[0].mxu0
  %550 = vdwg.mxu0
  %551 = vmatprep.subr.bf16.mxu0 %v218
  %552 = vmatpush1.bf16.msra.mxu0 %v217
  %553 = vmatprep.subr.bf16.mxu0 %v234
  %554 = vmatpush1.bf16.msra.mxu0 %v233
  %555 = vmatprep.subr.bf16.mxu0 %v250
  %556 = vmatpush1.bf16.msra.mxu0 %v249
  %557 = vmatprep.subr.bf16.mxu0 0
  %558 = vmatpush1.bf16.msra.mxu0 0
  %559 = vmatprep.subr.bf16.mxu0 0
  %560 = vmatpush1.bf16.msra.mxu0 0
  %561 = vmatprep.subr.bf16.mxu0 0
  %562 = vmatpush1.bf16.msra.mxu0 0
  %563 = vmatprep.subr.bf16.mxu0 0
  %564 = vmatpush1.bf16.msra.mxu0 0
  %565 = vmatprep.subr.bf16.mxu0 0
  %566 = vmatpush1.bf16.msra.mxu0 0
  %567 = vmatprep.subr.bf16.mxu0 0
  %568 = vmatpush1.bf16.msra.mxu0 0
  %569 = vmatprep.subr.bf16.mxu0 0
  %570 = vmatpush1.bf16.msra.mxu0 0
  %571 = vmatprep.subr.bf16.mxu0 0
  %572 = vmatpush1.bf16.msra.mxu0 0
  %573 = vmatprep.subr.bf16.mxu0 0
  %574 = vmatpush1.bf16.msra.mxu0 0
  %575 = vmatprep.subr.bf16.mxu0 0
  %576 = vmatpush1.bf16.msra.mxu0 0
  %577 = vmatprep.subr.bf16.mxu0 0
  %578 = vmatpush1.bf16.msra.mxu0 0
  %579 = vmatprep.subr.bf16.mxu0 0
  %580 = vmatpush1.bf16.msra.mxu0 0
  %581 = vmatprep.subr.bf16.mxu0 0
  %582 = vmatpush1.bf16.msra.mxu0 0
  %583 = vmatprep.mubr.bf16.mxu0 0
  %584 = vmatmul.mubr.bf16.gmra.mrb[0].mxu0 %v303
  %v585 = vpop.f32.mrb[0].mxu0
  %v586 = vadd.f32 0.0, %v585
  %v587 = vpop.f32.mrb[0].mxu0
  %v588 = vadd.f32 0.0, %v587
  %v589 = vpop.f32.mrb[0].mxu0
  %v590 = vpop.f32.mrb[0].mxu0
  %591 = vdwg.mxu0
  %592 = vmatprep.subr.bf16.mxu0 %v220
  %593 = vmatpush1.bf16.msra.mxu0 %v219
  %594 = vmatprep.subr.bf16.mxu0 %v236
  %595 = vmatpush1.bf16.msra.mxu0 %v235
  %596 = vmatprep.subr.bf16.mxu0 %v252
  %597 = vmatpush1.bf16.msra.mxu0 %v251
  %598 = vmatprep.subr.bf16.mxu0 0
  %599 = vmatpush1.bf16.msra.mxu0 0
  %600 = vmatprep.subr.bf16.mxu0 0
  %601 = vmatpush1.bf16.msra.mxu0 0
  %602 = vmatprep.subr.bf16.mxu0 0
  %603 = vmatpush1.bf16.msra.mxu0 0
  %604 = vmatprep.subr.bf16.mxu0 0
  %605 = vmatpush1.bf16.msra.mxu0 0
  %606 = vmatprep.subr.bf16.mxu0 0
  %607 = vmatpush1.bf16.msra.mxu0 0
  %608 = vmatprep.subr.bf16.mxu0 0
  %609 = vmatpush1.bf16.msra.mxu0 0
  %610 = vmatprep.subr.bf16.mxu0 0
  %611 = vmatpush1.bf16.msra.mxu0 0
  %612 = vmatprep.subr.bf16.mxu0 0
  %613 = vmatpush1.bf16.msra.mxu0 0
  %614 = vmatprep.subr.bf16.mxu0 0
  %615 = vmatpush1.bf16.msra.mxu0 0
  %616 = vmatprep.subr.bf16.mxu0 0
  %617 = vmatpush1.bf16.msra.mxu0 0
  %618 = vmatprep.subr.bf16.mxu0 0
  %619 = vmatpush1.bf16.msra.mxu0 0
  %620 = vmatprep.subr.bf16.mxu0 0
  %621 = vmatpush1.bf16.msra.mxu0 0
  %622 = vmatprep.subr.bf16.mxu0 0
  %623 = vmatpush1.bf16.msra.mxu0 0
  %624 = vmatprep.mubr.bf16.mxu0 0
  %625 = vmatmul.mubr.bf16.gmra.mrb[0].mxu0 %v303
  %v626 = vpop.f32.mrb[0].mxu0
  %v627 = vadd.f32 0.0, %v626
  %v628 = vpop.f32.mrb[0].mxu0
  %v629 = vadd.f32 0.0, %v628
  %v630 = vpop.f32.mrb[0].mxu0
  %v631 = vpop.f32.mrb[0].mxu0
  %632 = vdwg.mxu0
  %vm633 = vcmp.gt.f32.partialorder %v340, 0.0
  %vm634 = vcmp.gt.f32.partialorder %v342, 0.0
  %vm635 = vcmp.gt.f32.partialorder %v381, 0.0
  %vm636 = vcmp.gt.f32.partialorder %v383, 0.0
  %vm637 = vcmp.gt.f32.partialorder %v422, 0.0
  %vm638 = vcmp.gt.f32.partialorder %v424, 0.0
  %vm639 = vcmp.gt.f32.partialorder %v463, 0.0
  %vm640 = vcmp.gt.f32.partialorder %v465, 0.0
  %vm641 = vcmp.gt.f32.partialorder %v504, 0.0
  %vm642 = vcmp.gt.f32.partialorder %v506, 0.0
  %vm643 = vcmp.gt.f32.partialorder %v545, 0.0
  %vm644 = vcmp.gt.f32.partialorder %v547, 0.0
  %vm645 = vcmp.gt.f32.partialorder %v586, 0.0
  %vm646 = vcmp.gt.f32.partialorder %v588, 0.0
  %vm647 = vcmp.gt.f32.partialorder %v627, 0.0
  %vm648 = vcmp.gt.f32.partialorder %v629, 0.0
  %v649 = vmul.f32 %v340, 0.2
  %v650 = vmul.f32 %v342, 0.2
  %v651 = vmul.f32 %v381, 0.2
  %v652 = vmul.f32 %v383, 0.2
  %v653 = vmul.f32 %v422, 0.2
  %v654 = vmul.f32 %v424, 0.2
  %v655 = vmul.f32 %v463, 0.2
  %v656 = vmul.f32 %v465, 0.2
  %v657 = vmul.f32 %v504, 0.2
  %v658 = vmul.f32 %v506, 0.2
  %v659 = vmul.f32 %v545, 0.2
  %v660 = vmul.f32 %v547, 0.2
  %v661 = vmul.f32 %v586, 0.2
  %v662 = vmul.f32 %v588, 0.2
  %v663 = vmul.f32 %v627, 0.2
  %v664 = vmul.f32 %v629, 0.2
  %v665 = vsel %vm633, %v340, %v649
  %v666 = vsel %vm634, %v342, %v650
  %v667 = vsel %vm635, %v381, %v651
  %v668 = vsel %vm636, %v383, %v652
  %v669 = vsel %vm637, %v422, %v653
  %v670 = vsel %vm638, %v424, %v654
  %v671 = vsel %vm639, %v463, %v655
  %v672 = vsel %vm640, %v465, %v656
  %v673 = vsel %vm641, %v504, %v657
  %v674 = vsel %vm642, %v506, %v658
  %v675 = vsel %vm643, %v545, %v659
  %v676 = vsel %vm644, %v547, %v660
  %v677 = vsel %vm645, %v586, %v661
  %v678 = vsel %vm646, %v588, %v662
  %v679 = vsel %vm647, %v627, %v663
  %v680 = vsel %vm648, %v629, %v664
  %v681 = vpack.c.bf16 %v665, %v665
  %v682 = vpack.c.bf16 %v666, %v666
  %v683 = vpack.c.bf16 %v667, %v667
  %v684 = vpack.c.bf16 %v668, %v668
  %v685 = vpack.c.bf16 %v669, %v669
  %v686 = vpack.c.bf16 %v670, %v670
  %v687 = vpack.c.bf16 %v671, %v671
  %v688 = vpack.c.bf16 %v672, %v672
  %v689 = vpack.c.bf16 %v673, %v673
  %v690 = vpack.c.bf16 %v674, %v674
  %v691 = vpack.c.bf16 %v675, %v675
  %v692 = vpack.c.bf16 %v676, %v676
  %v693 = vpack.c.bf16 %v677, %v677
  %v694 = vpack.c.bf16 %v678, %v678
  %v695 = vpack.c.bf16 %v679, %v679
  %v696 = vpack.c.bf16 %v680, %v680
  %v713 = vunpack.c.l.b16 %v681
  %v714 = vunpack.c.l.b16 %v682
  %v715 = vunpack.c.l.b16 %v683
  %v716 = vunpack.c.l.b16 %v684
  %v717 = vunpack.c.l.b16 %v685
  %v718 = vunpack.c.l.b16 %v686
  %v719 = vunpack.c.l.b16 %v687
  %v720 = vunpack.c.l.b16 %v688
  %v721 = vunpack.c.l.b16 %v689
  %v722 = vunpack.c.l.b16 %v690
  %v723 = vunpack.c.l.b16 %v691
  %v724 = vunpack.c.l.b16 %v692
  %v725 = vunpack.c.l.b16 %v693
  %v726 = vunpack.c.l.b16 %v694
  %v727 = vunpack.c.l.b16 %v695
  %v728 = vunpack.c.l.b16 %v696
  %v729 = vpack.c.b16 %v714, %v713
  %v730 = vpack.c.b16 %v716, %v715
  %v731 = vpack.c.b16 %v718, %v717
  %v732 = vpack.c.b16 %v720, %v719
  %v733 = vpack.c.b16 %v722, %v721
  %v734 = vpack.c.b16 %v724, %v723
  %v735 = vpack.c.b16 %v726, %v725
  %v736 = vpack.c.b16 %v728, %v727
  %745 = vst [vmem:[%s2] sm:$0xff] %v729
  %746 = vst [vmem:[%s2 + $0x8] sm:$0xff] %v730
  %747 = vst [vmem:[%s2 + $0x10] sm:$0xff] %v731
  %748 = vst [vmem:[%s2 + $0x18] sm:$0xff] %v732
  %749 = vst [vmem:[%s2 + $0x20] sm:$0xff] %v733
  %750 = vst [vmem:[%s2 + $0x28] sm:$0xff] %v734
  %751 = vst [vmem:[%s2 + $0x30] sm:$0xff] %v735
  %752 = vst [vmem:[%s2 + $0x38] sm:$0xff] %v736
  // Predicated region
  $region10: #{discriminator_forward.3} parent=0 // pred_check
    _
  $region11: #{discriminator_forward.3} parent=0 // pred_check_branch
    %754 = sbr.rel (0) target = $region13
  $region12: #{discriminator_forward.3} parent=0 // pred_region
    _
  $region13: #{discriminator_forward.3} parent=0 // pred_fallthru
    _
  // Predicated region
  $region14: #{discriminator_forward.3} parent=0 // pred_check
    _
  $region15: #{discriminator_forward.3} parent=0 // pred_check_branch
    %756 = sbr.rel (0) target = $region17
  $region16: #{discriminator_forward.3} parent=0 // pred_region
    _
  $region17: #{discriminator_forward.3} parent=0 // pred_fallthru
    _

// kernel: discriminator_forward.4
$region0: #{discriminator_forward.4}
  #allocation0 [shape = 'u32[]', space=smem, size = 0x4, offset = 0x4, fixed_abs, tag = 'smem constant byte address 0x4 - core index']
  #allocation1 [shape = 'u32[144,128]{1,0:T(1,128)}', space=vmem, size = 0x12000, scoped, tag = 'internal scratch']
  %s0 = inlined_call_operand.vmem [shape: bf16[128,512], index: 0, kind: input, shape index: {}]
  %s1 = inlined_call_operand.vmem [shape: bf16[16,128], index: 1, kind: input, shape index: {}]
  %s2 = inlined_call_operand.vmem [shape: f32[16,1], index: 2, kind: input, shape index: {}]
  %s3 = inlined_call_operand.vmem [shape: f32[16,1], index: 3, kind: input, shape index: {}]
  %s4 = inlined_call_operand.vmem [shape: bf16[16,512], index: 4, kind: output, shape index: {}]
  %s5 = sld [smem:[#allocation0]]
  $region26: #{discriminator_forward.4} parent=0
    _
  %s7 = ssub.s32 1, %s5
  %s8 = scalar_select 0, %s7, %s5
  // Predicated region
  $region2: #{discriminator_forward.4} parent=0 // pred_check
    _
  $region3: #{discriminator_forward.4} parent=0 // pred_check_branch
    %10 = sbr.rel (0) target = $region5
  $region4: #{discriminator_forward.4} parent=0 // pred_region
    _
  $region5: #{discriminator_forward.4} parent=0 // pred_fallthru
    _
  // Predicated region
  $region6: #{discriminator_forward.4} parent=0 // pred_check
    _
  $region7: #{discriminator_forward.4} parent=0 // pred_check_branch
    %12 = sbr.rel (0) target = $region9
  $region8: #{discriminator_forward.4} parent=0 // pred_region
    _
  $region9: #{discriminator_forward.4} parent=0 // pred_fallthru
    _
  // Predicated region
  $region10: #{discriminator_forward.4} parent=0 // pred_check
    _
  $region11: #{discriminator_forward.4} parent=0 // pred_check_branch
    %14 = sbr.rel (0) target = $region13
  $region12: #{discriminator_forward.4} parent=0 // pred_region
    _
  $region13: #{discriminator_forward.4} parent=0 // pred_fallthru
    _
  // Predicated region
  $region14: #{discriminator_forward.4} parent=0 // pred_check
    _
  $region15: #{discriminator_forward.4} parent=0 // pred_check_branch
    %16 = sbr.rel (0) target = $region17
  $region16: #{discriminator_forward.4} parent=0 // pred_region
    _
  $region17: #{discriminator_forward.4} parent=0 // pred_fallthru
    _
  %v18 = vld [vmem:[%s1] sm:$0xf]
  %v19 = vld [vmem:[%s1 + $0x4] sm:$0xf]
  %v20 = vld [vmem:[%s0] sm:$0xff]
  %v21 = vld [vmem:[%s0 + $0x8] sm:$0xff]
  %v22 = vld [vmem:[%s0 + $0x10] sm:$0xff]
  %v23 = vld [vmem:[%s0 + $0x18] sm:$0xff]
  %v24 = vld [vmem:[%s0 + $0x20] sm:$0xff]
  %v25 = vld [vmem:[%s0 + $0x28] sm:$0xff]
  %v26 = vld [vmem:[%s0 + $0x30] sm:$0xff]
  %v27 = vld [vmem:[%s0 + $0x38] sm:$0xff]
  %v28 = vld [vmem:[%s0 + $0x40] sm:$0xff]
  %v29 = vld [vmem:[%s0 + $0x48] sm:$0xff]
  %v30 = vld [vmem:[%s0 + $0x50] sm:$0xff]
  %v31 = vld [vmem:[%s0 + $0x58] sm:$0xff]
  %v32 = vld [vmem:[%s0 + $0x60] sm:$0xff]
  %v33 = vld [vmem:[%s0 + $0x68] sm:$0xff]
  %v34 = vld [vmem:[%s0 + $0x70] sm:$0xff]
  %v35 = vld [vmem:[%s0 + $0x78] sm:$0xff]
  %v36 = vld [vmem:[%s0 + $0x80] sm:$0xff]
  %v37 = vld [vmem:[%s0 + $0x88] sm:$0xff]
  %v38 = vld [vmem:[%s0 + $0x90] sm:$0xff]
  %v39 = vld [vmem:[%s0 + $0x98] sm:$0xff]
  %v40 = vld [vmem:[%s0 + $0xa0] sm:$0xff]
  %v41 = vld [vmem:[%s0 + $0xa8] sm:$0xff]
  %v42 = vld [vmem:[%s0 + $0xb0] sm:$0xff]
  %v43 = vld [vmem:[%s0 + $0xb8] sm:$0xff]
  %v44 = vld [vmem:[%s0 + $0xc0] sm:$0xff]
  %v45 = vld [vmem:[%s0 + $0xc8] sm:$0xff]
  %v46 = vld [vmem:[%s0 + $0xd0] sm:$0xff]
  %v47 = vld [vmem:[%s0 + $0xd8] sm:$0xff]
  %v48 = vld [vmem:[%s0 + $0xe0] sm:$0xff]
  %v49 = vld [vmem:[%s0 + $0xe8] sm:$0xff]
  %v50 = vld [vmem:[%s0 + $0xf0] sm:$0xff]
  %v51 = vld [vmem:[%s0 + $0xf8] sm:$0xff]
  %v54 = vunpack.c.l.b16 %v18
  %v55 = vunpack.c.l.b16 %v19
  %v56 = vpack.c.b16 %v55, %v54
  %v90 = vunpack.c.l.b16 %v20
  %v91 = vunpack.c.h.b16 %v20
  %v92 = vunpack.c.l.b16 %v21
  %v93 = vunpack.c.h.b16 %v21
  %v94 = vunpack.c.l.b16 %v22
  %v95 = vunpack.c.h.b16 %v22
  %v96 = vunpack.c.l.b16 %v23
  %v97 = vunpack.c.h.b16 %v23
  %v98 = vunpack.c.l.b16 %v24
  %v99 = vunpack.c.h.b16 %v24
  %v100 = vunpack.c.l.b16 %v25
  %v101 = vunpack.c.h.b16 %v25
  %v102 = vunpack.c.l.b16 %v26
  %v103 = vunpack.c.h.b16 %v26
  %v104 = vunpack.c.l.b16 %v27
  %v105 = vunpack.c.h.b16 %v27
  %v106 = vunpack.c.l.b16 %v28
  %v107 = vunpack.c.h.b16 %v28
  %v108 = vunpack.c.l.b16 %v29
  %v109 = vunpack.c.h.b16 %v29
  %v110 = vunpack.c.l.b16 %v30
  %v111 = vunpack.c.h.b16 %v30
  %v112 = vunpack.c.l.b16 %v31
  %v113 = vunpack.c.h.b16 %v31
  %v114 = vunpack.c.l.b16 %v32
  %v115 = vunpack.c.h.b16 %v32
  %v116 = vunpack.c.l.b16 %v33
  %v117 = vunpack.c.h.b16 %v33
  %v118 = vunpack.c.l.b16 %v34
  %v119 = vunpack.c.h.b16 %v34
  %v120 = vunpack.c.l.b16 %v35
  %v121 = vunpack.c.h.b16 %v35
  %v122 = vunpack.c.l.b16 %v36
  %v123 = vunpack.c.h.b16 %v36
  %v124 = vunpack.c.l.b16 %v37
  %v125 = vunpack.c.h.b16 %v37
  %v126 = vunpack.c.l.b16 %v38
  %v127 = vunpack.c.h.b16 %v38
  %v128 = vunpack.c.l.b16 %v39
  %v129 = vunpack.c.h.b16 %v39
  %v130 = vunpack.c.l.b16 %v40
  %v131 = vunpack.c.h.b16 %v40
  %v132 = vunpack.c.l.b16 %v41
  %v133 = vunpack.c.h.b16 %v41
  %v134 = vunpack.c.l.b16 %v42
  %v135 = vunpack.c.h.b16 %v42
  %v136 = vunpack.c.l.b16 %v43
  %v137 = vunpack.c.h.b16 %v43
  %v138 = vunpack.c.l.b16 %v44
  %v139 = vunpack.c.h.b16 %v44
  %v140 = vunpack.c.l.b16 %v45
  %v141 = vunpack.c.h.b16 %v45
  %v142 = vunpack.c.l.b16 %v46
  %v143 = vunpack.c.h.b16 %v46
  %v144 = vunpack.c.l.b16 %v47
  %v145 = vunpack.c.h.b16 %v47
  %v146 = vunpack.c.l.b16 %v48
  %v147 = vunpack.c.h.b16 %v48
  %v148 = vunpack.c.l.b16 %v49
  %v149 = vunpack.c.h.b16 %v49
  %v150 = vunpack.c.l.b16 %v50
  %v151 = vunpack.c.h.b16 %v50
  %v152 = vunpack.c.l.b16 %v51
  %v153 = vunpack.c.h.b16 %v51
  %v154 = vpack.c.b16 %v94, %v90
  %v155 = vpack.c.b16 %v95, %v91
  %v156 = vpack.c.b16 %v96, %v92
  %v157 = vpack.c.b16 %v97, %v93
  %v158 = vpack.c.b16 %v102, %v98
  %v159 = vpack.c.b16 %v103, %v99
  %v160 = vpack.c.b16 %v104, %v100
  %v161 = vpack.c.b16 %v105, %v101
  %v162 = vpack.c.b16 %v110, %v106
  %v163 = vpack.c.b16 %v111, %v107
  %v164 = vpack.c.b16 %v112, %v108
  %v165 = vpack.c.b16 %v113, %v109
  %v166 = vpack.c.b16 %v118, %v114
  %v167 = vpack.c.b16 %v119, %v115
  %v168 = vpack.c.b16 %v120, %v116
  %v169 = vpack.c.b16 %v121, %v117
  %v170 = vpack.c.b16 %v126, %v122
  %v171 = vpack.c.b16 %v127, %v123
  %v172 = vpack.c.b16 %v128, %v124
  %v173 = vpack.c.b16 %v129, %v125
  %v174 = vpack.c.b16 %v134, %v130
  %v175 = vpack.c.b16 %v135, %v131
  %v176 = vpack.c.b16 %v136, %v132
  %v177 = vpack.c.b16 %v137, %v133
  %v178 = vpack.c.b16 %v142, %v138
  %v179 = vpack.c.b16 %v143, %v139
  %v180 = vpack.c.b16 %v144, %v140
  %v181 = vpack.c.b16 %v145, %v141
  %v182 = vpack.c.b16 %v150, %v146
  %v183 = vpack.c.b16 %v151, %v147
  %v184 = vpack.c.b16 %v152, %v148
  %v185 = vpack.c.b16 %v153, %v149
  %218 = vmatprep.subr.bf16.mxu0 %v155
  %219 = vmatpush1.bf16.msra.mxu0 %v154
  %220 = vmatprep.subr.bf16.mxu0 %v159
  %221 = vmatpush1.bf16.msra.mxu0 %v158
  %222 = vmatprep.subr.bf16.mxu0 %v163
  %223 = vmatpush1.bf16.msra.mxu0 %v162
  %224 = vmatprep.subr.bf16.mxu0 %v167
  %225 = vmatpush1.bf16.msra.mxu0 %v166
  %226 = vmatprep.subr.bf16.mxu0 %v171
  %227 = vmatpush1.bf16.msra.mxu0 %v170
  %228 = vmatprep.subr.bf16.mxu0 %v175
  %229 = vmatpush1.bf16.msra.mxu0 %v174
  %230 = vmatprep.subr.bf16.mxu0 %v179
  %231 = vmatpush1.bf16.msra.mxu0 %v178
  %232 = vmatprep.subr.bf16.mxu0 %v183
  %233 = vmatpush1.bf16.msra.mxu0 %v182
  %234 = vmatprep.subr.bf16.mxu0 0
  %235 = vmatpush1.bf16.msra.mxu0 0
  %236 = vmatprep.subr.bf16.mxu0 0
  %237 = vmatpush1.bf16.msra.mxu0 0
  %238 = vmatprep.subr.bf16.mxu0 0
  %239 = vmatpush1.bf16.msra.mxu0 0
  %240 = vmatprep.subr.bf16.mxu0 0
  %241 = vmatpush1.bf16.msra.mxu0 0
  %242 = vmatprep.subr.bf16.mxu0 0
  %243 = vmatpush1.bf16.msra.mxu0 0
  %244 = vmatprep.subr.bf16.mxu0 0
  %245 = vmatpush1.bf16.msra.mxu0 0
  %246 = vmatprep.subr.bf16.mxu0 0
  %247 = vmatpush1.bf16.msra.mxu0 0
  %248 = vmatprep.subr.bf16.mxu0 0
  %249 = vmatpush1.bf16.msra.mxu0 0
  %250 = vmatprep.mubr.bf16.mxu0 0
  %251 = vmatmul.mubr.bf16.gmra.mrb[0].mxu0 %v56
  %v252 = vpop.f32.mrb[0].mxu0
  %v253 = vadd.f32 0.0, %v252
  %v254 = vpop.f32.mrb[0].mxu0
  %v255 = vadd.f32 0.0, %v254
  %v256 = vpop.f32.mrb[0].mxu0
  %v257 = vadd.f32 0.0, %v256
  %v258 = vpop.f32.mrb[0].mxu0
  %v259 = vadd.f32 0.0, %v258
  %260 = vdwg.mxu0
  %261 = vmatprep.subr.bf16.mxu0 %v157
  %262 = vmatpush1.bf16.msra.mxu0 %v156
  %263 = vmatprep.subr.bf16.mxu0 %v161
  %264 = vmatpush1.bf16.msra.mxu0 %v160
  %265 = vmatprep.subr.bf16.mxu0 %v165
  %266 = vmatpush1.bf16.msra.mxu0 %v164
  %267 = vmatprep.subr.bf16.mxu0 %v169
  %268 = vmatpush1.bf16.msra.mxu0 %v168
  %269 = vmatprep.subr.bf16.mxu0 %v173
  %270 = vmatpush1.bf16.msra.mxu0 %v172
  %271 = vmatprep.subr.bf16.mxu0 %v177
  %272 = vmatpush1.bf16.msra.mxu0 %v176
  %273 = vmatprep.subr.bf16.mxu0 %v181
  %274 = vmatpush1.bf16.msra.mxu0 %v180
  %275 = vmatprep.subr.bf16.mxu0 %v185
  %276 = vmatpush1.bf16.msra.mxu0 %v184
  %277 = vmatprep.subr.bf16.mxu0 0
  %278 = vmatpush1.bf16.msra.mxu0 0
  %279 = vmatprep.subr.bf16.mxu0 0
  %280 = vmatpush1.bf16.msra.mxu0 0
  %281 = vmatprep.subr.bf16.mxu0 0
  %282 = vmatpush1.bf16.msra.mxu0 0
  %283 = vmatprep.subr.bf16.mxu0 0
  %284 = vmatpush1.bf16.msra.mxu0 0
  %285 = vmatprep.subr.bf16.mxu0 0
  %286 = vmatpush1.bf16.msra.mxu0 0
  %287 = vmatprep.subr.bf16.mxu0 0
  %288 = vmatpush1.bf16.msra.mxu0 0
  %289 = vmatprep.subr.bf16.mxu0 0
  %290 = vmatpush1.bf16.msra.mxu0 0
  %291 = vmatprep.subr.bf16.mxu0 0
  %292 = vmatpush1.bf16.msra.mxu0 0
  %293 = vmatprep.mubr.bf16.mxu0 0
  %294 = vmatmul.mubr.bf16.gmra.mrb[0].mxu0 %v56
  %v295 = vpop.f32.mrb[0].mxu0
  %v296 = vadd.f32 0.0, %v295
  %v297 = vpop.f32.mrb[0].mxu0
  %v298 = vadd.f32 0.0, %v297
  %v299 = vpop.f32.mrb[0].mxu0
  %v300 = vadd.f32 0.0, %v299
  %v301 = vpop.f32.mrb[0].mxu0
  %v302 = vadd.f32 0.0, %v301
  %303 = vdwg.mxu0
  %v304 = vadd.f32 %v253, %v255
  %v305 = vadd.f32 %v304, %v296
  %v306 = vadd.f32 %v305, %v298
  %307 = vadd.xlane.f32.xlu0 %v306
  %v308 = vpop.xlane.xlu0 %307
  %v309 = vadd.f32 %v257, %v259
  %v310 = vadd.f32 %v309, %v300
  %v311 = vadd.f32 %v310, %v302
  %312 = vadd.xlane.f32.xlu0 %v311
  %v313 = vpop.xlane.xlu0 %312
  %v314 = vrcp.pop 512.0
  %v315 = vmul.f32 %v308, %v314
  %v316 = vmul.f32 %v313, %v314
  %v317 = vsub.f32 %v253, %v315
  %v318 = vsub.f32 %v255, %v315
  %v319 = vsub.f32 %v296, %v315
  %v320 = vsub.f32 %v298, %v315
  %v321 = vsub.f32 %v257, %v316
  %v322 = vsub.f32 %v259, %v316
  %v323 = vsub.f32 %v300, %v316
  %v324 = vsub.f32 %v302, %v316
  %v325 = vmul.f32 %v317, %v317
  %v326 = vmul.f32 %v318, %v318
  %v327 = vmul.f32 %v319, %v319
  %v328 = vmul.f32 %v320, %v320
  %v329 = vmul.f32 %v321, %v321
  %v330 = vmul.f32 %v322, %v322
  %v331 = vmul.f32 %v323, %v323
  %v332 = vmul.f32 %v324, %v324
  %v333 = vadd.f32 %v325, %v326
  %v334 = vadd.f32 %v333, %v327
  %v335 = vadd.f32 %v334, %v328
  %336 = vadd.xlane.f32.xlu0 %v335
  %v337 = vpop.xlane.xlu0 %336
  %v338 = vadd.f32 %v329, %v330
  %v339 = vadd.f32 %v338, %v331
  %v340 = vadd.f32 %v339, %v332
  %341 = vadd.xlane.f32.xlu0 %v340
  %v342 = vpop.xlane.xlu0 %341
  %v343 = vmul.f32 %v337, %v314
  %v344 = vmul.f32 %v342, %v314
  %v345 = vadd.f32 %v343, 1e-05
  %v346 = vadd.f32 %v344, 1e-05
  %v347 = vrsqrt.pop %v345
  %v348 = vrsqrt.pop %v346
  %v349 = vmul.f32 %v317, %v347
  %v350 = vmul.f32 %v318, %v347
  %v351 = vmul.f32 %v319, %v347
  %v352 = vmul.f32 %v320, %v347
  %v353 = vmul.f32 %v321, %v348
  %v354 = vmul.f32 %v322, %v348
  %v355 = vmul.f32 %v323, %v348
  %v356 = vmul.f32 %v324, %v348
  %v357 = vld [vmem:[%s2] sm:$0xff]
  %v358 = vld [vmem:[%s2 + $0x8] sm:$0xff]
  %360 = vset.pattern.permute.xlu0 0
  %361 = vperm.xlu0 %360, %v357
  %v362 = vpop.permute.xlu0 %361
  %365 = vset.pattern.permute.xlu0 0
  %366 = vperm.xlu0 %365, %v358
  %v367 = vpop.permute.xlu0 %366
  %v369 = vmul.f32 %v349, %v362
  %v370 = vmul.f32 %v350, %v362
  %v371 = vmul.f32 %v351, %v362
  %v372 = vmul.f32 %v352, %v362
  %v373 = vmul.f32 %v353, %v367
  %v374 = vmul.f32 %v354, %v367
  %v375 = vmul.f32 %v355, %v367
  %v376 = vmul.f32 %v356, %v367
  %v377 = vld [vmem:[%s3] sm:$0xff]
  %v378 = vld [vmem:[%s3 + $0x8] sm:$0xff]
  %380 = vset.pattern.permute.xlu0 0
  %381 = vperm.xlu0 %380, %v377
  %v382 = vpop.permute.xlu0 %381
  %385 = vset.pattern.permute.xlu0 0
  %386 = vperm.xlu0 %385, %v378
  %v387 = vpop.permute.xlu0 %386
  %v389 = vadd.f32 %v369, %v382
  %v390 = vadd.f32 %v370, %v382
  %v391 = vadd.f32 %v371, %v382
  %v392 = vadd.f32 %v372, %v382
  %v393 = vadd.f32 %v373, %v387
  %v394 = vadd.f32 %v374, %v387
  %v395 = vadd.f32 %v375, %v387
  %v396 = vadd.f32 %v376, %v387
  %vm397 = vcmp.gt.f32.partialorder %v389, 0.0
  %vm398 = vcmp.gt.f32.partialorder %v390, 0.0
  %vm399 = vcmp.gt.f32.partialorder %v391, 0.0
  %vm400 = vcmp.gt.f32.partialorder %v392, 0.0
  %vm401 = vcmp.gt.f32.partialorder %v393, 0.0
  %vm402 = vcmp.gt.f32.partialorder %v394, 0.0
  %vm403 = vcmp.gt.f32.partialorder %v395, 0.0
  %vm404 = vcmp.gt.f32.partialorder %v396, 0.0
  %v405 = vmul.f32 %v389, 0.2
  %v406 = vmul.f32 %v390, 0.2
  %v407 = vmul.f32 %v391, 0.2
  %v408 = vmul.f32 %v392, 0.2
  %v409 = vmul.f32 %v393, 0.2
  %v410 = vmul.f32 %v394, 0.2
  %v411 = vmul.f32 %v395, 0.2
  %v412 = vmul.f32 %v396, 0.2
  %v413 = vsel %vm397, %v389, %v405
  %v414 = vsel %vm398, %v390, %v406
  %v415 = vsel %vm399, %v391, %v407
  %v416 = vsel %vm400, %v392, %v408
  %v417 = vsel %vm401, %v393, %v409
  %v418 = vsel %vm402, %v394, %v410
  %v419 = vsel %vm403, %v395, %v411
  %v420 = vsel %vm404, %v396, %v412
  %v421 = vpack.c.bf16 %v417, %v413
  %v422 = vpack.c.bf16 %v418, %v414
  %v423 = vpack.c.bf16 %v419, %v415
  %v424 = vpack.c.bf16 %v420, %v416
  %v429 = vunpack.c.l.b16 %v421
  %v430 = vunpack.c.l.b16 %v422
  %v431 = vunpack.c.l.b16 %v423
  %v432 = vunpack.c.l.b16 %v424
  %v433 = vunpack.c.h.b16 %v421
  %v434 = vunpack.c.h.b16 %v422
  %v435 = vunpack.c.h.b16 %v423
  %v436 = vunpack.c.h.b16 %v424
  %v437 = vpack.c.b16 %v430, %v429
  %v438 = vpack.c.b16 %v432, %v431
  %v439 = vpack.c.b16 %v434, %v433
  %v440 = vpack.c.b16 %v436, %v435
  %445 = vst [vmem:[%s4] sm:$0xff] %v437
  %446 = vst [vmem:[%s4 + $0x8] sm:$0xff] %v438
  %447 = vst [vmem:[%s4 + $0x10] sm:$0xff] %v439
  %448 = vst [vmem:[%s4 + $0x18] sm:$0xff] %v440
  // Predicated region
  $region18: #{discriminator_forward.4} parent=0 // pred_check
    _
  $region19: #{discriminator_forward.4} parent=0 // pred_check_branch
    %450 = sbr.rel (0) target = $region21
  $region20: #{discriminator_forward.4} parent=0 // pred_region
    _
  $region21: #{discriminator_forward.4} parent=0 // pred_fallthru
    _
  // Predicated region
  $region22: #{discriminator_forward.4} parent=0 // pred_check
    _
  $region23: #{discriminator_forward.4} parent=0 // pred_check_branch
    %452 = sbr.rel (0) target = $region25
  $region24: #{discriminator_forward.4} parent=0 // pred_region
    _
  $region25: #{discriminator_forward.4} parent=0 // pred_fallthru
    _

// kernel: squeeze.1
$region0: #{squeeze.1}
  %s0 = inlined_call_operand.vmem [shape: f32[1024], index: 0, kind: input, shape index: {}]
  %s1 = inlined_call_operand.vmem [shape: f32[64,16], index: 1, kind: output, shape index: {}]
  %v2 = vld [vmem:[%s0] sm:$0xff]
  %vm3 = vcmask 130048
  %4 = vst.msk [vmem:[%s1] ss:$8 sm:$0xf] %vm3, %v2
  %5 = vst.msk [vmem:[%s1] ss:$8 sm:$0xf0] %vm3, %v2
  %v6 = vld [vmem:[%s0] sm:$0xff]
  %7 = vrot.lane.b32.xlu0 %v6, 112
  %v8 = vpop.permute.xlu0 %7
  %vm9 = vcmask 130048
  %s10 = scalar_lea.vmem %s1, 1
  %11 = vst.msk [vmem:[%s10] ss:$8 sm:$0xf] %vm9, %v8
  %s12 = scalar_lea.vmem %s1, 1
  %13 = vst.msk [vmem:[%s12] ss:$8 sm:$0xf0] %vm9, %v8
  %v14 = vld [vmem:[%s0] sm:$0xff]
  %15 = vrot.lane.b32.xlu0 %v14, 96
  %v16 = vpop.permute.xlu0 %15
  %vm17 = vcmask 130048
  %s18 = scalar_lea.vmem %s1, 2
  %19 = vst.msk [vmem:[%s18] ss:$8 sm:$0xf] %vm17, %v16
  %s20 = scalar_lea.vmem %s1, 2
  %21 = vst.msk [vmem:[%s20] ss:$8 sm:$0xf0] %vm17, %v16
  %v22 = vld [vmem:[%s0] sm:$0xff]
  %23 = vrot.lane.b32.xlu0 %v22, 80
  %v24 = vpop.permute.xlu0 %23
  %vm25 = vcmask 130048
  %s26 = scalar_lea.vmem %s1, 3
  %27 = vst.msk [vmem:[%s26] ss:$8 sm:$0xf] %vm25, %v24
  %s28 = scalar_lea.vmem %s1, 3
  %29 = vst.msk [vmem:[%s28] ss:$8 sm:$0xf0] %vm25, %v24
  %v30 = vld [vmem:[%s0] sm:$0xff]
  %31 = vrot.lane.b32.xlu0 %v30, 64
  %v32 = vpop.permute.xlu0 %31
  %vm33 = vcmask 130048
  %s34 = scalar_lea.vmem %s1, 4
  %35 = vst.msk [vmem:[%s34] ss:$8 sm:$0xf] %vm33, %v32
  %s36 = scalar_lea.vmem %s1, 4
  %37 = vst.msk [vmem:[%s36] ss:$8 sm:$0xf0] %vm33, %v32
  %v38 = vld [vmem:[%s0] sm:$0xff]
  %39 = vrot.lane.b32.xlu0 %v38, 48
  %v40 = vpop.permute.xlu0 %39
  %vm41 = vcmask 130048
  %s42 = scalar_lea.vmem %s1, 5
  %43 = vst.msk [vmem:[%s42] ss:$8 sm:$0xf] %vm41, %v40
  %s44 = scalar_lea.vmem %s1, 5
  %45 = vst.msk [vmem:[%s44] ss:$8 sm:$0xf0] %vm41, %v40
  %v46 = vld [vmem:[%s0] sm:$0xff]
  %47 = vrot.lane.b32.xlu0 %v46, 32
  %v48 = vpop.permute.xlu0 %47
  %vm49 = vcmask 130048
  %s50 = scalar_lea.vmem %s1, 6
  %51 = vst.msk [vmem:[%s50] ss:$8 sm:$0xf] %vm49, %v48
  %s52 = scalar_lea.vmem %s1, 6
  %53 = vst.msk [vmem:[%s52] ss:$8 sm:$0xf0] %vm49, %v48
  %v54 = vld [vmem:[%s0] sm:$0xff]
  %55 = vrot.lane.b32.xlu0 %v54, 16
  %v56 = vpop.permute.xlu0 %55
  %vm57 = vcmask 130048
  %s58 = scalar_lea.vmem %s1, 7
  %59 = vst.msk [vmem:[%s58] ss:$8 sm:$0xf] %vm57, %v56
  %s60 = scalar_lea.vmem %s1, 7
  %61 = vst.msk [vmem:[%s60] ss:$8 sm:$0xf0] %vm57, %v56

// kernel: discriminator_forward.5
$region0: #{discriminator_forward.5}
  #allocation0 [shape = 'u32[]', space=smem, size = 0x4, offset = 0x4, fixed_abs, tag = 'smem constant byte address 0x4 - core index']
  #allocation1 [shape = 'u32[144,128]{1,0:T(1,128)}', space=vmem, size = 0x12000, scoped, tag = 'internal scratch']
  %s0 = inlined_call_operand.vmem [shape: bf16[256,128], index: 0, kind: input, shape index: {}]
  %s1 = inlined_call_operand.vmem [shape: bf16[32,256], index: 1, kind: input, shape index: {}]
  %s2 = inlined_call_operand.vmem [shape: f32[32,1], index: 2, kind: input, shape index: {}]
  %s3 = inlined_call_operand.vmem [shape: f32[32,1], index: 3, kind: input, shape index: {}]
  %s4 = inlined_call_operand.vmem [shape: bf16[16,128,32], index: 4, kind: input, shape index: {}]
  %s5 = inlined_call_operand.vmem [shape: bf16[16,64,32], index: 5, kind: input, shape index: {}]
  %s6 = inlined_call_operand.vmem [shape: f32[64,1], index: 6, kind: input, shape index: {}]
  %s7 = inlined_call_operand.vmem [shape: f32[64,1], index: 7, kind: input, shape index: {}]
  %s8 = inlined_call_operand.vmem [shape: f32[64,16], index: 8, kind: input, shape index: {}]
  %s9 = inlined_call_operand.vmem [shape: f32[1,16], index: 9, kind: input, shape index: {}]
  %s10 = inlined_call_operand.vmem [shape: f32[16,2], index: 10, kind: input, shape index: {}]
  %s11 = inlined_call_operand.hbm [shape: f32[1,2], index: 11, kind: output, shape index: {}]
  %s12 = sld [smem:[#allocation0]]
  $region54: #{discriminator_forward.5} parent=0
    _
  %s14 = ssub.s32 1, %s12
  %s15 = scalar_select 0, %s14, %s12
  $region1: #{discriminator_forward.5} parent=0
    #allocation2 [shape = 'u8[512]{0}', space=vmem, size = 0x400, scoped, tag = 'output window, operand 0, single buffered']
    #allocation3 [shape = 's32[1]{0}', space=sflag, size = 0x4, scoped, tag = 'scoped memory for discriminator_forward.5']
    %16 = vsyncpa [#allocation3], 0
    // Predicated region
    $region2: #{discriminator_forward.5} parent=1 // pred_check
      _
    $region3: #{discriminator_forward.5} parent=1 // pred_check_branch
      %18 = sbr.rel (0) target = $region5
    $region4: #{discriminator_forward.5} parent=1 // pred_region
      _
    $region5: #{discriminator_forward.5} parent=1 // pred_fallthru
      _
    // Predicated region
    $region6: #{discriminator_forward.5} parent=1 // pred_check
      _
    $region7: #{discriminator_forward.5} parent=1 // pred_check_branch
      %20 = sbr.rel (0) target = $region9
    $region8: #{discriminator_forward.5} parent=1 // pred_region
      _
    $region9: #{discriminator_forward.5} parent=1 // pred_fallthru
      _
    // Predicated region
    $region10: #{discriminator_forward.5} parent=1 // pred_check
      _
    $region11: #{discriminator_forward.5} parent=1 // pred_check_branch
      %22 = sbr.rel (0) target = $region13
    $region12: #{discriminator_forward.5} parent=1 // pred_region
      _
    $region13: #{discriminator_forward.5} parent=1 // pred_fallthru
      _
    // Predicated region
    $region14: #{discriminator_forward.5} parent=1 // pred_check
      _
    $region15: #{discriminator_forward.5} parent=1 // pred_check_branch
      %24 = sbr.rel (0) target = $region17
    $region16: #{discriminator_forward.5} parent=1 // pred_region
      _
    $region17: #{discriminator_forward.5} parent=1 // pred_fallthru
      _
    // Predicated region
    $region18: #{discriminator_forward.5} parent=1 // pred_check
      _
    $region19: #{discriminator_forward.5} parent=1 // pred_check_branch
      %26 = sbr.rel (0) target = $region21
    $region20: #{discriminator_forward.5} parent=1 // pred_region
      _
    $region21: #{discriminator_forward.5} parent=1 // pred_fallthru
      _
    // Predicated region
    $region22: #{discriminator_forward.5} parent=1 // pred_check
      _
    $region23: #{discriminator_forward.5} parent=1 // pred_check_branch
      %28 = sbr.rel (0) target = $region25
    $region24: #{discriminator_forward.5} parent=1 // pred_region
      _
    $region25: #{discriminator_forward.5} parent=1 // pred_fallthru
      _
    // Predicated region
    $region26: #{discriminator_forward.5} parent=1 // pred_check
      _
    $region27: #{discriminator_forward.5} parent=1 // pred_check_branch
      %30 = sbr.rel (0) target = $region29
    $region28: #{discriminator_forward.5} parent=1 // pred_region
      _
    $region29: #{discriminator_forward.5} parent=1 // pred_fallthru
      _
    // Predicated region
    $region30: #{discriminator_forward.5} parent=1 // pred_check
      _
    $region31: #{discriminator_forward.5} parent=1 // pred_check_branch
      %32 = sbr.rel (0) target = $region33
    $region32: #{discriminator_forward.5} parent=1 // pred_region
      _
    $region33: #{discriminator_forward.5} parent=1 // pred_fallthru
      _
    // Predicated region
    $region34: #{discriminator_forward.5} parent=1 // pred_check
      _
    $region35: #{discriminator_forward.5} parent=1 // pred_check_branch
      %34 = sbr.rel (0) target = $region37
    $region36: #{discriminator_forward.5} parent=1 // pred_region
      _
    $region37: #{discriminator_forward.5} parent=1 // pred_fallthru
      _
    // Predicated region
    $region38: #{discriminator_forward.5} parent=1 // pred_check
      _
    $region39: #{discriminator_forward.5} parent=1 // pred_check_branch
      %36 = sbr.rel (0) target = $region41
    $region40: #{discriminator_forward.5} parent=1 // pred_region
      _
    $region41: #{discriminator_forward.5} parent=1 // pred_fallthru
      _
    // Predicated region
    $region42: #{discriminator_forward.5} parent=1 // pred_check
      _
    $region43: #{discriminator_forward.5} parent=1 // pred_check_branch
      %38 = sbr.rel (0) target = $region45
    $region44: #{discriminator_forward.5} parent=1 // pred_region
      _
    $region45: #{discriminator_forward.5} parent=1 // pred_fallthru
      _
    %v40 = vld [vmem:[%s1] sm:$0xff]
    %v41 = vld [vmem:[%s1 + $0x8] sm:$0xff]
    %v42 = vld [vmem:[%s1 + $0x10] sm:$0xff]
    %v43 = vld [vmem:[%s1 + $0x18] sm:$0xff]
    %v44 = vld [vmem:[%s0] sm:$0xf]
    %v45 = vld [vmem:[%s0 + $0x4] sm:$0xf]
    %v46 = vld [vmem:[%s0 + $0x8] sm:$0xf]
    %v47 = vld [vmem:[%s0 + $0xc] sm:$0xf]
    %v48 = vld [vmem:[%s0 + $0x10] sm:$0xf]
    %v49 = vld [vmem:[%s0 + $0x14] sm:$0xf]
    %v50 = vld [vmem:[%s0 + $0x18] sm:$0xf]
    %v51 = vld [vmem:[%s0 + $0x1c] sm:$0xf]
    %v52 = vld [vmem:[%s0 + $0x20] sm:$0xf]
    %v53 = vld [vmem:[%s0 + $0x24] sm:$0xf]
    %v54 = vld [vmem:[%s0 + $0x28] sm:$0xf]
    %v55 = vld [vmem:[%s0 + $0x2c] sm:$0xf]
    %v56 = vld [vmem:[%s0 + $0x30] sm:$0xf]
    %v57 = vld [vmem:[%s0 + $0x34] sm:$0xf]
    %v58 = vld [vmem:[%s0 + $0x38] sm:$0xf]
    %v59 = vld [vmem:[%s0 + $0x3c] sm:$0xf]
    %v60 = vld [vmem:[%s0 + $0x40] sm:$0xf]
    %v61 = vld [vmem:[%s0 + $0x44] sm:$0xf]
    %v62 = vld [vmem:[%s0 + $0x48] sm:$0xf]
    %v63 = vld [vmem:[%s0 + $0x4c] sm:$0xf]
    %v64 = vld [vmem:[%s0 + $0x50] sm:$0xf]
    %v65 = vld [vmem:[%s0 + $0x54] sm:$0xf]
    %v66 = vld [vmem:[%s0 + $0x58] sm:$0xf]
    %v67 = vld [vmem:[%s0 + $0x5c] sm:$0xf]
    %v68 = vld [vmem:[%s0 + $0x60] sm:$0xf]
    %v69 = vld [vmem:[%s0 + $0x64] sm:$0xf]
    %v70 = vld [vmem:[%s0 + $0x68] sm:$0xf]
    %v71 = vld [vmem:[%s0 + $0x6c] sm:$0xf]
    %v72 = vld [vmem:[%s0 + $0x70] sm:$0xf]
    %v73 = vld [vmem:[%s0 + $0x74] sm:$0xf]
    %v74 = vld [vmem:[%s0 + $0x78] sm:$0xf]
    %v75 = vld [vmem:[%s0 + $0x7c] sm:$0xf]
    %v80 = vunpack.c.l.b16 %v40
    %v81 = vunpack.c.h.b16 %v40
    %v82 = vunpack.c.l.b16 %v41
    %v83 = vunpack.c.h.b16 %v41
    %v84 = vunpack.c.l.b16 %v42
    %v85 = vunpack.c.h.b16 %v42
    %v86 = vunpack.c.l.b16 %v43
    %v87 = vunpack.c.h.b16 %v43
    %v88 = vpack.c.b16 %v82, %v80
    %v89 = vpack.c.b16 %v83, %v81
    %v90 = vpack.c.b16 %v86, %v84
    %v91 = vpack.c.b16 %v87, %v85
    %v128 = vunpack.c.l.b16 %v44
    %v129 = vunpack.c.l.b16 %v45
    %v130 = vunpack.c.l.b16 %v46
    %v131 = vunpack.c.l.b16 %v47
    %v132 = vunpack.c.l.b16 %v48
    %v133 = vunpack.c.l.b16 %v49
    %v134 = vunpack.c.l.b16 %v50
    %v135 = vunpack.c.l.b16 %v51
    %v136 = vunpack.c.l.b16 %v52
    %v137 = vunpack.c.l.b16 %v53
    %v138 = vunpack.c.l.b16 %v54
    %v139 = vunpack.c.l.b16 %v55
    %v140 = vunpack.c.l.b16 %v56
    %v141 = vunpack.c.l.b16 %v57
    %v142 = vunpack.c.l.b16 %v58
    %v143 = vunpack.c.l.b16 %v59
    %v144 = vunpack.c.l.b16 %v60
    %v145 = vunpack.c.l.b16 %v61
    %v146 = vunpack.c.l.b16 %v62
    %v147 = vunpack.c.l.b16 %v63
    %v148 = vunpack.c.l.b16 %v64
    %v149 = vunpack.c.l.b16 %v65
    %v150 = vunpack.c.l.b16 %v66
    %v151 = vunpack.c.l.b16 %v67
    %v152 = vunpack.c.l.b16 %v68
    %v153 = vunpack.c.l.b16 %v69
    %v154 = vunpack.c.l.b16 %v70
    %v155 = vunpack.c.l.b16 %v71
    %v156 = vunpack.c.l.b16 %v72
    %v157 = vunpack.c.l.b16 %v73
    %v158 = vunpack.c.l.b16 %v74
    %v159 = vunpack.c.l.b16 %v75
    %v160 = vpack.c.b16 %v129, %v128
    %v161 = vpack.c.b16 %v131, %v130
    %v162 = vpack.c.b16 %v133, %v132
    %v163 = vpack.c.b16 %v135, %v134
    %v164 = vpack.c.b16 %v137, %v136
    %v165 = vpack.c.b16 %v139, %v138
    %v166 = vpack.c.b16 %v141, %v140
    %v167 = vpack.c.b16 %v143, %v142
    %v168 = vpack.c.b16 %v145, %v144
    %v169 = vpack.c.b16 %v147, %v146
    %v170 = vpack.c.b16 %v149, %v148
    %v171 = vpack.c.b16 %v151, %v150
    %v172 = vpack.c.b16 %v153, %v152
    %v173 = vpack.c.b16 %v155, %v154
    %v174 = vpack.c.b16 %v157, %v156
    %v175 = vpack.c.b16 %v159, %v158
    %192 = vmatprep.subr.bf16.mxu0 0
    %193 = vmatpush1.bf16.msra.mxu0 %v160
    %194 = vmatprep.subr.bf16.mxu0 0
    %195 = vmatpush1.bf16.msra.mxu0 %v161
    %196 = vmatprep.subr.bf16.mxu0 0
    %197 = vmatpush1.bf16.msra.mxu0 %v162
    %198 = vmatprep.subr.bf16.mxu0 0
    %199 = vmatpush1.bf16.msra.mxu0 %v163
    %200 = vmatprep.subr.bf16.mxu0 0
    %201 = vmatpush1.bf16.msra.mxu0 %v164
    %202 = vmatprep.subr.bf16.mxu0 0
    %203 = vmatpush1.bf16.msra.mxu0 %v165
    %204 = vmatprep.subr.bf16.mxu0 0
    %205 = vmatpush1.bf16.msra.mxu0 %v166
    %206 = vmatprep.subr.bf16.mxu0 0
    %207 = vmatpush1.bf16.msra.mxu0 %v167
    %208 = vmatprep.subr.bf16.mxu0 0
    %209 = vmatpush1.bf16.msra.mxu0 %v168
    %210 = vmatprep.subr.bf16.mxu0 0
    %211 = vmatpush1.bf16.msra.mxu0 %v169
    %212 = vmatprep.subr.bf16.mxu0 0
    %213 = vmatpush1.bf16.msra.mxu0 %v170
    %214 = vmatprep.subr.bf16.mxu0 0
    %215 = vmatpush1.bf16.msra.mxu0 %v171
    %216 = vmatprep.subr.bf16.mxu0 0
    %217 = vmatpush1.bf16.msra.mxu0 %v172
    %218 = vmatprep.subr.bf16.mxu0 0
    %219 = vmatpush1.bf16.msra.mxu0 %v173
    %220 = vmatprep.subr.bf16.mxu0 0
    %221 = vmatpush1.bf16.msra.mxu0 %v174
    %222 = vmatprep.subr.bf16.mxu0 0
    %223 = vmatpush1.bf16.msra.mxu0 %v175
    %224 = vmatprep.mubr.bf16.mxu0 %v89
    %225 = vmatmul.mubr.bf16.gmra.mrb[0].mxu0 %v88
    %v226 = vpop.f32.mrb[0].mxu0
    %v227 = vadd.f32 0.0, %v226
    %v228 = vpop.f32.mrb[0].mxu0
    %v229 = vpop.f32.mrb[0].mxu0
    %v230 = vadd.f32 0.0, %v229
    %v231 = vpop.f32.mrb[0].mxu0
    %232 = vmatprep.mubr.bf16.mxu0 %v91
    %233 = vmatmul.mubr.bf16.gmra.mrb[0].mxu0 %v90
    %v234 = vpop.f32.mrb[0].mxu0
    %v235 = vadd.f32 0.0, %v234
    %v236 = vpop.f32.mrb[0].mxu0
    %v237 = vpop.f32.mrb[0].mxu0
    %v238 = vadd.f32 0.0, %v237
    %v239 = vpop.f32.mrb[0].mxu0
    %240 = vdwg.mxu0
    %241 = vadd.xlane.f32.xlu0 %v227
    %v242 = vpop.xlane.xlu0 %241
    %243 = vadd.xlane.f32.xlu0 %v230
    %v244 = vpop.xlane.xlu0 %243
    %245 = vadd.xlane.f32.xlu0 %v235
    %v246 = vpop.xlane.xlu0 %245
    %247 = vadd.xlane.f32.xlu0 %v238
    %v248 = vpop.xlane.xlu0 %247
    %v249 = vrcp.pop 128.0
    %v250 = vmul.f32 %v242, %v249
    %v251 = vmul.f32 %v244, %v249
    %v252 = vmul.f32 %v246, %v249
    %v253 = vmul.f32 %v248, %v249
    %v254 = vsub.f32 %v227, %v250
    %v255 = vsub.f32 %v230, %v251
    %v256 = vsub.f32 %v235, %v252
    %v257 = vsub.f32 %v238, %v253
    %v258 = vmul.f32 %v254, %v254
    %v259 = vmul.f32 %v255, %v255
    %v260 = vmul.f32 %v256, %v256
    %v261 = vmul.f32 %v257, %v257
    %262 = vadd.xlane.f32.xlu0 %v258
    %v263 = vpop.xlane.xlu0 %262
    %264 = vadd.xlane.f32.xlu0 %v259
    %v265 = vpop.xlane.xlu0 %264
    %266 = vadd.xlane.f32.xlu0 %v260
    %v267 = vpop.xlane.xlu0 %266
    %268 = vadd.xlane.f32.xlu0 %v261
    %v269 = vpop.xlane.xlu0 %268
    %v270 = vmul.f32 %v263, %v249
    %v271 = vmul.f32 %v265, %v249
    %v272 = vmul.f32 %v267, %v249
    %v273 = vmul.f32 %v269, %v249
    %v274 = vadd.f32 %v270, 1e-05
    %v275 = vadd.f32 %v271, 1e-05
    %v276 = vadd.f32 %v272, 1e-05
    %v277 = vadd.f32 %v273, 1e-05
    %v278 = vrsqrt.pop %v274
    %v279 = vrsqrt.pop %v275
    %v280 = vrsqrt.pop %v276
    %v281 = vrsqrt.pop %v277
    %v282 = vmul.f32 %v254, %v278
    %v283 = vmul.f32 %v255, %v279
    %v284 = vmul.f32 %v256, %v280
    %v285 = vmul.f32 %v257, %v281
    %v286 = vld [vmem:[%s2] sm:$0xff]
    %v287 = vld [vmem:[%s2 + $0x8] sm:$0xff]
    %v288 = vld [vmem:[%s2 + $0x10] sm:$0xff]
    %v289 = vld [vmem:[%s2 + $0x18] sm:$0xff]
    %291 = vset.pattern.permute.xlu0 0
    %292 = vperm.xlu0 %291, %v286
    %v293 = vpop.permute.xlu0 %292
    %296 = vset.pattern.permute.xlu0 0
    %297 = vperm.xlu0 %296, %v287
    %v298 = vpop.permute.xlu0 %297
    %301 = vset.pattern.permute.xlu0 0
    %302 = vperm.xlu0 %301, %v288
    %v303 = vpop.permute.xlu0 %302
    %306 = vset.pattern.permute.xlu0 0
    %307 = vperm.xlu0 %306, %v289
    %v308 = vpop.permute.xlu0 %307
    %v310 = vmul.f32 %v282, %v293
    %v311 = vmul.f32 %v283, %v298
    %v312 = vmul.f32 %v284, %v303
    %v313 = vmul.f32 %v285, %v308
    %v314 = vld [vmem:[%s3] sm:$0xff]
    %v315 = vld [vmem:[%s3 + $0x8] sm:$0xff]
    %v316 = vld [vmem:[%s3 + $0x10] sm:$0xff]
    %v317 = vld [vmem:[%s3 + $0x18] sm:$0xff]
    %319 = vset.pattern.permute.xlu0 0
    %320 = vperm.xlu0 %319, %v314
    %v321 = vpop.permute.xlu0 %320
    %324 = vset.pattern.permute.xlu0 0
    %325 = vperm.xlu0 %324, %v315
    %v326 = vpop.permute.xlu0 %325
    %329 = vset.pattern.permute.xlu0 0
    %330 = vperm.xlu0 %329, %v316
    %v331 = vpop.permute.xlu0 %330
    %334 = vset.pattern.permute.xlu0 0
    %335 = vperm.xlu0 %334, %v317
    %v336 = vpop.permute.xlu0 %335
    %v338 = vadd.f32 %v310, %v321
    %v339 = vadd.f32 %v311, %v326
    %v340 = vadd.f32 %v312, %v331
    %v341 = vadd.f32 %v313, %v336
    %vm342 = vcmp.gt.f32.partialorder %v338, 0.0
    %vm343 = vcmp.gt.f32.partialorder %v339, 0.0
    %vm344 = vcmp.gt.f32.partialorder %v340, 0.0
    %vm345 = vcmp.gt.f32.partialorder %v341, 0.0
    %v346 = vmul.f32 %v338, 0.2
    %v347 = vmul.f32 %v339, 0.2
    %v348 = vmul.f32 %v340, 0.2
    %v349 = vmul.f32 %v341, 0.2
    %v350 = vsel %vm342, %v338, %v346
    %v351 = vsel %vm343, %v339, %v347
    %v352 = vsel %vm344, %v340, %v348
    %v353 = vsel %vm345, %v341, %v349
    %v354 = vpack.c.bf16 %v351, %v350
    %v355 = vpack.c.bf16 %v353, %v352
    %v356 = vld [vmem:[%s4] sm:$0xf]
    %v357 = vld [vmem:[%s4 + $0x4] sm:$0xf]
    %v358 = vld [vmem:[%s4 + $0x8] sm:$0xf]
    %v359 = vld [vmem:[%s4 + $0xc] sm:$0xf]
    %v360 = vld [vmem:[%s4 + $0x10] sm:$0xf]
    %v361 = vld [vmem:[%s4 + $0x14] sm:$0xf]
    %v362 = vld [vmem:[%s4 + $0x18] sm:$0xf]
    %v363 = vld [vmem:[%s4 + $0x1c] sm:$0xf]
    %v364 = vld [vmem:[%s4 + $0x20] sm:$0xf]
    %v365 = vld [vmem:[%s4 + $0x24] sm:$0xf]
    %v366 = vld [vmem:[%s4 + $0x28] sm:$0xf]
    %v367 = vld [vmem:[%s4 + $0x2c] sm:$0xf]
    %v368 = vld [vmem:[%s4 + $0x30] sm:$0xf]
    %v369 = vld [vmem:[%s4 + $0x34] sm:$0xf]
    %v370 = vld [vmem:[%s4 + $0x38] sm:$0xf]
    %v371 = vld [vmem:[%s4 + $0x3c] sm:$0xf]
    %v388 = vunpack.c.l.b16 %v356
    %v389 = vunpack.c.l.b16 %v357
    %v390 = vunpack.c.l.b16 %v358
    %v391 = vunpack.c.l.b16 %v359
    %v392 = vunpack.c.l.b16 %v360
    %v393 = vunpack.c.l.b16 %v361
    %v394 = vunpack.c.l.b16 %v362
    %v395 = vunpack.c.l.b16 %v363
    %v396 = vunpack.c.l.b16 %v364
    %v397 = vunpack.c.l.b16 %v365
    %v398 = vunpack.c.l.b16 %v366
    %v399 = vunpack.c.l.b16 %v367
    %v400 = vunpack.c.l.b16 %v368
    %v401 = vunpack.c.l.b16 %v369
    %v402 = vunpack.c.l.b16 %v370
    %v403 = vunpack.c.l.b16 %v371
    %v404 = vpack.c.b16 %v389, %v388
    %v405 = vpack.c.b16 %v391, %v390
    %v406 = vpack.c.b16 %v393, %v392
    %v407 = vpack.c.b16 %v395, %v394
    %v408 = vpack.c.b16 %v397, %v396
    %v409 = vpack.c.b16 %v399, %v398
    %v410 = vpack.c.b16 %v401, %v400
    %v411 = vpack.c.b16 %v403, %v402
    %420 = vmatprep.subr.bf16.mxu0 0
    %421 = vmatpush1.bf16.msra.mxu0 %v404
    %422 = vmatprep.subr.bf16.mxu0 0
    %423 = vmatpush1.bf16.msra.mxu0 %v405
    %424 = vmatprep.subr.bf16.mxu0 0
    %425 = vmatpush1.bf16.msra.mxu0 %v406
    %426 = vmatprep.subr.bf16.mxu0 0
    %427 = vmatpush1.bf16.msra.mxu0 %v407
    %428 = vmatprep.subr.bf16.mxu0 0
    %429 = vmatpush1.bf16.msra.mxu0 %v408
    %430 = vmatprep.subr.bf16.mxu0 0
    %431 = vmatpush1.bf16.msra.mxu0 %v409
    %432 = vmatprep.subr.bf16.mxu0 0
    %433 = vmatpush1.bf16.msra.mxu0 %v410
    %434 = vmatprep.subr.bf16.mxu0 0
    %435 = vmatpush1.bf16.msra.mxu0 %v411
    %436 = vmatprep.subr.bf16.mxu0 0
    %437 = vmatpush1.bf16.msra.mxu0 0
    %438 = vmatprep.subr.bf16.mxu0 0
    %439 = vmatpush1.bf16.msra.mxu0 0
    %440 = vmatprep.subr.bf16.mxu0 0
    %441 = vmatpush1.bf16.msra.mxu0 0
    %442 = vmatprep.subr.bf16.mxu0 0
    %443 = vmatpush1.bf16.msra.mxu0 0
    %444 = vmatprep.subr.bf16.mxu0 0
    %445 = vmatpush1.bf16.msra.mxu0 0
    %446 = vmatprep.subr.bf16.mxu0 0
    %447 = vmatpush1.bf16.msra.mxu0 0
    %448 = vmatprep.subr.bf16.mxu0 0
    %449 = vmatpush1.bf16.msra.mxu0 0
    %450 = vmatprep.subr.bf16.mxu0 0
    %451 = vmatpush1.bf16.msra.mxu0 0
    %452 = vmatprep.mubr.bf16.mxu0 0
    %453 = vmatmul.mubr.bf16.gmra.mrb[0].mxu0 %v354
    %v454 = vpop.f32.mrb[0].mxu0
    %v455 = vadd.f32 0.0, %v454
    %v456 = vpop.f32.mrb[0].mxu0
    %v457 = vpop.f32.mrb[0].mxu0
    %v458 = vadd.f32 0.0, %v457
    %v459 = vpop.f32.mrb[0].mxu0
    %460 = vmatprep.mubr.bf16.mxu0 0
    %461 = vmatmul.mubr.bf16.gmra.mrb[0].mxu0 %v355
    %v462 = vpop.f32.mrb[0].mxu0
    %v463 = vadd.f32 0.0, %v462
    %v464 = vpop.f32.mrb[0].mxu0
    %v465 = vpop.f32.mrb[0].mxu0
    %v466 = vadd.f32 0.0, %v465
    %v467 = vpop.f32.mrb[0].mxu0
    %468 = vdwg.mxu0
    %v469 = vld [vmem:[%s5] sm:$0xf]
    %v470 = vld [vmem:[%s5 + $0x4] sm:$0xf]
    %v471 = vld [vmem:[%s5 + $0x8] sm:$0xf]
    %v472 = vld [vmem:[%s5 + $0xc] sm:$0xf]
    %v473 = vld [vmem:[%s5 + $0x10] sm:$0xf]
    %v474 = vld [vmem:[%s5 + $0x14] sm:$0xf]
    %v475 = vld [vmem:[%s5 + $0x18] sm:$0xf]
    %v476 = vld [vmem:[%s5 + $0x1c] sm:$0xf]
    %v477 = vpack.c.bf16 %v458, %v455
    %v478 = vpack.c.bf16 %v466, %v463
    %s479 = scalar_lea.vmem %s4, 64
    %v480 = vld [vmem:[%s479] sm:$0xf]
    %v481 = vld [vmem:[%s479 + $0x4] sm:$0xf]
    %v482 = vld [vmem:[%s479 + $0x8] sm:$0xf]
    %v483 = vld [vmem:[%s479 + $0xc] sm:$0xf]
    %v484 = vld [vmem:[%s479 + $0x10] sm:$0xf]
    %v485 = vld [vmem:[%s479 + $0x14] sm:$0xf]
    %v486 = vld [vmem:[%s479 + $0x18] sm:$0xf]
    %v487 = vld [vmem:[%s479 + $0x1c] sm:$0xf]
    %v488 = vld [vmem:[%s479 + $0x20] sm:$0xf]
    %v489 = vld [vmem:[%s479 + $0x24] sm:$0xf]
    %v490 = vld [vmem:[%s479 + $0x28] sm:$0xf]
    %v491 = vld [vmem:[%s479 + $0x2c] sm:$0xf]
    %v492 = vld [vmem:[%s479 + $0x30] sm:$0xf]
    %v493 = vld [vmem:[%s479 + $0x34] sm:$0xf]
    %v494 = vld [vmem:[%s479 + $0x38] sm:$0xf]
    %v495 = vld [vmem:[%s479 + $0x3c] sm:$0xf]
    %v512 = vunpack.c.l.b16 %v480
    %v513 = vunpack.c.l.b16 %v481
    %v514 = vunpack.c.l.b16 %v482
    %v515 = vunpack.c.l.b16 %v483
    %v516 = vunpack.c.l.b16 %v484
    %v517 = vunpack.c.l.b16 %v485
    %v518 = vunpack.c.l.b16 %v486
    %v519 = vunpack.c.l.b16 %v487
    %v520 = vunpack.c.l.b16 %v488
    %v521 = vunpack.c.l.b16 %v489
    %v522 = vunpack.c.l.b16 %v490
    %v523 = vunpack.c.l.b16 %v491
    %v524 = vunpack.c.l.b16 %v492
    %v525 = vunpack.c.l.b16 %v493
    %v526 = vunpack.c.l.b16 %v494
    %v527 = vunpack.c.l.b16 %v495
    %v528 = vpack.c.b16 %v513, %v512
    %v529 = vpack.c.b16 %v515, %v514
    %v530 = vpack.c.b16 %v517, %v516
    %v531 = vpack.c.b16 %v519, %v518
    %v532 = vpack.c.b16 %v521, %v520
    %v533 = vpack.c.b16 %v523, %v522
    %v534 = vpack.c.b16 %v525, %v524
    %v535 = vpack.c.b16 %v527, %v526
    %544 = vmatprep.subr.bf16.mxu0 0
    %545 = vmatpush1.bf16.msra.mxu0 %v528
    %546 = vmatprep.subr.bf16.mxu0 0
    %547 = vmatpush1.bf16.msra.mxu0 %v529
    %548 = vmatprep.subr.bf16.mxu0 0
    %549 = vmatpush1.bf16.msra.mxu0 %v530
    %550 = vmatprep.subr.bf16.mxu0 0
    %551 = vmatpush1.bf16.msra.mxu0 %v531
    %552 = vmatprep.subr.bf16.mxu0 0
    %553 = vmatpush1.bf16.msra.mxu0 %v532
    %554 = vmatprep.subr.bf16.mxu0 0
    %555 = vmatpush1.bf16.msra.mxu0 %v533
    %556 = vmatprep.subr.bf16.mxu0 0
    %557 = vmatpush1.bf16.msra.mxu0 %v534
    %558 = vmatprep.subr.bf16.mxu0 0
    %559 = vmatpush1.bf16.msra.mxu0 %v535
    %560 = vmatprep.subr.bf16.mxu0 0
    %561 = vmatpush1.bf16.msra.mxu0 0
    %562 = vmatprep.subr.bf16.mxu0 0
    %563 = vmatpush1.bf16.msra.mxu0 0
    %564 = vmatprep.subr.bf16.mxu0 0
    %565 = vmatpush1.bf16.msra.mxu0 0
    %566 = vmatprep.subr.bf16.mxu0 0
    %567 = vmatpush1.bf16.msra.mxu0 0
    %568 = vmatprep.subr.bf16.mxu0 0
    %569 = vmatpush1.bf16.msra.mxu0 0
    %570 = vmatprep.subr.bf16.mxu0 0
    %571 = vmatpush1.bf16.msra.mxu0 0
    %572 = vmatprep.subr.bf16.mxu0 0
    %573 = vmatpush1.bf16.msra.mxu0 0
    %574 = vmatprep.subr.bf16.mxu0 0
    %575 = vmatpush1.bf16.msra.mxu0 0
    %576 = vmatprep.mubr.bf16.mxu0 0
    %577 = vmatmul.mubr.bf16.gmra.mrb[0].mxu0 %v354
    %v578 = vpop.f32.mrb[0].mxu0
    %v579 = vadd.f32 0.0, %v578
    %v580 = vpop.f32.mrb[0].mxu0
    %v581 = vpop.f32.mrb[0].mxu0
    %v582 = vadd.f32 0.0, %v581
    %v583 = vpop.f32.mrb[0].mxu0
    %584 = vmatprep.mubr.bf16.mxu0 0
    %585 = vmatmul.mubr.bf16.gmra.mrb[0].mxu0 %v355
    %v586 = vpop.f32.mrb[0].mxu0
    %v587 = vadd.f32 0.0, %v586
    %v588 = vpop.f32.mrb[0].mxu0
    %v589 = vpop.f32.mrb[0].mxu0
    %v590 = vadd.f32 0.0, %v589
    %v591 = vpop.f32.mrb[0].mxu0
    %592 = vdwg.mxu0
    %s593 = scalar_lea.vmem %s5, 32
    %v594 = vld [vmem:[%s593] sm:$0xf]
    %v595 = vld [vmem:[%s593 + $0x4] sm:$0xf]
    %v596 = vld [vmem:[%s593 + $0x8] sm:$0xf]
    %v597 = vld [vmem:[%s593 + $0xc] sm:$0xf]
    %v598 = vld [vmem:[%s593 + $0x10] sm:$0xf]
    %v599 = vld [vmem:[%s593 + $0x14] sm:$0xf]
    %v600 = vld [vmem:[%s593 + $0x18] sm:$0xf]
    %v601 = vld [vmem:[%s593 + $0x1c] sm:$0xf]
    %v602 = vpack.c.bf16 %v582, %v579
    %v603 = vpack.c.bf16 %v590, %v587
    %v612 = vunpack.c.l.b16 %v594
    %v613 = vunpack.c.l.b16 %v595
    %v614 = vunpack.c.l.b16 %v596
    %v615 = vunpack.c.l.b16 %v597
    %v616 = vunpack.c.l.b16 %v598
    %v617 = vunpack.c.l.b16 %v599
    %v618 = vunpack.c.l.b16 %v600
    %v619 = vunpack.c.l.b16 %v601
    %v620 = vpack.c.b16 %v613, %v612
    %v621 = vpack.c.b16 %v615, %v614
    %v622 = vpack.c.b16 %v617, %v616
    %v623 = vpack.c.b16 %v619, %v618
    %vm624 = vcmask 261120
    %v626 = vsel %vm624, %v620, 0
    %v629 = vsel %vm624, %v621, 0
    %v632 = vsel %vm624, %v622, 0
    %v635 = vsel %vm624, %v623, 0
    %637 = vmatprep.subr.bf16.mxu0 0
    %638 = vmatpush1.bf16.msra.mxu0 %v602
    %639 = vmatprep.subr.bf16.mxu0 0
    %640 = vmatpush1.bf16.msra.mxu0 %v603
    %641 = vmatprep.subr.bf16.mxu0 0
    %642 = vmatpush1.bf16.msra.mxu0 0
    %643 = vmatprep.subr.bf16.mxu0 0
    %644 = vmatpush1.bf16.msra.mxu0 0
    %645 = vmatprep.subr.bf16.mxu0 0
    %646 = vmatpush1.bf16.msra.mxu0 0
    %647 = vmatprep.subr.bf16.mxu0 0
    %648 = vmatpush1.bf16.msra.mxu0 0
    %649 = vmatprep.subr.bf16.mxu0 0
    %650 = vmatpush1.bf16.msra.mxu0 0
    %651 = vmatprep.subr.bf16.mxu0 0
    %652 = vmatpush1.bf16.msra.mxu0 0
    %653 = vmatprep.subr.bf16.mxu0 0
    %654 = vmatpush1.bf16.msra.mxu0 0
    %655 = vmatprep.subr.bf16.mxu0 0
    %656 = vmatpush1.bf16.msra.mxu0 0
    %657 = vmatprep.subr.bf16.mxu0 0
    %658 = vmatpush1.bf16.msra.mxu0 0
    %659 = vmatprep.subr.bf16.mxu0 0
    %660 = vmatpush1.bf16.msra.mxu0 0
    %661 = vmatprep.subr.bf16.mxu0 0
    %662 = vmatpush1.bf16.msra.mxu0 0
    %663 = vmatprep.subr.bf16.mxu0 0
    %664 = vmatpush1.bf16.msra.mxu0 0
    %665 = vmatprep.subr.bf16.mxu0 0
    %666 = vmatpush1.bf16.msra.mxu0 0
    %667 = vmatprep.subr.bf16.mxu0 0
    %668 = vmatpush1.bf16.msra.mxu0 0
    %669 = vmatprep.mubr.bf16.mxu0 0
    %670 = vmatmul.mubr.bf16.gmra.mrb[0].mxu0 %v626
    %v671 = vpop.f32.mrb[0].mxu0
    %v672 = vadd.f32 0.0, %v671
    %v673 = vpop.f32.mrb[0].mxu0
    %v674 = vpop.f32.mrb[0].mxu0
    %v675 = vadd.f32 0.0, %v674
    %v676 = vpop.f32.mrb[0].mxu0
    %677 = vmatprep.mubr.bf16.mxu0 0
    %678 = vmatmul.mubr.bf16.gmra.mrb[0].mxu0 %v629
    %v679 = vpop.f32.mrb[0].mxu0
    %v680 = vadd.f32 0.0, %v679
    %v681 = vpop.f32.mrb[0].mxu0
    %v682 = vpop.f32.mrb[0].mxu0
    %v683 = vadd.f32 0.0, %v682
    %v684 = vpop.f32.mrb[0].mxu0
    %685 = vmatprep.mubr.bf16.mxu0 0
    %686 = vmatmul.mubr.bf16.gmra.mrb[0].mxu0 %v632
    %v687 = vpop.f32.mrb[0].mxu0
    %v688 = vadd.f32 0.0, %v687
    %v689 = vpop.f32.mrb[0].mxu0
    %v690 = vpop.f32.mrb[0].mxu0
    %v691 = vadd.f32 0.0, %v690
    %v692 = vpop.f32.mrb[0].mxu0
    %693 = vmatprep.mubr.bf16.mxu0 0
    %694 = vmatmul.mubr.bf16.gmra.mrb[0].mxu0 %v635
    %v695 = vpop.f32.mrb[0].mxu0
    %v696 = vadd.f32 0.0, %v695
    %v697 = vpop.f32.mrb[0].mxu0
    %v698 = vpop.f32.mrb[0].mxu0
    %v699 = vadd.f32 0.0, %v698
    %v700 = vpop.f32.mrb[0].mxu0
    %701 = vdwg.mxu0
    %v710 = vunpack.c.l.b16 %v469
    %v711 = vunpack.c.l.b16 %v470
    %v712 = vunpack.c.l.b16 %v471
    %v713 = vunpack.c.l.b16 %v472
    %v714 = vunpack.c.l.b16 %v473
    %v715 = vunpack.c.l.b16 %v474
    %v716 = vunpack.c.l.b16 %v475
    %v717 = vunpack.c.l.b16 %v476
    %v718 = vpack.c.b16 %v711, %v710
    %v719 = vpack.c.b16 %v713, %v712
    %v720 = vpack.c.b16 %v715, %v714
    %v721 = vpack.c.b16 %v717, %v716
    %v723 = vsel %vm624, %v718, 0
    %v726 = vsel %vm624, %v719, 0
    %v729 = vsel %vm624, %v720, 0
    %v732 = vsel %vm624, %v721, 0
    %734 = vmatprep.subr.bf16.mxu0 0
    %735 = vmatpush1.bf16.msra.mxu0 %v477
    %736 = vmatprep.subr.bf16.mxu0 0
    %737 = vmatpush1.bf16.msra.mxu0 %v478
    %738 = vmatprep.subr.bf16.mxu0 0
    %739 = vmatpush1.bf16.msra.mxu0 0
    %740 = vmatprep.subr.bf16.mxu0 0
    %741 = vmatpush1.bf16.msra.mxu0 0
    %742 = vmatprep.subr.bf16.mxu0 0
    %743 = vmatpush1.bf16.msra.mxu0 0
    %744 = vmatprep.subr.bf16.mxu0 0
    %745 = vmatpush1.bf16.msra.mxu0 0
    %746 = vmatprep.subr.bf16.mxu0 0
    %747 = vmatpush1.bf16.msra.mxu0 0
    %748 = vmatprep.subr.bf16.mxu0 0
    %749 = vmatpush1.bf16.msra.mxu0 0
    %750 = vmatprep.subr.bf16.mxu0 0
    %751 = vmatpush1.bf16.msra.mxu0 0
    %752 = vmatprep.subr.bf16.mxu0 0
    %753 = vmatpush1.bf16.msra.mxu0 0
    %754 = vmatprep.subr.bf16.mxu0 0
    %755 = vmatpush1.bf16.msra.mxu0 0
    %756 = vmatprep.subr.bf16.mxu0 0
    %757 = vmatpush1.bf16.msra.mxu0 0
    %758 = vmatprep.subr.bf16.mxu0 0
    %759 = vmatpush1.bf16.msra.mxu0 0
    %760 = vmatprep.subr.bf16.mxu0 0
    %761 = vmatpush1.bf16.msra.mxu0 0
    %762 = vmatprep.subr.bf16.mxu0 0
    %763 = vmatpush1.bf16.msra.mxu0 0
    %764 = vmatprep.subr.bf16.mxu0 0
    %765 = vmatpush1.bf16.msra.mxu0 0
    %766 = vmatprep.mubr.bf16.mxu0 0
    %767 = vmatmul.mubr.bf16.gmra.mrb[0].mxu0 %v723
    %v768 = vpop.f32.mrb[0].mxu0
    %v769 = vadd.f32 %v672, %v768
    %v770 = vpop.f32.mrb[0].mxu0
    %v771 = vpop.f32.mrb[0].mxu0
    %v772 = vadd.f32 %v675, %v771
    %v773 = vpop.f32.mrb[0].mxu0
    %774 = vmatprep.mubr.bf16.mxu0 0
    %775 = vmatmul.mubr.bf16.gmra.mrb[0].mxu0 %v726
    %v776 = vpop.f32.mrb[0].mxu0
    %v777 = vadd.f32 %v680, %v776
    %v778 = vpop.f32.mrb[0].mxu0
    %v779 = vpop.f32.mrb[0].mxu0
    %v780 = vadd.f32 %v683, %v779
    %v781 = vpop.f32.mrb[0].mxu0
    %782 = vmatprep.mubr.bf16.mxu0 0
    %783 = vmatmul.mubr.bf16.gmra.mrb[0].mxu0 %v729
    %v784 = vpop.f32.mrb[0].mxu0
    %v785 = vadd.f32 %v688, %v784
    %v786 = vpop.f32.mrb[0].mxu0
    %v787 = vpop.f32.mrb[0].mxu0
    %v788 = vadd.f32 %v691, %v787
    %v789 = vpop.f32.mrb[0].mxu0
    %790 = vmatprep.mubr.bf16.mxu0 0
    %791 = vmatmul.mubr.bf16.gmra.mrb[0].mxu0 %v732
    %v792 = vpop.f32.mrb[0].mxu0
    %v793 = vadd.f32 %v696, %v792
    %v794 = vpop.f32.mrb[0].mxu0
    %v795 = vpop.f32.mrb[0].mxu0
    %v796 = vadd.f32 %v699, %v795
    %v797 = vpop.f32.mrb[0].mxu0
    %798 = vdwg.mxu0
    %s799 = scalar_lea.vmem %s4, 128
    %v800 = vld [vmem:[%s799] sm:$0xf]
    %v801 = vld [vmem:[%s799 + $0x4] sm:$0xf]
    %v802 = vld [vmem:[%s799 + $0x8] sm:$0xf]
    %v803 = vld [vmem:[%s799 + $0xc] sm:$0xf]
    %v804 = vld [vmem:[%s799 + $0x10] sm:$0xf]
    %v805 = vld [vmem:[%s799 + $0x14] sm:$0xf]
    %v806 = vld [vmem:[%s799 + $0x18] sm:$0xf]
    %v807 = vld [vmem:[%s799 + $0x1c] sm:$0xf]
    %v808 = vld [vmem:[%s799 + $0x20] sm:$0xf]
    %v809 = vld [vmem:[%s799 + $0x24] sm:$0xf]
    %v810 = vld [vmem:[%s799 + $0x28] sm:$0xf]
    %v811 = vld [vmem:[%s799 + $0x2c] sm:$0xf]
    %v812 = vld [vmem:[%s799 + $0x30] sm:$0xf]
    %v813 = vld [vmem:[%s799 + $0x34] sm:$0xf]
    %v814 = vld [vmem:[%s799 + $0x38] sm:$0xf]
    %v815 = vld [vmem:[%s799 + $0x3c] sm:$0xf]
    %v832 = vunpack.c.l.b16 %v800
    %v833 = vunpack.c.l.b16 %v801
    %v834 = vunpack.c.l.b16 %v802
    %v835 = vunpack.c.l.b16 %v803
    %v836 = vunpack.c.l.b16 %v804
    %v837 = vunpack.c.l.b16 %v805
    %v838 = vunpack.c.l.b16 %v806
    %v839 = vunpack.c.l.b16 %v807
    %v840 = vunpack.c.l.b16 %v808
    %v841 = vunpack.c.l.b16 %v809
    %v842 = vunpack.c.l.b16 %v810
    %v843 = vunpack.c.l.b16 %v811
    %v844 = vunpack.c.l.b16 %v812
    %v845 = vunpack.c.l.b16 %v813
    %v846 = vunpack.c.l.b16 %v814
    %v847 = vunpack.c.l.b16 %v815
    %v848 = vpack.c.b16 %v833, %v832
    %v849 = vpack.c.b16 %v835, %v834
    %v850 = vpack.c.b16 %v837, %v836
    %v851 = vpack.c.b16 %v839, %v838
    %v852 = vpack.c.b16 %v841, %v840
    %v853 = vpack.c.b16 %v843, %v842
    %v854 = vpack.c.b16 %v845, %v844
    %v855 = vpack.c.b16 %v847, %v846
    %864 = vmatprep.subr.bf16.mxu0 0
    %865 = vmatpush1.bf16.msra.mxu0 %v848
    %866 = vmatprep.subr.bf16.mxu0 0
    %867 = vmatpush1.bf16.msra.mxu0 %v849
    %868 = vmatprep.subr.bf16.mxu0 0
    %869 = vmatpush1.bf16.msra.mxu0 %v850
    %870 = vmatprep.subr.bf16.mxu0 0
    %871 = vmatpush1.bf16.msra.mxu0 %v851
    %872 = vmatprep.subr.bf16.mxu0 0
    %873 = vmatpush1.bf16.msra.mxu0 %v852
    %874 = vmatprep.subr.bf16.mxu0 0
    %875 = vmatpush1.bf16.msra.mxu0 %v853
    %876 = vmatprep.subr.bf16.mxu0 0
    %877 = vmatpush1.bf16.msra.mxu0 %v854
    %878 = vmatprep.subr.bf16.mxu0 0
    %879 = vmatpush1.bf16.msra.mxu0 %v855
    %880 = vmatprep.subr.bf16.mxu0 0
    %881 = vmatpush1.bf16.msra.mxu0 0
    %882 = vmatprep.subr.bf16.mxu0 0
    %883 = vmatpush1.bf16.msra.mxu0 0
    %884 = vmatprep.subr.bf16.mxu0 0
    %885 = vmatpush1.bf16.msra.mxu0 0
    %886 = vmatprep.subr.bf16.mxu0 0
    %887 = vmatpush1.bf16.msra.mxu0 0
    %888 = vmatprep.subr.bf16.mxu0 0
    %889 = vmatpush1.bf16.msra.mxu0 0
    %890 = vmatprep.subr.bf16.mxu0 0
    %891 = vmatpush1.bf16.msra.mxu0 0
    %892 = vmatprep.subr.bf16.mxu0 0
    %893 = vmatpush1.bf16.msra.mxu0 0
    %894 = vmatprep.subr.bf16.mxu0 0
    %895 = vmatpush1.bf16.msra.mxu0 0
    %896 = vmatprep.mubr.bf16.mxu0 0
    %897 = vmatmul.mubr.bf16.gmra.mrb[0].mxu0 %v354
    %v898 = vpop.f32.mrb[0].mxu0
    %v899 = vadd.f32 0.0, %v898
    %v900 = vpop.f32.mrb[0].mxu0
    %v901 = vpop.f32.mrb[0].mxu0
    %v902 = vadd.f32 0.0, %v901
    %v903 = vpop.f32.mrb[0].mxu0
    %904 = vmatprep.mubr.bf16.mxu0 0
    %905 = vmatmul.mubr.bf16.gmra.mrb[0].mxu0 %v355
    %v906 = vpop.f32.mrb[0].mxu0
    %v907 = vadd.f32 0.0, %v906
    %v908 = vpop.f32.mrb[0].mxu0
    %v909 = vpop.f32.mrb[0].mxu0
    %v910 = vadd.f32 0.0, %v909
    %v911 = vpop.f32.mrb[0].mxu0
    %912 = vdwg.mxu0
    %s913 = scalar_lea.vmem %s5, 64
    %v914 = vld [vmem:[%s913] sm:$0xf]
    %v915 = vld [vmem:[%s913 + $0x4] sm:$0xf]
    %v916 = vld [vmem:[%s913 + $0x8] sm:$0xf]
    %v917 = vld [vmem:[%s913 + $0xc] sm:$0xf]
    %v918 = vld [vmem:[%s913 + $0x10] sm:$0xf]
    %v919 = vld [vmem:[%s913 + $0x14] sm:$0xf]
    %v920 = vld [vmem:[%s913 + $0x18] sm:$0xf]
    %v921 = vld [vmem:[%s913 + $0x1c] sm:$0xf]
    %v922 = vpack.c.bf16 %v902, %v899
    %v923 = vpack.c.bf16 %v910, %v907
    %v932 = vunpack.c.l.b16 %v914
    %v933 = vunpack.c.l.b16 %v915
    %v934 = vunpack.c.l.b16 %v916
    %v935 = vunpack.c.l.b16 %v917
    %v936 = vunpack.c.l.b16 %v918
    %v937 = vunpack.c.l.b16 %v919
    %v938 = vunpack.c.l.b16 %v920
    %v939 = vunpack.c.l.b16 %v921
    %v940 = vpack.c.b16 %v933, %v932
    %v941 = vpack.c.b16 %v935, %v934
    %v942 = vpack.c.b16 %v937, %v936
    %v943 = vpack.c.b16 %v939, %v938
    %v945 = vsel %vm624, %v940, 0
    %v948 = vsel %vm624, %v941, 0
    %v951 = vsel %vm624, %v942, 0
    %v954 = vsel %vm624, %v943, 0
    %956 = vmatprep.subr.bf16.mxu0 0
    %957 = vmatpush1.bf16.msra.mxu0 %v922
    %958 = vmatprep.subr.bf16.mxu0 0
    %959 = vmatpush1.bf16.msra.mxu0 %v923
    %960 = vmatprep.subr.bf16.mxu0 0
    %961 = vmatpush1.bf16.msra.mxu0 0
    %962 = vmatprep.subr.bf16.mxu0 0
    %963 = vmatpush1.bf16.msra.mxu0 0
    %964 = vmatprep.subr.bf16.mxu0 0
    %965 = vmatpush1.bf16.msra.mxu0 0
    %966 = vmatprep.subr.bf16.mxu0 0
    %967 = vmatpush1.bf16.msra.mxu0 0
    %968 = vmatprep.subr.bf16.mxu0 0
    %969 = vmatpush1.bf16.msra.mxu0 0
    %970 = vmatprep.subr.bf16.mxu0 0
    %971 = vmatpush1.bf16.msra.mxu0 0
    %972 = vmatprep.subr.bf16.mxu0 0
    %973 = vmatpush1.bf16.msra.mxu0 0
    %974 = vmatprep.subr.bf16.mxu0 0
    %975 = vmatpush1.bf16.msra.mxu0 0
    %976 = vmatprep.subr.bf16.mxu0 0
    %977 = vmatpush1.bf16.msra.mxu0 0
    %978 = vmatprep.subr.bf16.mxu0 0
    %979 = vmatpush1.bf16.msra.mxu0 0
    %980 = vmatprep.subr.bf16.mxu0 0
    %981 = vmatpush1.bf16.msra.mxu0 0
    %982 = vmatprep.subr.bf16.mxu0 0
    %983 = vmatpush1.bf16.msra.mxu0 0
    %984 = vmatprep.subr.bf16.mxu0 0
    %985 = vmatpush1.bf16.msra.mxu0 0
    %986 = vmatprep.subr.bf16.mxu0 0
    %987 = vmatpush1.bf16.msra.mxu0 0
    %988 = vmatprep.mubr.bf16.mxu0 0
    %989 = vmatmul.mubr.bf16.gmra.mrb[0].mxu0 %v945
    %v990 = vpop.f32.mrb[0].mxu0
    %v991 = vadd.f32 0.0, %v990
    %v992 = vpop.f32.mrb[0].mxu0
    %v993 = vpop.f32.mrb[0].mxu0
    %v994 = vadd.f32 0.0, %v993
    %v995 = vpop.f32.mrb[0].mxu0
    %996 = vmatprep.mubr.bf16.mxu0 0
    %997 = vmatmul.mubr.bf16.gmra.mrb[0].mxu0 %v948
    %v998 = vpop.f32.mrb[0].mxu0
    %v999 = vadd.f32 0.0, %v998
    %v1000 = vpop.f32.mrb[0].mxu0
    %v1001 = vpop.f32.mrb[0].mxu0
    %v1002 = vadd.f32 0.0, %v1001
    %v1003 = vpop.f32.mrb[0].mxu0
    %1004 = vmatprep.mubr.bf16.mxu0 0
    %1005 = vmatmul.mubr.bf16.gmra.mrb[0].mxu0 %v951
    %v1006 = vpop.f32.mrb[0].mxu0
    %v1007 = vadd.f32 0.0, %v1006
    %v1008 = vpop.f32.mrb[0].mxu0
    %v1009 = vpop.f32.mrb[0].mxu0
    %v1010 = vadd.f32 0.0, %v1009
    %v1011 = vpop.f32.mrb[0].mxu0
    %1012 = vmatprep.mubr.bf16.mxu0 0
    %1013 = vmatmul.mubr.bf16.gmra.mrb[0].mxu0 %v954
    %v1014 = vpop.f32.mrb[0].mxu0
    %v1015 = vadd.f32 0.0, %v1014
    %v1016 = vpop.f32.mrb[0].mxu0
    %v1017 = vpop.f32.mrb[0].mxu0
    %v1018 = vadd.f32 0.0, %v1017
    %v1019 = vpop.f32.mrb[0].mxu0
    %1020 = vdwg.mxu0
    %v1021 = vadd.f32 %v769, %v991
    %v1022 = vadd.f32 %v772, %v994
    %v1023 = vadd.f32 %v777, %v999
    %v1024 = vadd.f32 %v780, %v1002
    %v1025 = vadd.f32 %v785, %v1007
    %v1026 = vadd.f32 %v788, %v1010
    %v1027 = vadd.f32 %v793, %v1015
    %v1028 = vadd.f32 %v796, %v1018
    %s1029 = scalar_lea.vmem %s4, 192
    %v1030 = vld [vmem:[%s1029] sm:$0xf]
    %v1031 = vld [vmem:[%s1029 + $0x4] sm:$0xf]
    %v1032 = vld [vmem:[%s1029 + $0x8] sm:$0xf]
    %v1033 = vld [vmem:[%s1029 + $0xc] sm:$0xf]
    %v1034 = vld [vmem:[%s1029 + $0x10] sm:$0xf]
    %v1035 = vld [vmem:[%s1029 + $0x14] sm:$0xf]
    %v1036 = vld [vmem:[%s1029 + $0x18] sm:$0xf]
    %v1037 = vld [vmem:[%s1029 + $0x1c] sm:$0xf]
    %v1038 = vld [vmem:[%s1029 + $0x20] sm:$0xf]
    %v1039 = vld [vmem:[%s1029 + $0x24] sm:$0xf]
    %v1040 = vld [vmem:[%s1029 + $0x28] sm:$0xf]
    %v1041 = vld [vmem:[%s1029 + $0x2c] sm:$0xf]
    %v1042 = vld [vmem:[%s1029 + $0x30] sm:$0xf]
    %v1043 = vld [vmem:[%s1029 + $0x34] sm:$0xf]
    %v1044 = vld [vmem:[%s1029 + $0x38] sm:$0xf]
    %v1045 = vld [vmem:[%s1029 + $0x3c] sm:$0xf]
    %v1062 = vunpack.c.l.b16 %v1030
    %v1063 = vunpack.c.l.b16 %v1031
    %v1064 = vunpack.c.l.b16 %v1032
    %v1065 = vunpack.c.l.b16 %v1033
    %v1066 = vunpack.c.l.b16 %v1034
    %v1067 = vunpack.c.l.b16 %v1035
    %v1068 = vunpack.c.l.b16 %v1036
    %v1069 = vunpack.c.l.b16 %v1037
    %v1070 = vunpack.c.l.b16 %v1038
    %v1071 = vunpack.c.l.b16 %v1039
    %v1072 = vunpack.c.l.b16 %v1040
    %v1073 = vunpack.c.l.b16 %v1041
    %v1074 = vunpack.c.l.b16 %v1042
    %v1075 = vunpack.c.l.b16 %v1043
    %v1076 = vunpack.c.l.b16 %v1044
    %v1077 = vunpack.c.l.b16 %v1045
    %v1078 = vpack.c.b16 %v1063, %v1062
    %v1079 = vpack.c.b16 %v1065, %v1064
    %v1080 = vpack.c.b16 %v1067, %v1066
    %v1081 = vpack.c.b16 %v1069, %v1068
    %v1082 = vpack.c.b16 %v1071, %v1070
    %v1083 = vpack.c.b16 %v1073, %v1072
    %v1084 = vpack.c.b16 %v1075, %v1074
    %v1085 = vpack.c.b16 %v1077, %v1076
    %1094 = vmatprep.subr.bf16.mxu0 0
    %1095 = vmatpush1.bf16.msra.mxu0 %v1078
    %1096 = vmatprep.subr.bf16.mxu0 0
    %1097 = vmatpush1.bf16.msra.mxu0 %v1079
    %1098 = vmatprep.subr.bf16.mxu0 0
    %1099 = vmatpush1.bf16.msra.mxu0 %v1080
    %1100 = vmatprep.subr.bf16.mxu0 0
    %1101 = vmatpush1.bf16.msra.mxu0 %v1081
    %1102 = vmatprep.subr.bf16.mxu0 0
    %1103 = vmatpush1.bf16.msra.mxu0 %v1082
    %1104 = vmatprep.subr.bf16.mxu0 0
    %1105 = vmatpush1.bf16.msra.mxu0 %v1083
    %1106 = vmatprep.subr.bf16.mxu0 0
    %1107 = vmatpush1.bf16.msra.mxu0 %v1084
    %1108 = vmatprep.subr.bf16.mxu0 0
    %1109 = vmatpush1.bf16.msra.mxu0 %v1085
    %1110 = vmatprep.subr.bf16.mxu0 0
    %1111 = vmatpush1.bf16.msra.mxu0 0
    %1112 = vmatprep.subr.bf16.mxu0 0
    %1113 = vmatpush1.bf16.msra.mxu0 0
    %1114 = vmatprep.subr.bf16.mxu0 0
    %1115 = vmatpush1.bf16.msra.mxu0 0
    %1116 = vmatprep.subr.bf16.mxu0 0
    %1117 = vmatpush1.bf16.msra.mxu0 0
    %1118 = vmatprep.subr.bf16.mxu0 0
    %1119 = vmatpush1.bf16.msra.mxu0 0
    %1120 = vmatprep.subr.bf16.mxu0 0
    %1121 = vmatpush1.bf16.msra.mxu0 0
    %1122 = vmatprep.subr.bf16.mxu0 0
    %1123 = vmatpush1.bf16.msra.mxu0 0
    %1124 = vmatprep.subr.bf16.mxu0 0
    %1125 = vmatpush1.bf16.msra.mxu0 0
    %1126 = vmatprep.mubr.bf16.mxu0 0
    %1127 = vmatmul.mubr.bf16.gmra.mrb[0].mxu0 %v354
    %v1128 = vpop.f32.mrb[0].mxu0
    %v1129 = vadd.f32 0.0, %v1128
    %v1130 = vpop.f32.mrb[0].mxu0
    %v1131 = vpop.f32.mrb[0].mxu0
    %v1132 = vadd.f32 0.0, %v1131
    %v1133 = vpop.f32.mrb[0].mxu0
    %1134 = vmatprep.mubr.bf16.mxu0 0
    %1135 = vmatmul.mubr.bf16.gmra.mrb[0].mxu0 %v355
    %v1136 = vpop.f32.mrb[0].mxu0
    %v1137 = vadd.f32 0.0, %v1136
    %v1138 = vpop.f32.mrb[0].mxu0
    %v1139 = vpop.f32.mrb[0].mxu0
    %v1140 = vadd.f32 0.0, %v1139
    %v1141 = vpop.f32.mrb[0].mxu0
    %1142 = vdwg.mxu0
    %s1143 = scalar_lea.vmem %s5, 96
    %v1144 = vld [vmem:[%s1143] sm:$0xf]
    %v1145 = vld [vmem:[%s1143 + $0x4] sm:$0xf]
    %v1146 = vld [vmem:[%s1143 + $0x8] sm:$0xf]
    %v1147 = vld [vmem:[%s1143 + $0xc] sm:$0xf]
    %v1148 = vld [vmem:[%s1143 + $0x10] sm:$0xf]
    %v1149 = vld [vmem:[%s1143 + $0x14] sm:$0xf]
    %v1150 = vld [vmem:[%s1143 + $0x18] sm:$0xf]
    %v1151 = vld [vmem:[%s1143 + $0x1c] sm:$0xf]
    %v1152 = vpack.c.bf16 %v1132, %v1129
    %v1153 = vpack.c.bf16 %v1140, %v1137
    %v1162 = vunpack.c.l.b16 %v1144
    %v1163 = vunpack.c.l.b16 %v1145
    %v1164 = vunpack.c.l.b16 %v1146
    %v1165 = vunpack.c.l.b16 %v1147
    %v1166 = vunpack.c.l.b16 %v1148
    %v1167 = vunpack.c.l.b16 %v1149
    %v1168 = vunpack.c.l.b16 %v1150
    %v1169 = vunpack.c.l.b16 %v1151
    %v1170 = vpack.c.b16 %v1163, %v1162
    %v1171 = vpack.c.b16 %v1165, %v1164
    %v1172 = vpack.c.b16 %v1167, %v1166
    %v1173 = vpack.c.b16 %v1169, %v1168
    %v1175 = vsel %vm624, %v1170, 0
    %v1178 = vsel %vm624, %v1171, 0
    %v1181 = vsel %vm624, %v1172, 0
    %v1184 = vsel %vm624, %v1173, 0
    %1186 = vmatprep.subr.bf16.mxu0 0
    %1187 = vmatpush1.bf16.msra.mxu0 %v1152
    %1188 = vmatprep.subr.bf16.mxu0 0
    %1189 = vmatpush1.bf16.msra.mxu0 %v1153
    %1190 = vmatprep.subr.bf16.mxu0 0
    %1191 = vmatpush1.bf16.msra.mxu0 0
    %1192 = vmatprep.subr.bf16.mxu0 0
    %1193 = vmatpush1.bf16.msra.mxu0 0
    %1194 = vmatprep.subr.bf16.mxu0 0
    %1195 = vmatpush1.bf16.msra.mxu0 0
    %1196 = vmatprep.subr.bf16.mxu0 0
    %1197 = vmatpush1.bf16.msra.mxu0 0
    %1198 = vmatprep.subr.bf16.mxu0 0
    %1199 = vmatpush1.bf16.msra.mxu0 0
    %1200 = vmatprep.subr.bf16.mxu0 0
    %1201 = vmatpush1.bf16.msra.mxu0 0
    %1202 = vmatprep.subr.bf16.mxu0 0
    %1203 = vmatpush1.bf16.msra.mxu0 0
    %1204 = vmatprep.subr.bf16.mxu0 0
    %1205 = vmatpush1.bf16.msra.mxu0 0
    %1206 = vmatprep.subr.bf16.mxu0 0
    %1207 = vmatpush1.bf16.msra.mxu0 0
    %1208 = vmatprep.subr.bf16.mxu0 0
    %1209 = vmatpush1.bf16.msra.mxu0 0
    %1210 = vmatprep.subr.bf16.mxu0 0
    %1211 = vmatpush1.bf16.msra.mxu0 0
    %1212 = vmatprep.subr.bf16.mxu0 0
    %1213 = vmatpush1.bf16.msra.mxu0 0
    %1214 = vmatprep.subr.bf16.mxu0 0
    %1215 = vmatpush1.bf16.msra.mxu0 0
    %1216 = vmatprep.subr.bf16.mxu0 0
    %1217 = vmatpush1.bf16.msra.mxu0 0
    %1218 = vmatprep.mubr.bf16.mxu0 0
    %1219 = vmatmul.mubr.bf16.gmra.mrb[0].mxu0 %v1175
    %v1220 = vpop.f32.mrb[0].mxu0
    %v1221 = vadd.f32 0.0, %v1220
    %v1222 = vpop.f32.mrb[0].mxu0
    %v1223 = vpop.f32.mrb[0].mxu0
    %v1224 = vadd.f32 0.0, %v1223
    %v1225 = vpop.f32.mrb[0].mxu0
    %1226 = vmatprep.mubr.bf16.mxu0 0
    %1227 = vmatmul.mubr.bf16.gmra.mrb[0].mxu0 %v1178
    %v1228 = vpop.f32.mrb[0].mxu0
    %v1229 = vadd.f32 0.0, %v1228
    %v1230 = vpop.f32.mrb[0].mxu0
    %v1231 = vpop.f32.mrb[0].mxu0
    %v1232 = vadd.f32 0.0, %v1231
    %v1233 = vpop.f32.mrb[0].mxu0
    %1234 = vmatprep.mubr.bf16.mxu0 0
    %1235 = vmatmul.mubr.bf16.gmra.mrb[0].mxu0 %v1181
    %v1236 = vpop.f32.mrb[0].mxu0
    %v1237 = vadd.f32 0.0, %v1236
    %v1238 = vpop.f32.mrb[0].mxu0
    %v1239 = vpop.f32.mrb[0].mxu0
    %v1240 = vadd.f32 0.0, %v1239
    %v1241 = vpop.f32.mrb[0].mxu0
    %1242 = vmatprep.mubr.bf16.mxu0 0
    %1243 = vmatmul.mubr.bf16.gmra.mrb[0].mxu0 %v1184
    %v1244 = vpop.f32.mrb[0].mxu0
    %v1245 = vadd.f32 0.0, %v1244
    %v1246 = vpop.f32.mrb[0].mxu0
    %v1247 = vpop.f32.mrb[0].mxu0
    %v1248 = vadd.f32 0.0, %v1247
    %v1249 = vpop.f32.mrb[0].mxu0
    %1250 = vdwg.mxu0
    %v1251 = vadd.f32 %v1021, %v1221
    %v1252 = vadd.f32 %v1022, %v1224
    %v1253 = vadd.f32 %v1023, %v1229
    %v1254 = vadd.f32 %v1024, %v1232
    %v1255 = vadd.f32 %v1025, %v1237
    %v1256 = vadd.f32 %v1026, %v1240
    %v1257 = vadd.f32 %v1027, %v1245
    %v1258 = vadd.f32 %v1028, %v1248
    %s1259 = scalar_lea.vmem %s4, 256
    %v1260 = vld [vmem:[%s1259] sm:$0xf]
    %v1261 = vld [vmem:[%s1259 + $0x4] sm:$0xf]
    %v1262 = vld [vmem:[%s1259 + $0x8] sm:$0xf]
    %v1263 = vld [vmem:[%s1259 + $0xc] sm:$0xf]
    %v1264 = vld [vmem:[%s1259 + $0x10] sm:$0xf]
    %v1265 = vld [vmem:[%s1259 + $0x14] sm:$0xf]
    %v1266 = vld [vmem:[%s1259 + $0x18] sm:$0xf]
    %v1267 = vld [vmem:[%s1259 + $0x1c] sm:$0xf]
    %v1268 = vld [vmem:[%s1259 + $0x20] sm:$0xf]
    %v1269 = vld [vmem:[%s1259 + $0x24] sm:$0xf]
    %v1270 = vld [vmem:[%s1259 + $0x28] sm:$0xf]
    %v1271 = vld [vmem:[%s1259 + $0x2c] sm:$0xf]
    %v1272 = vld [vmem:[%s1259 + $0x30] sm:$0xf]
    %v1273 = vld [vmem:[%s1259 + $0x34] sm:$0xf]
    %v1274 = vld [vmem:[%s1259 + $0x38] sm:$0xf]
    %v1275 = vld [vmem:[%s1259 + $0x3c] sm:$0xf]
    %v1292 = vunpack.c.l.b16 %v1260
    %v1293 = vunpack.c.l.b16 %v1261
    %v1294 = vunpack.c.l.b16 %v1262
    %v1295 = vunpack.c.l.b16 %v1263
    %v1296 = vunpack.c.l.b16 %v1264
    %v1297 = vunpack.c.l.b16 %v1265
    %v1298 = vunpack.c.l.b16 %v1266
    %v1299 = vunpack.c.l.b16 %v1267
    %v1300 = vunpack.c.l.b16 %v1268
    %v1301 = vunpack.c.l.b16 %v1269
    %v1302 = vunpack.c.l.b16 %v1270
    %v1303 = vunpack.c.l.b16 %v1271
    %v1304 = vunpack.c.l.b16 %v1272
    %v1305 = vunpack.c.l.b16 %v1273
    %v1306 = vunpack.c.l.b16 %v1274
    %v1307 = vunpack.c.l.b16 %v1275
    %v1308 = vpack.c.b16 %v1293, %v1292
    %v1309 = vpack.c.b16 %v1295, %v1294
    %v1310 = vpack.c.b16 %v1297, %v1296
    %v1311 = vpack.c.b16 %v1299, %v1298
    %v1312 = vpack.c.b16 %v1301, %v1300
    %v1313 = vpack.c.b16 %v1303, %v1302
    %v1314 = vpack.c.b16 %v1305, %v1304
    %v1315 = vpack.c.b16 %v1307, %v1306
    %1324 = vmatprep.subr.bf16.mxu0 0
    %1325 = vmatpush1.bf16.msra.mxu0 %v1308
    %1326 = vmatprep.subr.bf16.mxu0 0
    %1327 = vmatpush1.bf16.msra.mxu0 %v1309
    %1328 = vmatprep.subr.bf16.mxu0 0
    %1329 = vmatpush1.bf16.msra.mxu0 %v1310
    %1330 = vmatprep.subr.bf16.mxu0 0
    %1331 = vmatpush1.bf16.msra.mxu0 %v1311
    %1332 = vmatprep.subr.bf16.mxu0 0
    %1333 = vmatpush1.bf16.msra.mxu0 %v1312
    %1334 = vmatprep.subr.bf16.mxu0 0
    %1335 = vmatpush1.bf16.msra.mxu0 %v1313
    %1336 = vmatprep.subr.bf16.mxu0 0
    %1337 = vmatpush1.bf16.msra.mxu0 %v1314
    %1338 = vmatprep.subr.bf16.mxu0 0
    %1339 = vmatpush1.bf16.msra.mxu0 %v1315
    %1340 = vmatprep.subr.bf16.mxu0 0
    %1341 = vmatpush1.bf16.msra.mxu0 0
    %1342 = vmatprep.subr.bf16.mxu0 0
    %1343 = vmatpush1.bf16.msra.mxu0 0
    %1344 = vmatprep.subr.bf16.mxu0 0
    %1345 = vmatpush1.bf16.msra.mxu0 0
    %1346 = vmatprep.subr.bf16.mxu0 0
    %1347 = vmatpush1.bf16.msra.mxu0 0
    %1348 = vmatprep.subr.bf16.mxu0 0
    %1349 = vmatpush1.bf16.msra.mxu0 0
    %1350 = vmatprep.subr.bf16.mxu0 0
    %1351 = vmatpush1.bf16.msra.mxu0 0
    %1352 = vmatprep.subr.bf16.mxu0 0
    %1353 = vmatpush1.bf16.msra.mxu0 0
    %1354 = vmatprep.subr.bf16.mxu0 0
    %1355 = vmatpush1.bf16.msra.mxu0 0
    %1356 = vmatprep.mubr.bf16.mxu0 0
    %1357 = vmatmul.mubr.bf16.gmra.mrb[0].mxu0 %v354
    %v1358 = vpop.f32.mrb[0].mxu0
    %v1359 = vadd.f32 0.0, %v1358
    %v1360 = vpop.f32.mrb[0].mxu0
    %v1361 = vpop.f32.mrb[0].mxu0
    %v1362 = vadd.f32 0.0, %v1361
    %v1363 = vpop.f32.mrb[0].mxu0
    %1364 = vmatprep.mubr.bf16.mxu0 0
    %1365 = vmatmul.mubr.bf16.gmra.mrb[0].mxu0 %v355
    %v1366 = vpop.f32.mrb[0].mxu0
    %v1367 = vadd.f32 0.0, %v1366
    %v1368 = vpop.f32.mrb[0].mxu0
    %v1369 = vpop.f32.mrb[0].mxu0
    %v1370 = vadd.f32 0.0, %v1369
    %v1371 = vpop.f32.mrb[0].mxu0
    %1372 = vdwg.mxu0
    %s1373 = scalar_lea.vmem %s5, 128
    %v1374 = vld [vmem:[%s1373] sm:$0xf]
    %v1375 = vld [vmem:[%s1373 + $0x4] sm:$0xf]
    %v1376 = vld [vmem:[%s1373 + $0x8] sm:$0xf]
    %v1377 = vld [vmem:[%s1373 + $0xc] sm:$0xf]
    %v1378 = vld [vmem:[%s1373 + $0x10] sm:$0xf]
    %v1379 = vld [vmem:[%s1373 + $0x14] sm:$0xf]
    %v1380 = vld [vmem:[%s1373 + $0x18] sm:$0xf]
    %v1381 = vld [vmem:[%s1373 + $0x1c] sm:$0xf]
    %v1382 = vpack.c.bf16 %v1362, %v1359
    %v1383 = vpack.c.bf16 %v1370, %v1367
    %v1392 = vunpack.c.l.b16 %v1374
    %v1393 = vunpack.c.l.b16 %v1375
    %v1394 = vunpack.c.l.b16 %v1376
    %v1395 = vunpack.c.l.b16 %v1377
    %v1396 = vunpack.c.l.b16 %v1378
    %v1397 = vunpack.c.l.b16 %v1379
    %v1398 = vunpack.c.l.b16 %v1380
    %v1399 = vunpack.c.l.b16 %v1381
    %v1400 = vpack.c.b16 %v1393, %v1392
    %v1401 = vpack.c.b16 %v1395, %v1394
    %v1402 = vpack.c.b16 %v1397, %v1396
    %v1403 = vpack.c.b16 %v1399, %v1398
    %v1405 = vsel %vm624, %v1400, 0
    %v1408 = vsel %vm624, %v1401, 0
    %v1411 = vsel %vm624, %v1402, 0
    %v1414 = vsel %vm624, %v1403, 0
    %1416 = vmatprep.subr.bf16.mxu0 0
    %1417 = vmatpush1.bf16.msra.mxu0 %v1382
    %1418 = vmatprep.subr.bf16.mxu0 0
    %1419 = vmatpush1.bf16.msra.mxu0 %v1383
    %1420 = vmatprep.subr.bf16.mxu0 0
    %1421 = vmatpush1.bf16.msra.mxu0 0
    %1422 = vmatprep.subr.bf16.mxu0 0
    %1423 = vmatpush1.bf16.msra.mxu0 0
    %1424 = vmatprep.subr.bf16.mxu0 0
    %1425 = vmatpush1.bf16.msra.mxu0 0
    %1426 = vmatprep.subr.bf16.mxu0 0
    %1427 = vmatpush1.bf16.msra.mxu0 0
    %1428 = vmatprep.subr.bf16.mxu0 0
    %1429 = vmatpush1.bf16.msra.mxu0 0
    %1430 = vmatprep.subr.bf16.mxu0 0
    %1431 = vmatpush1.bf16.msra.mxu0 0
    %1432 = vmatprep.subr.bf16.mxu0 0
    %1433 = vmatpush1.bf16.msra.mxu0 0
    %1434 = vmatprep.subr.bf16.mxu0 0
    %1435 = vmatpush1.bf16.msra.mxu0 0
    %1436 = vmatprep.subr.bf16.mxu0 0
    %1437 = vmatpush1.bf16.msra.mxu0 0
    %1438 = vmatprep.subr.bf16.mxu0 0
    %1439 = vmatpush1.bf16.msra.mxu0 0
    %1440 = vmatprep.subr.bf16.mxu0 0
    %1441 = vmatpush1.bf16.msra.mxu0 0
    %1442 = vmatprep.subr.bf16.mxu0 0
    %1443 = vmatpush1.bf16.msra.mxu0 0
    %1444 = vmatprep.subr.bf16.mxu0 0
    %1445 = vmatpush1.bf16.msra.mxu0 0
    %1446 = vmatprep.subr.bf16.mxu0 0
    %1447 = vmatpush1.bf16.msra.mxu0 0
    %1448 = vmatprep.mubr.bf16.mxu0 0
    %1449 = vmatmul.mubr.bf16.gmra.mrb[0].mxu0 %v1405
    %v1450 = vpop.f32.mrb[0].mxu0
    %v1451 = vadd.f32 0.0, %v1450
    %v1452 = vpop.f32.mrb[0].mxu0
    %v1453 = vpop.f32.mrb[0].mxu0
    %v1454 = vadd.f32 0.0, %v1453
    %v1455 = vpop.f32.mrb[0].mxu0
    %1456 = vmatprep.mubr.bf16.mxu0 0
    %1457 = vmatmul.mubr.bf16.gmra.mrb[0].mxu0 %v1408
    %v1458 = vpop.f32.mrb[0].mxu0
    %v1459 = vadd.f32 0.0, %v1458
    %v1460 = vpop.f32.mrb[0].mxu0
    %v1461 = vpop.f32.mrb[0].mxu0
    %v1462 = vadd.f32 0.0, %v1461
    %v1463 = vpop.f32.mrb[0].mxu0
    %1464 = vmatprep.mubr.bf16.mxu0 0
    %1465 = vmatmul.mubr.bf16.gmra.mrb[0].mxu0 %v1411
    %v1466 = vpop.f32.mrb[0].mxu0
    %v1467 = vadd.f32 0.0, %v1466
    %v1468 = vpop.f32.mrb[0].mxu0
    %v1469 = vpop.f32.mrb[0].mxu0
    %v1470 = vadd.f32 0.0, %v1469
    %v1471 = vpop.f32.mrb[0].mxu0
    %1472 = vmatprep.mubr.bf16.mxu0 0
    %1473 = vmatmul.mubr.bf16.gmra.mrb[0].mxu0 %v1414
    %v1474 = vpop.f32.mrb[0].mxu0
    %v1475 = vadd.f32 0.0, %v1474
    %v1476 = vpop.f32.mrb[0].mxu0
    %v1477 = vpop.f32.mrb[0].mxu0
    %v1478 = vadd.f32 0.0, %v1477
    %v1479 = vpop.f32.mrb[0].mxu0
    %1480 = vdwg.mxu0
    %v1481 = vadd.f32 %v1251, %v1451
    %v1482 = vadd.f32 %v1252, %v1454
    %v1483 = vadd.f32 %v1253, %v1459
    %v1484 = vadd.f32 %v1254, %v1462
    %v1485 = vadd.f32 %v1255, %v1467
    %v1486 = vadd.f32 %v1256, %v1470
    %v1487 = vadd.f32 %v1257, %v1475
    %v1488 = vadd.f32 %v1258, %v1478
    %s1489 = scalar_lea.vmem %s4, 320
    %v1490 = vld [vmem:[%s1489] sm:$0xf]
    %v1491 = vld [vmem:[%s1489 + $0x4] sm:$0xf]
    %v1492 = vld [vmem:[%s1489 + $0x8] sm:$0xf]
    %v1493 = vld [vmem:[%s1489 + $0xc] sm:$0xf]
    %v1494 = vld [vmem:[%s1489 + $0x10] sm:$0xf]
    %v1495 = vld [vmem:[%s1489 + $0x14] sm:$0xf]
    %v1496 = vld [vmem:[%s1489 + $0x18] sm:$0xf]
    %v1497 = vld [vmem:[%s1489 + $0x1c] sm:$0xf]
    %v1498 = vld [vmem:[%s1489 + $0x20] sm:$0xf]
    %v1499 = vld [vmem:[%s1489 + $0x24] sm:$0xf]
    %v1500 = vld [vmem:[%s1489 + $0x28] sm:$0xf]
    %v1501 = vld [vmem:[%s1489 + $0x2c] sm:$0xf]
    %v1502 = vld [vmem:[%s1489 + $0x30] sm:$0xf]
    %v1503 = vld [vmem:[%s1489 + $0x34] sm:$0xf]
    %v1504 = vld [vmem:[%s1489 + $0x38] sm:$0xf]
    %v1505 = vld [vmem:[%s1489 + $0x3c] sm:$0xf]
    %v1522 = vunpack.c.l.b16 %v1490
    %v1523 = vunpack.c.l.b16 %v1491
    %v1524 = vunpack.c.l.b16 %v1492
    %v1525 = vunpack.c.l.b16 %v1493
    %v1526 = vunpack.c.l.b16 %v1494
    %v1527 = vunpack.c.l.b16 %v1495
    %v1528 = vunpack.c.l.b16 %v1496
    %v1529 = vunpack.c.l.b16 %v1497
    %v1530 = vunpack.c.l.b16 %v1498
    %v1531 = vunpack.c.l.b16 %v1499
    %v1532 = vunpack.c.l.b16 %v1500
    %v1533 = vunpack.c.l.b16 %v1501
    %v1534 = vunpack.c.l.b16 %v1502
    %v1535 = vunpack.c.l.b16 %v1503
    %v1536 = vunpack.c.l.b16 %v1504
    %v1537 = vunpack.c.l.b16 %v1505
    %v1538 = vpack.c.b16 %v1523, %v1522
    %v1539 = vpack.c.b16 %v1525, %v1524
    %v1540 = vpack.c.b16 %v1527, %v1526
    %v1541 = vpack.c.b16 %v1529, %v1528
    %v1542 = vpack.c.b16 %v1531, %v1530
    %v1543 = vpack.c.b16 %v1533, %v1532
    %v1544 = vpack.c.b16 %v1535, %v1534
    %v1545 = vpack.c.b16 %v1537, %v1536
    %1554 = vmatprep.subr.bf16.mxu0 0
    %1555 = vmatpush1.bf16.msra.mxu0 %v1538
    %1556 = vmatprep.subr.bf16.mxu0 0
    %1557 = vmatpush1.bf16.msra.mxu0 %v1539
    %1558 = vmatprep.subr.bf16.mxu0 0
    %1559 = vmatpush1.bf16.msra.mxu0 %v1540
    %1560 = vmatprep.subr.bf16.mxu0 0
    %1561 = vmatpush1.bf16.msra.mxu0 %v1541
    %1562 = vmatprep.subr.bf16.mxu0 0
    %1563 = vmatpush1.bf16.msra.mxu0 %v1542
    %1564 = vmatprep.subr.bf16.mxu0 0
    %1565 = vmatpush1.bf16.msra.mxu0 %v1543
    %1566 = vmatprep.subr.bf16.mxu0 0
    %1567 = vmatpush1.bf16.msra.mxu0 %v1544
    %1568 = vmatprep.subr.bf16.mxu0 0
    %1569 = vmatpush1.bf16.msra.mxu0 %v1545
    %1570 = vmatprep.subr.bf16.mxu0 0
    %1571 = vmatpush1.bf16.msra.mxu0 0
    %1572 = vmatprep.subr.bf16.mxu0 0
    %1573 = vmatpush1.bf16.msra.mxu0 0
    %1574 = vmatprep.subr.bf16.mxu0 0
    %1575 = vmatpush1.bf16.msra.mxu0 0
    %1576 = vmatprep.subr.bf16.mxu0 0
    %1577 = vmatpush1.bf16.msra.mxu0 0
    %1578 = vmatprep.subr.bf16.mxu0 0
    %1579 = vmatpush1.bf16.msra.mxu0 0
    %1580 = vmatprep.subr.bf16.mxu0 0
    %1581 = vmatpush1.bf16.msra.mxu0 0
    %1582 = vmatprep.subr.bf16.mxu0 0
    %1583 = vmatpush1.bf16.msra.mxu0 0
    %1584 = vmatprep.subr.bf16.mxu0 0
    %1585 = vmatpush1.bf16.msra.mxu0 0
    %1586 = vmatprep.mubr.bf16.mxu0 0
    %1587 = vmatmul.mubr.bf16.gmra.mrb[0].mxu0 %v354
    %v1588 = vpop.f32.mrb[0].mxu0
    %v1589 = vadd.f32 0.0, %v1588
    %v1590 = vpop.f32.mrb[0].mxu0
    %v1591 = vpop.f32.mrb[0].mxu0
    %v1592 = vadd.f32 0.0, %v1591
    %v1593 = vpop.f32.mrb[0].mxu0
    %1594 = vmatprep.mubr.bf16.mxu0 0
    %1595 = vmatmul.mubr.bf16.gmra.mrb[0].mxu0 %v355
    %v1596 = vpop.f32.mrb[0].mxu0
    %v1597 = vadd.f32 0.0, %v1596
    %v1598 = vpop.f32.mrb[0].mxu0
    %v1599 = vpop.f32.mrb[0].mxu0
    %v1600 = vadd.f32 0.0, %v1599
    %v1601 = vpop.f32.mrb[0].mxu0
    %1602 = vdwg.mxu0
    %s1603 = scalar_lea.vmem %s5, 160
    %v1604 = vld [vmem:[%s1603] sm:$0xf]
    %v1605 = vld [vmem:[%s1603 + $0x4] sm:$0xf]
    %v1606 = vld [vmem:[%s1603 + $0x8] sm:$0xf]
    %v1607 = vld [vmem:[%s1603 + $0xc] sm:$0xf]
    %v1608 = vld [vmem:[%s1603 + $0x10] sm:$0xf]
    %v1609 = vld [vmem:[%s1603 + $0x14] sm:$0xf]
    %v1610 = vld [vmem:[%s1603 + $0x18] sm:$0xf]
    %v1611 = vld [vmem:[%s1603 + $0x1c] sm:$0xf]
    %v1612 = vpack.c.bf16 %v1592, %v1589
    %v1613 = vpack.c.bf16 %v1600, %v1597
    %v1622 = vunpack.c.l.b16 %v1604
    %v1623 = vunpack.c.l.b16 %v1605
    %v1624 = vunpack.c.l.b16 %v1606
    %v1625 = vunpack.c.l.b16 %v1607
    %v1626 = vunpack.c.l.b16 %v1608
    %v1627 = vunpack.c.l.b16 %v1609
    %v1628 = vunpack.c.l.b16 %v1610
    %v1629 = vunpack.c.l.b16 %v1611
    %v1630 = vpack.c.b16 %v1623, %v1622
    %v1631 = vpack.c.b16 %v1625, %v1624
    %v1632 = vpack.c.b16 %v1627, %v1626
    %v1633 = vpack.c.b16 %v1629, %v1628
    %v1635 = vsel %vm624, %v1630, 0
    %v1638 = vsel %vm624, %v1631, 0
    %v1641 = vsel %vm624, %v1632, 0
    %v1644 = vsel %vm624, %v1633, 0
    %1646 = vmatprep.subr.bf16.mxu0 0
    %1647 = vmatpush1.bf16.msra.mxu0 %v1612
    %1648 = vmatprep.subr.bf16.mxu0 0
    %1649 = vmatpush1.bf16.msra.mxu0 %v1613
    %1650 = vmatprep.subr.bf16.mxu0 0
    %1651 = vmatpush1.bf16.msra.mxu0 0
    %1652 = vmatprep.subr.bf16.mxu0 0
    %1653 = vmatpush1.bf16.msra.mxu0 0
    %1654 = vmatprep.subr.bf16.mxu0 0
    %1655 = vmatpush1.bf16.msra.mxu0 0
    %1656 = vmatprep.subr.bf16.mxu0 0
    %1657 = vmatpush1.bf16.msra.mxu0 0
    %1658 = vmatprep.subr.bf16.mxu0 0
    %1659 = vmatpush1.bf16.msra.mxu0 0
    %1660 = vmatprep.subr.bf16.mxu0 0
    %1661 = vmatpush1.bf16.msra.mxu0 0
    %1662 = vmatprep.subr.bf16.mxu0 0
    %1663 = vmatpush1.bf16.msra.mxu0 0
    %1664 = vmatprep.subr.bf16.mxu0 0
    %1665 = vmatpush1.bf16.msra.mxu0 0
    %1666 = vmatprep.subr.bf16.mxu0 0
    %1667 = vmatpush1.bf16.msra.mxu0 0
    %1668 = vmatprep.subr.bf16.mxu0 0
    %1669 = vmatpush1.bf16.msra.mxu0 0
    %1670 = vmatprep.subr.bf16.mxu0 0
    %1671 = vmatpush1.bf16.msra.mxu0 0
    %1672 = vmatprep.subr.bf16.mxu0 0
    %1673 = vmatpush1.bf16.msra.mxu0 0
    %1674 = vmatprep.subr.bf16.mxu0 0
    %1675 = vmatpush1.bf16.msra.mxu0 0
    %1676 = vmatprep.subr.bf16.mxu0 0
    %1677 = vmatpush1.bf16.msra.mxu0 0
    %1678 = vmatprep.mubr.bf16.mxu0 0
    %1679 = vmatmul.mubr.bf16.gmra.mrb[0].mxu0 %v1635
    %v1680 = vpop.f32.mrb[0].mxu0
    %v1681 = vadd.f32 0.0, %v1680
    %v1682 = vpop.f32.mrb[0].mxu0
    %v1683 = vpop.f32.mrb[0].mxu0
    %v1684 = vadd.f32 0.0, %v1683
    %v1685 = vpop.f32.mrb[0].mxu0
    %1686 = vmatprep.mubr.bf16.mxu0 0
    %1687 = vmatmul.mubr.bf16.gmra.mrb[0].mxu0 %v1638
    %v1688 = vpop.f32.mrb[0].mxu0
    %v1689 = vadd.f32 0.0, %v1688
    %v1690 = vpop.f32.mrb[0].mxu0
    %v1691 = vpop.f32.mrb[0].mxu0
    %v1692 = vadd.f32 0.0, %v1691
    %v1693 = vpop.f32.mrb[0].mxu0
    %1694 = vmatprep.mubr.bf16.mxu0 0
    %1695 = vmatmul.mubr.bf16.gmra.mrb[0].mxu0 %v1641
    %v1696 = vpop.f32.mrb[0].mxu0
    %v1697 = vadd.f32 0.0, %v1696
    %v1698 = vpop.f32.mrb[0].mxu0
    %v1699 = vpop.f32.mrb[0].mxu0
    %v1700 = vadd.f32 0.0, %v1699
    %v1701 = vpop.f32.mrb[0].mxu0
    %1702 = vmatprep.mubr.bf16.mxu0 0
    %1703 = vmatmul.mubr.bf16.gmra.mrb[0].mxu0 %v1644
    %v1704 = vpop.f32.mrb[0].mxu0
    %v1705 = vadd.f32 0.0, %v1704
    %v1706 = vpop.f32.mrb[0].mxu0
    %v1707 = vpop.f32.mrb[0].mxu0
    %v1708 = vadd.f32 0.0, %v1707
    %v1709 = vpop.f32.mrb[0].mxu0
    %1710 = vdwg.mxu0
    %v1711 = vadd.f32 %v1481, %v1681
    %v1712 = vadd.f32 %v1482, %v1684
    %v1713 = vadd.f32 %v1483, %v1689
    %v1714 = vadd.f32 %v1484, %v1692
    %v1715 = vadd.f32 %v1485, %v1697
    %v1716 = vadd.f32 %v1486, %v1700
    %v1717 = vadd.f32 %v1487, %v1705
    %v1718 = vadd.f32 %v1488, %v1708
    %s1719 = scalar_lea.vmem %s4, 384
    %v1720 = vld [vmem:[%s1719] sm:$0xf]
    %v1721 = vld [vmem:[%s1719 + $0x4] sm:$0xf]
    %v1722 = vld [vmem:[%s1719 + $0x8] sm:$0xf]
    %v1723 = vld [vmem:[%s1719 + $0xc] sm:$0xf]
    %v1724 = vld [vmem:[%s1719 + $0x10] sm:$0xf]
    %v1725 = vld [vmem:[%s1719 + $0x14] sm:$0xf]
    %v1726 = vld [vmem:[%s1719 + $0x18] sm:$0xf]
    %v1727 = vld [vmem:[%s1719 + $0x1c] sm:$0xf]
    %v1728 = vld [vmem:[%s1719 + $0x20] sm:$0xf]
    %v1729 = vld [vmem:[%s1719 + $0x24] sm:$0xf]
    %v1730 = vld [vmem:[%s1719 + $0x28] sm:$0xf]
    %v1731 = vld [vmem:[%s1719 + $0x2c] sm:$0xf]
    %v1732 = vld [vmem:[%s1719 + $0x30] sm:$0xf]
    %v1733 = vld [vmem:[%s1719 + $0x34] sm:$0xf]
    %v1734 = vld [vmem:[%s1719 + $0x38] sm:$0xf]
    %v1735 = vld [vmem:[%s1719 + $0x3c] sm:$0xf]
    %v1752 = vunpack.c.l.b16 %v1720
    %v1753 = vunpack.c.l.b16 %v1721
    %v1754 = vunpack.c.l.b16 %v1722
    %v1755 = vunpack.c.l.b16 %v1723
    %v1756 = vunpack.c.l.b16 %v1724
    %v1757 = vunpack.c.l.b16 %v1725
    %v1758 = vunpack.c.l.b16 %v1726
    %v1759 = vunpack.c.l.b16 %v1727
    %v1760 = vunpack.c.l.b16 %v1728
    %v1761 = vunpack.c.l.b16 %v1729
    %v1762 = vunpack.c.l.b16 %v1730
    %v1763 = vunpack.c.l.b16 %v1731
    %v1764 = vunpack.c.l.b16 %v1732
    %v1765 = vunpack.c.l.b16 %v1733
    %v1766 = vunpack.c.l.b16 %v1734
    %v1767 = vunpack.c.l.b16 %v1735
    %v1768 = vpack.c.b16 %v1753, %v1752
    %v1769 = vpack.c.b16 %v1755, %v1754
    %v1770 = vpack.c.b16 %v1757, %v1756
    %v1771 = vpack.c.b16 %v1759, %v1758
    %v1772 = vpack.c.b16 %v1761, %v1760
    %v1773 = vpack.c.b16 %v1763, %v1762
    %v1774 = vpack.c.b16 %v1765, %v1764
    %v1775 = vpack.c.b16 %v1767, %v1766
    %1784 = vmatprep.subr.bf16.mxu0 0
    %1785 = vmatpush1.bf16.msra.mxu0 %v1768
    %1786 = vmatprep.subr.bf16.mxu0 0
    %1787 = vmatpush1.bf16.msra.mxu0 %v1769
    %1788 = vmatprep.subr.bf16.mxu0 0
    %1789 = vmatpush1.bf16.msra.mxu0 %v1770
    %1790 = vmatprep.subr.bf16.mxu0 0
    %1791 = vmatpush1.bf16.msra.mxu0 %v1771
    %1792 = vmatprep.subr.bf16.mxu0 0
    %1793 = vmatpush1.bf16.msra.mxu0 %v1772
    %1794 = vmatprep.subr.bf16.mxu0 0
    %1795 = vmatpush1.bf16.msra.mxu0 %v1773
    %1796 = vmatprep.subr.bf16.mxu0 0
    %1797 = vmatpush1.bf16.msra.mxu0 %v1774
    %1798 = vmatprep.subr.bf16.mxu0 0
    %1799 = vmatpush1.bf16.msra.mxu0 %v1775
    %1800 = vmatprep.subr.bf16.mxu0 0
    %1801 = vmatpush1.bf16.msra.mxu0 0
    %1802 = vmatprep.subr.bf16.mxu0 0
    %1803 = vmatpush1.bf16.msra.mxu0 0
    %1804 = vmatprep.subr.bf16.mxu0 0
    %1805 = vmatpush1.bf16.msra.mxu0 0
    %1806 = vmatprep.subr.bf16.mxu0 0
    %1807 = vmatpush1.bf16.msra.mxu0 0
    %1808 = vmatprep.subr.bf16.mxu0 0
    %1809 = vmatpush1.bf16.msra.mxu0 0
    %1810 = vmatprep.subr.bf16.mxu0 0
    %1811 = vmatpush1.bf16.msra.mxu0 0
    %1812 = vmatprep.subr.bf16.mxu0 0
    %1813 = vmatpush1.bf16.msra.mxu0 0
    %1814 = vmatprep.subr.bf16.mxu0 0
    %1815 = vmatpush1.bf16.msra.mxu0 0
    %1816 = vmatprep.mubr.bf16.mxu0 0
    %1817 = vmatmul.mubr.bf16.gmra.mrb[0].mxu0 %v354
    %v1818 = vpop.f32.mrb[0].mxu0
    %v1819 = vadd.f32 0.0, %v1818
    %v1820 = vpop.f32.mrb[0].mxu0
    %v1821 = vpop.f32.mrb[0].mxu0
    %v1822 = vadd.f32 0.0, %v1821
    %v1823 = vpop.f32.mrb[0].mxu0
    %1824 = vmatprep.mubr.bf16.mxu0 0
    %1825 = vmatmul.mubr.bf16.gmra.mrb[0].mxu0 %v355
    %v1826 = vpop.f32.mrb[0].mxu0
    %v1827 = vadd.f32 0.0, %v1826
    %v1828 = vpop.f32.mrb[0].mxu0
    %v1829 = vpop.f32.mrb[0].mxu0
    %v1830 = vadd.f32 0.0, %v1829
    %v1831 = vpop.f32.mrb[0].mxu0
    %1832 = vdwg.mxu0
    %s1833 = scalar_lea.vmem %s5, 192
    %v1834 = vld [vmem:[%s1833] sm:$0xf]
    %v1835 = vld [vmem:[%s1833 + $0x4] sm:$0xf]
    %v1836 = vld [vmem:[%s1833 + $0x8] sm:$0xf]
    %v1837 = vld [vmem:[%s1833 + $0xc] sm:$0xf]
    %v1838 = vld [vmem:[%s1833 + $0x10] sm:$0xf]
    %v1839 = vld [vmem:[%s1833 + $0x14] sm:$0xf]
    %v1840 = vld [vmem:[%s1833 + $0x18] sm:$0xf]
    %v1841 = vld [vmem:[%s1833 + $0x1c] sm:$0xf]
    %v1842 = vpack.c.bf16 %v1822, %v1819
    %v1843 = vpack.c.bf16 %v1830, %v1827
    %v1852 = vunpack.c.l.b16 %v1834
    %v1853 = vunpack.c.l.b16 %v1835
    %v1854 = vunpack.c.l.b16 %v1836
    %v1855 = vunpack.c.l.b16 %v1837
    %v1856 = vunpack.c.l.b16 %v1838
    %v1857 = vunpack.c.l.b16 %v1839
    %v1858 = vunpack.c.l.b16 %v1840
    %v1859 = vunpack.c.l.b16 %v1841
    %v1860 = vpack.c.b16 %v1853, %v1852
    %v1861 = vpack.c.b16 %v1855, %v1854
    %v1862 = vpack.c.b16 %v1857, %v1856
    %v1863 = vpack.c.b16 %v1859, %v1858
    %v1865 = vsel %vm624, %v1860, 0
    %v1868 = vsel %vm624, %v1861, 0
    %v1871 = vsel %vm624, %v1862, 0
    %v1874 = vsel %vm624, %v1863, 0
    %1876 = vmatprep.subr.bf16.mxu0 0
    %1877 = vmatpush1.bf16.msra.mxu0 %v1842
    %1878 = vmatprep.subr.bf16.mxu0 0
    %1879 = vmatpush1.bf16.msra.mxu0 %v1843
    %1880 = vmatprep.subr.bf16.mxu0 0
    %1881 = vmatpush1.bf16.msra.mxu0 0
    %1882 = vmatprep.subr.bf16.mxu0 0
    %1883 = vmatpush1.bf16.msra.mxu0 0
    %1884 = vmatprep.subr.bf16.mxu0 0
    %1885 = vmatpush1.bf16.msra.mxu0 0
    %1886 = vmatprep.subr.bf16.mxu0 0
    %1887 = vmatpush1.bf16.msra.mxu0 0
    %1888 = vmatprep.subr.bf16.mxu0 0
    %1889 = vmatpush1.bf16.msra.mxu0 0
    %1890 = vmatprep.subr.bf16.mxu0 0
    %1891 = vmatpush1.bf16.msra.mxu0 0
    %1892 = vmatprep.subr.bf16.mxu0 0
    %1893 = vmatpush1.bf16.msra.mxu0 0
    %1894 = vmatprep.subr.bf16.mxu0 0
    %1895 = vmatpush1.bf16.msra.mxu0 0
    %1896 = vmatprep.subr.bf16.mxu0 0
    %1897 = vmatpush1.bf16.msra.mxu0 0
    %1898 = vmatprep.subr.bf16.mxu0 0
    %1899 = vmatpush1.bf16.msra.mxu0 0
    %1900 = vmatprep.subr.bf16.mxu0 0
    %1901 = vmatpush1.bf16.msra.mxu0 0
    %1902 = vmatprep.subr.bf16.mxu0 0
    %1903 = vmatpush1.bf16.msra.mxu0 0
    %1904 = vmatprep.subr.bf16.mxu0 0
    %1905 = vmatpush1.bf16.msra.mxu0 0
    %1906 = vmatprep.subr.bf16.mxu0 0
    %1907 = vmatpush1.bf16.msra.mxu0 0
    %1908 = vmatprep.mubr.bf16.mxu0 0
    %1909 = vmatmul.mubr.bf16.gmra.mrb[0].mxu0 %v1865
    %v1910 = vpop.f32.mrb[0].mxu0
    %v1911 = vadd.f32 0.0, %v1910
    %v1912 = vpop.f32.mrb[0].mxu0
    %v1913 = vpop.f32.mrb[0].mxu0
    %v1914 = vadd.f32 0.0, %v1913
    %v1915 = vpop.f32.mrb[0].mxu0
    %1916 = vmatprep.mubr.bf16.mxu0 0
    %1917 = vmatmul.mubr.bf16.gmra.mrb[0].mxu0 %v1868
    %v1918 = vpop.f32.mrb[0].mxu0
    %v1919 = vadd.f32 0.0, %v1918
    %v1920 = vpop.f32.mrb[0].mxu0
    %v1921 = vpop.f32.mrb[0].mxu0
    %v1922 = vadd.f32 0.0, %v1921
    %v1923 = vpop.f32.mrb[0].mxu0
    %1924 = vmatprep.mubr.bf16.mxu0 0
    %1925 = vmatmul.mubr.bf16.gmra.mrb[0].mxu0 %v1871
    %v1926 = vpop.f32.mrb[0].mxu0
    %v1927 = vadd.f32 0.0, %v1926
    %v1928 = vpop.f32.mrb[0].mxu0
    %v1929 = vpop.f32.mrb[0].mxu0
    %v1930 = vadd.f32 0.0, %v1929
    %v1931 = vpop.f32.mrb[0].mxu0
    %1932 = vmatprep.mubr.bf16.mxu0 0
    %1933 = vmatmul.mubr.bf16.gmra.mrb[0].mxu0 %v1874
    %v1934 = vpop.f32.mrb[0].mxu0
    %v1935 = vadd.f32 0.0, %v1934
    %v1936 = vpop.f32.mrb[0].mxu0
    %v1937 = vpop.f32.mrb[0].mxu0
    %v1938 = vadd.f32 0.0, %v1937
    %v1939 = vpop.f32.mrb[0].mxu0
    %1940 = vdwg.mxu0
    %v1941 = vadd.f32 %v1711, %v1911
    %v1942 = vadd.f32 %v1712, %v1914
    %v1943 = vadd.f32 %v1713, %v1919
    %v1944 = vadd.f32 %v1714, %v1922
    %v1945 = vadd.f32 %v1715, %v1927
    %v1946 = vadd.f32 %v1716, %v1930
    %v1947 = vadd.f32 %v1717, %v1935
    %v1948 = vadd.f32 %v1718, %v1938
    %s1949 = scalar_lea.vmem %s4, 448
    %v1950 = vld [vmem:[%s1949] sm:$0xf]
    %v1951 = vld [vmem:[%s1949 + $0x4] sm:$0xf]
    %v1952 = vld [vmem:[%s1949 + $0x8] sm:$0xf]
    %v1953 = vld [vmem:[%s1949 + $0xc] sm:$0xf]
    %v1954 = vld [vmem:[%s1949 + $0x10] sm:$0xf]
    %v1955 = vld [vmem:[%s1949 + $0x14] sm:$0xf]
    %v1956 = vld [vmem:[%s1949 + $0x18] sm:$0xf]
    %v1957 = vld [vmem:[%s1949 + $0x1c] sm:$0xf]
    %v1958 = vld [vmem:[%s1949 + $0x20] sm:$0xf]
    %v1959 = vld [vmem:[%s1949 + $0x24] sm:$0xf]
    %v1960 = vld [vmem:[%s1949 + $0x28] sm:$0xf]
    %v1961 = vld [vmem:[%s1949 + $0x2c] sm:$0xf]
    %v1962 = vld [vmem:[%s1949 + $0x30] sm:$0xf]
    %v1963 = vld [vmem:[%s1949 + $0x34] sm:$0xf]
    %v1964 = vld [vmem:[%s1949 + $0x38] sm:$0xf]
    %v1965 = vld [vmem:[%s1949 + $0x3c] sm:$0xf]
    %v1982 = vunpack.c.l.b16 %v1950
    %v1983 = vunpack.c.l.b16 %v1951
    %v1984 = vunpack.c.l.b16 %v1952
    %v1985 = vunpack.c.l.b16 %v1953
    %v1986 = vunpack.c.l.b16 %v1954
    %v1987 = vunpack.c.l.b16 %v1955
    %v1988 = vunpack.c.l.b16 %v1956
    %v1989 = vunpack.c.l.b16 %v1957
    %v1990 = vunpack.c.l.b16 %v1958
    %v1991 = vunpack.c.l.b16 %v1959
    %v1992 = vunpack.c.l.b16 %v1960
    %v1993 = vunpack.c.l.b16 %v1961
    %v1994 = vunpack.c.l.b16 %v1962
    %v1995 = vunpack.c.l.b16 %v1963
    %v1996 = vunpack.c.l.b16 %v1964
    %v1997 = vunpack.c.l.b16 %v1965
    %v1998 = vpack.c.b16 %v1983, %v1982
    %v1999 = vpack.c.b16 %v1985, %v1984
    %v2000 = vpack.c.b16 %v1987, %v1986
    %v2001 = vpack.c.b16 %v1989, %v1988
    %v2002 = vpack.c.b16 %v1991, %v1990
    %v2003 = vpack.c.b16 %v1993, %v1992
    %v2004 = vpack.c.b16 %v1995, %v1994
    %v2005 = vpack.c.b16 %v1997, %v1996
    %2014 = vmatprep.subr.bf16.mxu0 0
    %2015 = vmatpush1.bf16.msra.mxu0 %v1998
    %2016 = vmatprep.subr.bf16.mxu0 0
    %2017 = vmatpush1.bf16.msra.mxu0 %v1999
    %2018 = vmatprep.subr.bf16.mxu0 0
    %2019 = vmatpush1.bf16.msra.mxu0 %v2000
    %2020 = vmatprep.subr.bf16.mxu0 0
    %2021 = vmatpush1.bf16.msra.mxu0 %v2001
    %2022 = vmatprep.subr.bf16.mxu0 0
    %2023 = vmatpush1.bf16.msra.mxu0 %v2002
    %2024 = vmatprep.subr.bf16.mxu0 0
    %2025 = vmatpush1.bf16.msra.mxu0 %v2003
    %2026 = vmatprep.subr.bf16.mxu0 0
    %2027 = vmatpush1.bf16.msra.mxu0 %v2004
    %2028 = vmatprep.subr.bf16.mxu0 0
    %2029 = vmatpush1.bf16.msra.mxu0 %v2005
    %2030 = vmatprep.subr.bf16.mxu0 0
    %2031 = vmatpush1.bf16.msra.mxu0 0
    %2032 = vmatprep.subr.bf16.mxu0 0
    %2033 = vmatpush1.bf16.msra.mxu0 0
    %2034 = vmatprep.subr.bf16.mxu0 0
    %2035 = vmatpush1.bf16.msra.mxu0 0
    %2036 = vmatprep.subr.bf16.mxu0 0
    %2037 = vmatpush1.bf16.msra.mxu0 0
    %2038 = vmatprep.subr.bf16.mxu0 0
    %2039 = vmatpush1.bf16.msra.mxu0 0
    %2040 = vmatprep.subr.bf16.mxu0 0
    %2041 = vmatpush1.bf16.msra.mxu0 0
    %2042 = vmatprep.subr.bf16.mxu0 0
    %2043 = vmatpush1.bf16.msra.mxu0 0
    %2044 = vmatprep.subr.bf16.mxu0 0
    %2045 = vmatpush1.bf16.msra.mxu0 0
    %2046 = vmatprep.mubr.bf16.mxu0 0
    %2047 = vmatmul.mubr.bf16.gmra.mrb[0].mxu0 %v354
    %v2048 = vpop.f32.mrb[0].mxu0
    %v2049 = vadd.f32 0.0, %v2048
    %v2050 = vpop.f32.mrb[0].mxu0
    %v2051 = vpop.f32.mrb[0].mxu0
    %v2052 = vadd.f32 0.0, %v2051
    %v2053 = vpop.f32.mrb[0].mxu0
    %2054 = vmatprep.mubr.bf16.mxu0 0
    %2055 = vmatmul.mubr.bf16.gmra.mrb[0].mxu0 %v355
    %v2056 = vpop.f32.mrb[0].mxu0
    %v2057 = vadd.f32 0.0, %v2056
    %v2058 = vpop.f32.mrb[0].mxu0
    %v2059 = vpop.f32.mrb[0].mxu0
    %v2060 = vadd.f32 0.0, %v2059
    %v2061 = vpop.f32.mrb[0].mxu0
    %2062 = vdwg.mxu0
    %s2063 = scalar_lea.vmem %s5, 224
    %v2064 = vld [vmem:[%s2063] sm:$0xf]
    %v2065 = vld [vmem:[%s2063 + $0x4] sm:$0xf]
    %v2066 = vld [vmem:[%s2063 + $0x8] sm:$0xf]
    %v2067 = vld [vmem:[%s2063 + $0xc] sm:$0xf]
    %v2068 = vld [vmem:[%s2063 + $0x10] sm:$0xf]
    %v2069 = vld [vmem:[%s2063 + $0x14] sm:$0xf]
    %v2070 = vld [vmem:[%s2063 + $0x18] sm:$0xf]
    %v2071 = vld [vmem:[%s2063 + $0x1c] sm:$0xf]
    %v2072 = vpack.c.bf16 %v2052, %v2049
    %v2073 = vpack.c.bf16 %v2060, %v2057
    %v2082 = vunpack.c.l.b16 %v2064
    %v2083 = vunpack.c.l.b16 %v2065
    %v2084 = vunpack.c.l.b16 %v2066
    %v2085 = vunpack.c.l.b16 %v2067
    %v2086 = vunpack.c.l.b16 %v2068
    %v2087 = vunpack.c.l.b16 %v2069
    %v2088 = vunpack.c.l.b16 %v2070
    %v2089 = vunpack.c.l.b16 %v2071
    %v2090 = vpack.c.b16 %v2083, %v2082
    %v2091 = vpack.c.b16 %v2085, %v2084
    %v2092 = vpack.c.b16 %v2087, %v2086
    %v2093 = vpack.c.b16 %v2089, %v2088
    %v2095 = vsel %vm624, %v2090, 0
    %v2098 = vsel %vm624, %v2091, 0
    %v2101 = vsel %vm624, %v2092, 0
    %v2104 = vsel %vm624, %v2093, 0
    %2106 = vmatprep.subr.bf16.mxu0 0
    %2107 = vmatpush1.bf16.msra.mxu0 %v2072
    %2108 = vmatprep.subr.bf16.mxu0 0
    %2109 = vmatpush1.bf16.msra.mxu0 %v2073
    %2110 = vmatprep.subr.bf16.mxu0 0
    %2111 = vmatpush1.bf16.msra.mxu0 0
    %2112 = vmatprep.subr.bf16.mxu0 0
    %2113 = vmatpush1.bf16.msra.mxu0 0
    %2114 = vmatprep.subr.bf16.mxu0 0
    %2115 = vmatpush1.bf16.msra.mxu0 0
    %2116 = vmatprep.subr.bf16.mxu0 0
    %2117 = vmatpush1.bf16.msra.mxu0 0
    %2118 = vmatprep.subr.bf16.mxu0 0
    %2119 = vmatpush1.bf16.msra.mxu0 0
    %2120 = vmatprep.subr.bf16.mxu0 0
    %2121 = vmatpush1.bf16.msra.mxu0 0
    %2122 = vmatprep.subr.bf16.mxu0 0
    %2123 = vmatpush1.bf16.msra.mxu0 0
    %2124 = vmatprep.subr.bf16.mxu0 0
    %2125 = vmatpush1.bf16.msra.mxu0 0
    %2126 = vmatprep.subr.bf16.mxu0 0
    %2127 = vmatpush1.bf16.msra.mxu0 0
    %2128 = vmatprep.subr.bf16.mxu0 0
    %2129 = vmatpush1.bf16.msra.mxu0 0
    %2130 = vmatprep.subr.bf16.mxu0 0
    %2131 = vmatpush1.bf16.msra.mxu0 0
    %2132 = vmatprep.subr.bf16.mxu0 0
    %2133 = vmatpush1.bf16.msra.mxu0 0
    %2134 = vmatprep.subr.bf16.mxu0 0
    %2135 = vmatpush1.bf16.msra.mxu0 0
    %2136 = vmatprep.subr.bf16.mxu0 0
    %2137 = vmatpush1.bf16.msra.mxu0 0
    %2138 = vmatprep.mubr.bf16.mxu0 0
    %2139 = vmatmul.mubr.bf16.gmra.mrb[0].mxu0 %v2095
    %v2140 = vpop.f32.mrb[0].mxu0
    %v2141 = vadd.f32 0.0, %v2140
    %v2142 = vpop.f32.mrb[0].mxu0
    %v2143 = vpop.f32.mrb[0].mxu0
    %v2144 = vadd.f32 0.0, %v2143
    %v2145 = vpop.f32.mrb[0].mxu0
    %2146 = vmatprep.mubr.bf16.mxu0 0
    %2147 = vmatmul.mubr.bf16.gmra.mrb[0].mxu0 %v2098
    %v2148 = vpop.f32.mrb[0].mxu0
    %v2149 = vadd.f32 0.0, %v2148
    %v2150 = vpop.f32.mrb[0].mxu0
    %v2151 = vpop.f32.mrb[0].mxu0
    %v2152 = vadd.f32 0.0, %v2151
    %v2153 = vpop.f32.mrb[0].mxu0
    %2154 = vmatprep.mubr.bf16.mxu0 0
    %2155 = vmatmul.mubr.bf16.gmra.mrb[0].mxu0 %v2101
    %v2156 = vpop.f32.mrb[0].mxu0
    %v2157 = vadd.f32 0.0, %v2156
    %v2158 = vpop.f32.mrb[0].mxu0
    %v2159 = vpop.f32.mrb[0].mxu0
    %v2160 = vadd.f32 0.0, %v2159
    %v2161 = vpop.f32.mrb[0].mxu0
    %2162 = vmatprep.mubr.bf16.mxu0 0
    %2163 = vmatmul.mubr.bf16.gmra.mrb[0].mxu0 %v2104
    %v2164 = vpop.f32.mrb[0].mxu0
    %v2165 = vadd.f32 0.0, %v2164
    %v2166 = vpop.f32.mrb[0].mxu0
    %v2167 = vpop.f32.mrb[0].mxu0
    %v2168 = vadd.f32 0.0, %v2167
    %v2169 = vpop.f32.mrb[0].mxu0
    %2170 = vdwg.mxu0
    %v2171 = vadd.f32 %v1941, %v2141
    %v2172 = vadd.f32 %v1942, %v2144
    %v2173 = vadd.f32 %v1943, %v2149
    %v2174 = vadd.f32 %v1944, %v2152
    %v2175 = vadd.f32 %v1945, %v2157
    %v2176 = vadd.f32 %v1946, %v2160
    %v2177 = vadd.f32 %v1947, %v2165
    %v2178 = vadd.f32 %v1948, %v2168
    %s2179 = scalar_lea.vmem %s4, 512
    %v2180 = vld [vmem:[%s2179] sm:$0xf]
    %v2181 = vld [vmem:[%s2179 + $0x4] sm:$0xf]
    %v2182 = vld [vmem:[%s2179 + $0x8] sm:$0xf]
    %v2183 = vld [vmem:[%s2179 + $0xc] sm:$0xf]
    %v2184 = vld [vmem:[%s2179 + $0x10] sm:$0xf]
    %v2185 = vld [vmem:[%s2179 + $0x14] sm:$0xf]
    %v2186 = vld [vmem:[%s2179 + $0x18] sm:$0xf]
    %v2187 = vld [vmem:[%s2179 + $0x1c] sm:$0xf]
    %v2188 = vld [vmem:[%s2179 + $0x20] sm:$0xf]
    %v2189 = vld [vmem:[%s2179 + $0x24] sm:$0xf]
    %v2190 = vld [vmem:[%s2179 + $0x28] sm:$0xf]
    %v2191 = vld [vmem:[%s2179 + $0x2c] sm:$0xf]
    %v2192 = vld [vmem:[%s2179 + $0x30] sm:$0xf]
    %v2193 = vld [vmem:[%s2179 + $0x34] sm:$0xf]
    %v2194 = vld [vmem:[%s2179 + $0x38] sm:$0xf]
    %v2195 = vld [vmem:[%s2179 + $0x3c] sm:$0xf]
    %v2212 = vunpack.c.l.b16 %v2180
    %v2213 = vunpack.c.l.b16 %v2181
    %v2214 = vunpack.c.l.b16 %v2182
    %v2215 = vunpack.c.l.b16 %v2183
    %v2216 = vunpack.c.l.b16 %v2184
    %v2217 = vunpack.c.l.b16 %v2185
    %v2218 = vunpack.c.l.b16 %v2186
    %v2219 = vunpack.c.l.b16 %v2187
    %v2220 = vunpack.c.l.b16 %v2188
    %v2221 = vunpack.c.l.b16 %v2189
    %v2222 = vunpack.c.l.b16 %v2190
    %v2223 = vunpack.c.l.b16 %v2191
    %v2224 = vunpack.c.l.b16 %v2192
    %v2225 = vunpack.c.l.b16 %v2193
    %v2226 = vunpack.c.l.b16 %v2194
    %v2227 = vunpack.c.l.b16 %v2195
    %v2228 = vpack.c.b16 %v2213, %v2212
    %v2229 = vpack.c.b16 %v2215, %v2214
    %v2230 = vpack.c.b16 %v2217, %v2216
    %v2231 = vpack.c.b16 %v2219, %v2218
    %v2232 = vpack.c.b16 %v2221, %v2220
    %v2233 = vpack.c.b16 %v2223, %v2222
    %v2234 = vpack.c.b16 %v2225, %v2224
    %v2235 = vpack.c.b16 %v2227, %v2226
    %2244 = vmatprep.subr.bf16.mxu0 0
    %2245 = vmatpush1.bf16.msra.mxu0 %v2228
    %2246 = vmatprep.subr.bf16.mxu0 0
    %2247 = vmatpush1.bf16.msra.mxu0 %v2229
    %2248 = vmatprep.subr.bf16.mxu0 0
    %2249 = vmatpush1.bf16.msra.mxu0 %v2230
    %2250 = vmatprep.subr.bf16.mxu0 0
    %2251 = vmatpush1.bf16.msra.mxu0 %v2231
    %2252 = vmatprep.subr.bf16.mxu0 0
    %2253 = vmatpush1.bf16.msra.mxu0 %v2232
    %2254 = vmatprep.subr.bf16.mxu0 0
    %2255 = vmatpush1.bf16.msra.mxu0 %v2233
    %2256 = vmatprep.subr.bf16.mxu0 0
    %2257 = vmatpush1.bf16.msra.mxu0 %v2234
    %2258 = vmatprep.subr.bf16.mxu0 0
    %2259 = vmatpush1.bf16.msra.mxu0 %v2235
    %2260 = vmatprep.subr.bf16.mxu0 0
    %2261 = vmatpush1.bf16.msra.mxu0 0
    %2262 = vmatprep.subr.bf16.mxu0 0
    %2263 = vmatpush1.bf16.msra.mxu0 0
    %2264 = vmatprep.subr.bf16.mxu0 0
    %2265 = vmatpush1.bf16.msra.mxu0 0
    %2266 = vmatprep.subr.bf16.mxu0 0
    %2267 = vmatpush1.bf16.msra.mxu0 0
    %2268 = vmatprep.subr.bf16.mxu0 0
    %2269 = vmatpush1.bf16.msra.mxu0 0
    %2270 = vmatprep.subr.bf16.mxu0 0
    %2271 = vmatpush1.bf16.msra.mxu0 0
    %2272 = vmatprep.subr.bf16.mxu0 0
    %2273 = vmatpush1.bf16.msra.mxu0 0
    %2274 = vmatprep.subr.bf16.mxu0 0
    %2275 = vmatpush1.bf16.msra.mxu0 0
    %2276 = vmatprep.mubr.bf16.mxu0 0
    %2277 = vmatmul.mubr.bf16.gmra.mrb[0].mxu0 %v354
    %v2278 = vpop.f32.mrb[0].mxu0
    %v2279 = vadd.f32 0.0, %v2278
    %v2280 = vpop.f32.mrb[0].mxu0
    %v2281 = vpop.f32.mrb[0].mxu0
    %v2282 = vadd.f32 0.0, %v2281
    %v2283 = vpop.f32.mrb[0].mxu0
    %2284 = vmatprep.mubr.bf16.mxu0 0
    %2285 = vmatmul.mubr.bf16.gmra.mrb[0].mxu0 %v355
    %v2286 = vpop.f32.mrb[0].mxu0
    %v2287 = vadd.f32 0.0, %v2286
    %v2288 = vpop.f32.mrb[0].mxu0
    %v2289 = vpop.f32.mrb[0].mxu0
    %v2290 = vadd.f32 0.0, %v2289
    %v2291 = vpop.f32.mrb[0].mxu0
    %2292 = vdwg.mxu0
    %s2293 = scalar_lea.vmem %s5, 256
    %v2294 = vld [vmem:[%s2293] sm:$0xf]
    %v2295 = vld [vmem:[%s2293 + $0x4] sm:$0xf]
    %v2296 = vld [vmem:[%s2293 + $0x8] sm:$0xf]
    %v2297 = vld [vmem:[%s2293 + $0xc] sm:$0xf]
    %v2298 = vld [vmem:[%s2293 + $0x10] sm:$0xf]
    %v2299 = vld [vmem:[%s2293 + $0x14] sm:$0xf]
    %v2300 = vld [vmem:[%s2293 + $0x18] sm:$0xf]
    %v2301 = vld [vmem:[%s2293 + $0x1c] sm:$0xf]
    %v2302 = vpack.c.bf16 %v2282, %v2279
    %v2303 = vpack.c.bf16 %v2290, %v2287
    %v2312 = vunpack.c.l.b16 %v2294
    %v2313 = vunpack.c.l.b16 %v2295
    %v2314 = vunpack.c.l.b16 %v2296
    %v2315 = vunpack.c.l.b16 %v2297
    %v2316 = vunpack.c.l.b16 %v2298
    %v2317 = vunpack.c.l.b16 %v2299
    %v2318 = vunpack.c.l.b16 %v2300
    %v2319 = vunpack.c.l.b16 %v2301
    %v2320 = vpack.c.b16 %v2313, %v2312
    %v2321 = vpack.c.b16 %v2315, %v2314
    %v2322 = vpack.c.b16 %v2317, %v2316
    %v2323 = vpack.c.b16 %v2319, %v2318
    %v2325 = vsel %vm624, %v2320, 0
    %v2328 = vsel %vm624, %v2321, 0
    %v2331 = vsel %vm624, %v2322, 0
    %v2334 = vsel %vm624, %v2323, 0
    %2336 = vmatprep.subr.bf16.mxu0 0
    %2337 = vmatpush1.bf16.msra.mxu0 %v2302
    %2338 = vmatprep.subr.bf16.mxu0 0
    %2339 = vmatpush1.bf16.msra.mxu0 %v2303
    %2340 = vmatprep.subr.bf16.mxu0 0
    %2341 = vmatpush1.bf16.msra.mxu0 0
    %2342 = vmatprep.subr.bf16.mxu0 0
    %2343 = vmatpush1.bf16.msra.mxu0 0
    %2344 = vmatprep.subr.bf16.mxu0 0
    %2345 = vmatpush1.bf16.msra.mxu0 0
    %2346 = vmatprep.subr.bf16.mxu0 0
    %2347 = vmatpush1.bf16.msra.mxu0 0
    %2348 = vmatprep.subr.bf16.mxu0 0
    %2349 = vmatpush1.bf16.msra.mxu0 0
    %2350 = vmatprep.subr.bf16.mxu0 0
    %2351 = vmatpush1.bf16.msra.mxu0 0
    %2352 = vmatprep.subr.bf16.mxu0 0
    %2353 = vmatpush1.bf16.msra.mxu0 0
    %2354 = vmatprep.subr.bf16.mxu0 0
    %2355 = vmatpush1.bf16.msra.mxu0 0
    %2356 = vmatprep.subr.bf16.mxu0 0
    %2357 = vmatpush1.bf16.msra.mxu0 0
    %2358 = vmatprep.subr.bf16.mxu0 0
    %2359 = vmatpush1.bf16.msra.mxu0 0
    %2360 = vmatprep.subr.bf16.mxu0 0
    %2361 = vmatpush1.bf16.msra.mxu0 0
    %2362 = vmatprep.subr.bf16.mxu0 0
    %2363 = vmatpush1.bf16.msra.mxu0 0
    %2364 = vmatprep.subr.bf16.mxu0 0
    %2365 = vmatpush1.bf16.msra.mxu0 0
    %2366 = vmatprep.subr.bf16.mxu0 0
    %2367 = vmatpush1.bf16.msra.mxu0 0
    %2368 = vmatprep.mubr.bf16.mxu0 0
    %2369 = vmatmul.mubr.bf16.gmra.mrb[0].mxu0 %v2325
    %v2370 = vpop.f32.mrb[0].mxu0
    %v2371 = vadd.f32 0.0, %v2370
    %v2372 = vpop.f32.mrb[0].mxu0
    %v2373 = vpop.f32.mrb[0].mxu0
    %v2374 = vadd.f32 0.0, %v2373
    %v2375 = vpop.f32.mrb[0].mxu0
    %2376 = vmatprep.mubr.bf16.mxu0 0
    %2377 = vmatmul.mubr.bf16.gmra.mrb[0].mxu0 %v2328
    %v2378 = vpop.f32.mrb[0].mxu0
    %v2379 = vadd.f32 0.0, %v2378
    %v2380 = vpop.f32.mrb[0].mxu0
    %v2381 = vpop.f32.mrb[0].mxu0
    %v2382 = vadd.f32 0.0, %v2381
    %v2383 = vpop.f32.mrb[0].mxu0
    %2384 = vmatprep.mubr.bf16.mxu0 0
    %2385 = vmatmul.mubr.bf16.gmra.mrb[0].mxu0 %v2331
    %v2386 = vpop.f32.mrb[0].mxu0
    %v2387 = vadd.f32 0.0, %v2386
    %v2388 = vpop.f32.mrb[0].mxu0
    %v2389 = vpop.f32.mrb[0].mxu0
    %v2390 = vadd.f32 0.0, %v2389
    %v2391 = vpop.f32.mrb[0].mxu0
    %2392 = vmatprep.mubr.bf16.mxu0 0
    %2393 = vmatmul.mubr.bf16.gmra.mrb[0].mxu0 %v2334
    %v2394 = vpop.f32.mrb[0].mxu0
    %v2395 = vadd.f32 0.0, %v2394
    %v2396 = vpop.f32.mrb[0].mxu0
    %v2397 = vpop.f32.mrb[0].mxu0
    %v2398 = vadd.f32 0.0, %v2397
    %v2399 = vpop.f32.mrb[0].mxu0
    %2400 = vdwg.mxu0
    %v2401 = vadd.f32 %v2171, %v2371
    %v2402 = vadd.f32 %v2172, %v2374
    %v2403 = vadd.f32 %v2173, %v2379
    %v2404 = vadd.f32 %v2174, %v2382
    %v2405 = vadd.f32 %v2175, %v2387
    %v2406 = vadd.f32 %v2176, %v2390
    %v2407 = vadd.f32 %v2177, %v2395
    %v2408 = vadd.f32 %v2178, %v2398
    %s2409 = scalar_lea.vmem %s4, 576
    %v2410 = vld [vmem:[%s2409] sm:$0xf]
    %v2411 = vld [vmem:[%s2409 + $0x4] sm:$0xf]
    %v2412 = vld [vmem:[%s2409 + $0x8] sm:$0xf]
    %v2413 = vld [vmem:[%s2409 + $0xc] sm:$0xf]
    %v2414 = vld [vmem:[%s2409 + $0x10] sm:$0xf]
    %v2415 = vld [vmem:[%s2409 + $0x14] sm:$0xf]
    %v2416 = vld [vmem:[%s2409 + $0x18] sm:$0xf]
    %v2417 = vld [vmem:[%s2409 + $0x1c] sm:$0xf]
    %v2418 = vld [vmem:[%s2409 + $0x20] sm:$0xf]
    %v2419 = vld [vmem:[%s2409 + $0x24] sm:$0xf]
    %v2420 = vld [vmem:[%s2409 + $0x28] sm:$0xf]
    %v2421 = vld [vmem:[%s2409 + $0x2c] sm:$0xf]
    %v2422 = vld [vmem:[%s2409 + $0x30] sm:$0xf]
    %v2423 = vld [vmem:[%s2409 + $0x34] sm:$0xf]
    %v2424 = vld [vmem:[%s2409 + $0x38] sm:$0xf]
    %v2425 = vld [vmem:[%s2409 + $0x3c] sm:$0xf]
    %v2442 = vunpack.c.l.b16 %v2410
    %v2443 = vunpack.c.l.b16 %v2411
    %v2444 = vunpack.c.l.b16 %v2412
    %v2445 = vunpack.c.l.b16 %v2413
    %v2446 = vunpack.c.l.b16 %v2414
    %v2447 = vunpack.c.l.b16 %v2415
    %v2448 = vunpack.c.l.b16 %v2416
    %v2449 = vunpack.c.l.b16 %v2417
    %v2450 = vunpack.c.l.b16 %v2418
    %v2451 = vunpack.c.l.b16 %v2419
    %v2452 = vunpack.c.l.b16 %v2420
    %v2453 = vunpack.c.l.b16 %v2421
    %v2454 = vunpack.c.l.b16 %v2422
    %v2455 = vunpack.c.l.b16 %v2423
    %v2456 = vunpack.c.l.b16 %v2424
    %v2457 = vunpack.c.l.b16 %v2425
    %v2458 = vpack.c.b16 %v2443, %v2442
    %v2459 = vpack.c.b16 %v2445, %v2444
    %v2460 = vpack.c.b16 %v2447, %v2446
    %v2461 = vpack.c.b16 %v2449, %v2448
    %v2462 = vpack.c.b16 %v2451, %v2450
    %v2463 = vpack.c.b16 %v2453, %v2452
    %v2464 = vpack.c.b16 %v2455, %v2454
    %v2465 = vpack.c.b16 %v2457, %v2456
    %2474 = vmatprep.subr.bf16.mxu0 0
    %2475 = vmatpush1.bf16.msra.mxu0 %v2458
    %2476 = vmatprep.subr.bf16.mxu0 0
    %2477 = vmatpush1.bf16.msra.mxu0 %v2459
    %2478 = vmatprep.subr.bf16.mxu0 0
    %2479 = vmatpush1.bf16.msra.mxu0 %v2460
    %2480 = vmatprep.subr.bf16.mxu0 0
    %2481 = vmatpush1.bf16.msra.mxu0 %v2461
    %2482 = vmatprep.subr.bf16.mxu0 0
    %2483 = vmatpush1.bf16.msra.mxu0 %v2462
    %2484 = vmatprep.subr.bf16.mxu0 0
    %2485 = vmatpush1.bf16.msra.mxu0 %v2463
    %2486 = vmatprep.subr.bf16.mxu0 0
    %2487 = vmatpush1.bf16.msra.mxu0 %v2464
    %2488 = vmatprep.subr.bf16.mxu0 0
    %2489 = vmatpush1.bf16.msra.mxu0 %v2465
    %2490 = vmatprep.subr.bf16.mxu0 0
    %2491 = vmatpush1.bf16.msra.mxu0 0
    %2492 = vmatprep.subr.bf16.mxu0 0
    %2493 = vmatpush1.bf16.msra.mxu0 0
    %2494 = vmatprep.subr.bf16.mxu0 0
    %2495 = vmatpush1.bf16.msra.mxu0 0
    %2496 = vmatprep.subr.bf16.mxu0 0
    %2497 = vmatpush1.bf16.msra.mxu0 0
    %2498 = vmatprep.subr.bf16.mxu0 0
    %2499 = vmatpush1.bf16.msra.mxu0 0
    %2500 = vmatprep.subr.bf16.mxu0 0
    %2501 = vmatpush1.bf16.msra.mxu0 0
    %2502 = vmatprep.subr.bf16.mxu0 0
    %2503 = vmatpush1.bf16.msra.mxu0 0
    %2504 = vmatprep.subr.bf16.mxu0 0
    %2505 = vmatpush1.bf16.msra.mxu0 0
    %2506 = vmatprep.mubr.bf16.mxu0 0
    %2507 = vmatmul.mubr.bf16.gmra.mrb[0].mxu0 %v354
    %v2508 = vpop.f32.mrb[0].mxu0
    %v2509 = vadd.f32 0.0, %v2508
    %v2510 = vpop.f32.mrb[0].mxu0
    %v2511 = vpop.f32.mrb[0].mxu0
    %v2512 = vadd.f32 0.0, %v2511
    %v2513 = vpop.f32.mrb[0].mxu0
    %2514 = vmatprep.mubr.bf16.mxu0 0
    %2515 = vmatmul.mubr.bf16.gmra.mrb[0].mxu0 %v355
    %v2516 = vpop.f32.mrb[0].mxu0
    %v2517 = vadd.f32 0.0, %v2516
    %v2518 = vpop.f32.mrb[0].mxu0
    %v2519 = vpop.f32.mrb[0].mxu0
    %v2520 = vadd.f32 0.0, %v2519
    %v2521 = vpop.f32.mrb[0].mxu0
    %2522 = vdwg.mxu0
    %s2523 = scalar_lea.vmem %s5, 288
    %v2524 = vld [vmem:[%s2523] sm:$0xf]
    %v2525 = vld [vmem:[%s2523 + $0x4] sm:$0xf]
    %v2526 = vld [vmem:[%s2523 + $0x8] sm:$0xf]
    %v2527 = vld [vmem:[%s2523 + $0xc] sm:$0xf]
    %v2528 = vld [vmem:[%s2523 + $0x10] sm:$0xf]
    %v2529 = vld [vmem:[%s2523 + $0x14] sm:$0xf]
    %v2530 = vld [vmem:[%s2523 + $0x18] sm:$0xf]
    %v2531 = vld [vmem:[%s2523 + $0x1c] sm:$0xf]
    %v2532 = vpack.c.bf16 %v2512, %v2509
    %v2533 = vpack.c.bf16 %v2520, %v2517
    %v2542 = vunpack.c.l.b16 %v2524
    %v2543 = vunpack.c.l.b16 %v2525
    %v2544 = vunpack.c.l.b16 %v2526
    %v2545 = vunpack.c.l.b16 %v2527
    %v2546 = vunpack.c.l.b16 %v2528
    %v2547 = vunpack.c.l.b16 %v2529
    %v2548 = vunpack.c.l.b16 %v2530
    %v2549 = vunpack.c.l.b16 %v2531
    %v2550 = vpack.c.b16 %v2543, %v2542
    %v2551 = vpack.c.b16 %v2545, %v2544
    %v2552 = vpack.c.b16 %v2547, %v2546
    %v2553 = vpack.c.b16 %v2549, %v2548
    %v2555 = vsel %vm624, %v2550, 0
    %v2558 = vsel %vm624, %v2551, 0
    %v2561 = vsel %vm624, %v2552, 0
    %v2564 = vsel %vm624, %v2553, 0
    %2566 = vmatprep.subr.bf16.mxu0 0
    %2567 = vmatpush1.bf16.msra.mxu0 %v2532
    %2568 = vmatprep.subr.bf16.mxu0 0
    %2569 = vmatpush1.bf16.msra.mxu0 %v2533
    %2570 = vmatprep.subr.bf16.mxu0 0
    %2571 = vmatpush1.bf16.msra.mxu0 0
    %2572 = vmatprep.subr.bf16.mxu0 0
    %2573 = vmatpush1.bf16.msra.mxu0 0
    %2574 = vmatprep.subr.bf16.mxu0 0
    %2575 = vmatpush1.bf16.msra.mxu0 0
    %2576 = vmatprep.subr.bf16.mxu0 0
    %2577 = vmatpush1.bf16.msra.mxu0 0
    %2578 = vmatprep.subr.bf16.mxu0 0
    %2579 = vmatpush1.bf16.msra.mxu0 0
    %2580 = vmatprep.subr.bf16.mxu0 0
    %2581 = vmatpush1.bf16.msra.mxu0 0
    %2582 = vmatprep.subr.bf16.mxu0 0
    %2583 = vmatpush1.bf16.msra.mxu0 0
    %2584 = vmatprep.subr.bf16.mxu0 0
    %2585 = vmatpush1.bf16.msra.mxu0 0
    %2586 = vmatprep.subr.bf16.mxu0 0
    %2587 = vmatpush1.bf16.msra.mxu0 0
    %2588 = vmatprep.subr.bf16.mxu0 0
    %2589 = vmatpush1.bf16.msra.mxu0 0
    %2590 = vmatprep.subr.bf16.mxu0 0
    %2591 = vmatpush1.bf16.msra.mxu0 0
    %2592 = vmatprep.subr.bf16.mxu0 0
    %2593 = vmatpush1.bf16.msra.mxu0 0
    %2594 = vmatprep.subr.bf16.mxu0 0
    %2595 = vmatpush1.bf16.msra.mxu0 0
    %2596 = vmatprep.subr.bf16.mxu0 0
    %2597 = vmatpush1.bf16.msra.mxu0 0
    %2598 = vmatprep.mubr.bf16.mxu0 0
    %2599 = vmatmul.mubr.bf16.gmra.mrb[0].mxu0 %v2555
    %v2600 = vpop.f32.mrb[0].mxu0
    %v2601 = vadd.f32 0.0, %v2600
    %v2602 = vpop.f32.mrb[0].mxu0
    %v2603 = vpop.f32.mrb[0].mxu0
    %v2604 = vadd.f32 0.0, %v2603
    %v2605 = vpop.f32.mrb[0].mxu0
    %2606 = vmatprep.mubr.bf16.mxu0 0
    %2607 = vmatmul.mubr.bf16.gmra.mrb[0].mxu0 %v2558
    %v2608 = vpop.f32.mrb[0].mxu0
    %v2609 = vadd.f32 0.0, %v2608
    %v2610 = vpop.f32.mrb[0].mxu0
    %v2611 = vpop.f32.mrb[0].mxu0
    %v2612 = vadd.f32 0.0, %v2611
    %v2613 = vpop.f32.mrb[0].mxu0
    %2614 = vmatprep.mubr.bf16.mxu0 0
    %2615 = vmatmul.mubr.bf16.gmra.mrb[0].mxu0 %v2561
    %v2616 = vpop.f32.mrb[0].mxu0
    %v2617 = vadd.f32 0.0, %v2616
    %v2618 = vpop.f32.mrb[0].mxu0
    %v2619 = vpop.f32.mrb[0].mxu0
    %v2620 = vadd.f32 0.0, %v2619
    %v2621 = vpop.f32.mrb[0].mxu0
    %2622 = vmatprep.mubr.bf16.mxu0 0
    %2623 = vmatmul.mubr.bf16.gmra.mrb[0].mxu0 %v2564
    %v2624 = vpop.f32.mrb[0].mxu0
    %v2625 = vadd.f32 0.0, %v2624
    %v2626 = vpop.f32.mrb[0].mxu0
    %v2627 = vpop.f32.mrb[0].mxu0
    %v2628 = vadd.f32 0.0, %v2627
    %v2629 = vpop.f32.mrb[0].mxu0
    %2630 = vdwg.mxu0
    %v2631 = vadd.f32 %v2401, %v2601
    %v2632 = vadd.f32 %v2402, %v2604
    %v2633 = vadd.f32 %v2403, %v2609
    %v2634 = vadd.f32 %v2404, %v2612
    %v2635 = vadd.f32 %v2405, %v2617
    %v2636 = vadd.f32 %v2406, %v2620
    %v2637 = vadd.f32 %v2407, %v2625
    %v2638 = vadd.f32 %v2408, %v2628
    %s2639 = scalar_lea.vmem %s4, 640
    %v2640 = vld [vmem:[%s2639] sm:$0xf]
    %v2641 = vld [vmem:[%s2639 + $0x4] sm:$0xf]
    %v2642 = vld [vmem:[%s2639 + $0x8] sm:$0xf]
    %v2643 = vld [vmem:[%s2639 + $0xc] sm:$0xf]
    %v2644 = vld [vmem:[%s2639 + $0x10] sm:$0xf]
    %v2645 = vld [vmem:[%s2639 + $0x14] sm:$0xf]
    %v2646 = vld [vmem:[%s2639 + $0x18] sm:$0xf]
    %v2647 = vld [vmem:[%s2639 + $0x1c] sm:$0xf]
    %v2648 = vld [vmem:[%s2639 + $0x20] sm:$0xf]
    %v2649 = vld [vmem:[%s2639 + $0x24] sm:$0xf]
    %v2650 = vld [vmem:[%s2639 + $0x28] sm:$0xf]
    %v2651 = vld [vmem:[%s2639 + $0x2c] sm:$0xf]
    %v2652 = vld [vmem:[%s2639 + $0x30] sm:$0xf]
    %v2653 = vld [vmem:[%s2639 + $0x34] sm:$0xf]
    %v2654 = vld [vmem:[%s2639 + $0x38] sm:$0xf]
    %v2655 = vld [vmem:[%s2639 + $0x3c] sm:$0xf]
    %v2672 = vunpack.c.l.b16 %v2640
    %v2673 = vunpack.c.l.b16 %v2641
    %v2674 = vunpack.c.l.b16 %v2642
    %v2675 = vunpack.c.l.b16 %v2643
    %v2676 = vunpack.c.l.b16 %v2644
    %v2677 = vunpack.c.l.b16 %v2645
    %v2678 = vunpack.c.l.b16 %v2646
    %v2679 = vunpack.c.l.b16 %v2647
    %v2680 = vunpack.c.l.b16 %v2648
    %v2681 = vunpack.c.l.b16 %v2649
    %v2682 = vunpack.c.l.b16 %v2650
    %v2683 = vunpack.c.l.b16 %v2651
    %v2684 = vunpack.c.l.b16 %v2652
    %v2685 = vunpack.c.l.b16 %v2653
    %v2686 = vunpack.c.l.b16 %v2654
    %v2687 = vunpack.c.l.b16 %v2655
    %v2688 = vpack.c.b16 %v2673, %v2672
    %v2689 = vpack.c.b16 %v2675, %v2674
    %v2690 = vpack.c.b16 %v2677, %v2676
    %v2691 = vpack.c.b16 %v2679, %v2678
    %v2692 = vpack.c.b16 %v2681, %v2680
    %v2693 = vpack.c.b16 %v2683, %v2682
    %v2694 = vpack.c.b16 %v2685, %v2684
    %v2695 = vpack.c.b16 %v2687, %v2686
    %2704 = vmatprep.subr.bf16.mxu0 0
    %2705 = vmatpush1.bf16.msra.mxu0 %v2688
    %2706 = vmatprep.subr.bf16.mxu0 0
    %2707 = vmatpush1.bf16.msra.mxu0 %v2689
    %2708 = vmatprep.subr.bf16.mxu0 0
    %2709 = vmatpush1.bf16.msra.mxu0 %v2690
    %2710 = vmatprep.subr.bf16.mxu0 0
    %2711 = vmatpush1.bf16.msra.mxu0 %v2691
    %2712 = vmatprep.subr.bf16.mxu0 0
    %2713 = vmatpush1.bf16.msra.mxu0 %v2692
    %2714 = vmatprep.subr.bf16.mxu0 0
    %2715 = vmatpush1.bf16.msra.mxu0 %v2693
    %2716 = vmatprep.subr.bf16.mxu0 0
    %2717 = vmatpush1.bf16.msra.mxu0 %v2694
    %2718 = vmatprep.subr.bf16.mxu0 0
    %2719 = vmatpush1.bf16.msra.mxu0 %v2695
    %2720 = vmatprep.subr.bf16.mxu0 0
    %2721 = vmatpush1.bf16.msra.mxu0 0
    %2722 = vmatprep.subr.bf16.mxu0 0
    %2723 = vmatpush1.bf16.msra.mxu0 0
    %2724 = vmatprep.subr.bf16.mxu0 0
    %2725 = vmatpush1.bf16.msra.mxu0 0
    %2726 = vmatprep.subr.bf16.mxu0 0
    %2727 = vmatpush1.bf16.msra.mxu0 0
    %2728 = vmatprep.subr.bf16.mxu0 0
    %2729 = vmatpush1.bf16.msra.mxu0 0
    %2730 = vmatprep.subr.bf16.mxu0 0
    %2731 = vmatpush1.bf16.msra.mxu0 0
    %2732 = vmatprep.subr.bf16.mxu0 0
    %2733 = vmatpush1.bf16.msra.mxu0 0
    %2734 = vmatprep.subr.bf16.mxu0 0
    %2735 = vmatpush1.bf16.msra.mxu0 0
    %2736 = vmatprep.mubr.bf16.mxu0 0
    %2737 = vmatmul.mubr.bf16.gmra.mrb[0].mxu0 %v354
    %v2738 = vpop.f32.mrb[0].mxu0
    %v2739 = vadd.f32 0.0, %v2738
    %v2740 = vpop.f32.mrb[0].mxu0
    %v2741 = vpop.f32.mrb[0].mxu0
    %v2742 = vadd.f32 0.0, %v2741
    %v2743 = vpop.f32.mrb[0].mxu0
    %2744 = vmatprep.mubr.bf16.mxu0 0
    %2745 = vmatmul.mubr.bf16.gmra.mrb[0].mxu0 %v355
    %v2746 = vpop.f32.mrb[0].mxu0
    %v2747 = vadd.f32 0.0, %v2746
    %v2748 = vpop.f32.mrb[0].mxu0
    %v2749 = vpop.f32.mrb[0].mxu0
    %v2750 = vadd.f32 0.0, %v2749
    %v2751 = vpop.f32.mrb[0].mxu0
    %2752 = vdwg.mxu0
    %s2753 = scalar_lea.vmem %s5, 320
    %v2754 = vld [vmem:[%s2753] sm:$0xf]
    %v2755 = vld [vmem:[%s2753 + $0x4] sm:$0xf]
    %v2756 = vld [vmem:[%s2753 + $0x8] sm:$0xf]
    %v2757 = vld [vmem:[%s2753 + $0xc] sm:$0xf]
    %v2758 = vld [vmem:[%s2753 + $0x10] sm:$0xf]
    %v2759 = vld [vmem:[%s2753 + $0x14] sm:$0xf]
    %v2760 = vld [vmem:[%s2753 + $0x18] sm:$0xf]
    %v2761 = vld [vmem:[%s2753 + $0x1c] sm:$0xf]
    %v2762 = vpack.c.bf16 %v2742, %v2739
    %v2763 = vpack.c.bf16 %v2750, %v2747
    %v2772 = vunpack.c.l.b16 %v2754
    %v2773 = vunpack.c.l.b16 %v2755
    %v2774 = vunpack.c.l.b16 %v2756
    %v2775 = vunpack.c.l.b16 %v2757
    %v2776 = vunpack.c.l.b16 %v2758
    %v2777 = vunpack.c.l.b16 %v2759
    %v2778 = vunpack.c.l.b16 %v2760
    %v2779 = vunpack.c.l.b16 %v2761
    %v2780 = vpack.c.b16 %v2773, %v2772
    %v2781 = vpack.c.b16 %v2775, %v2774
    %v2782 = vpack.c.b16 %v2777, %v2776
    %v2783 = vpack.c.b16 %v2779, %v2778
    %v2785 = vsel %vm624, %v2780, 0
    %v2788 = vsel %vm624, %v2781, 0
    %v2791 = vsel %vm624, %v2782, 0
    %v2794 = vsel %vm624, %v2783, 0
    %2796 = vmatprep.subr.bf16.mxu0 0
    %2797 = vmatpush1.bf16.msra.mxu0 %v2762
    %2798 = vmatprep.subr.bf16.mxu0 0
    %2799 = vmatpush1.bf16.msra.mxu0 %v2763
    %2800 = vmatprep.subr.bf16.mxu0 0
    %2801 = vmatpush1.bf16.msra.mxu0 0
    %2802 = vmatprep.subr.bf16.mxu0 0
    %2803 = vmatpush1.bf16.msra.mxu0 0
    %2804 = vmatprep.subr.bf16.mxu0 0
    %2805 = vmatpush1.bf16.msra.mxu0 0
    %2806 = vmatprep.subr.bf16.mxu0 0
    %2807 = vmatpush1.bf16.msra.mxu0 0
    %2808 = vmatprep.subr.bf16.mxu0 0
    %2809 = vmatpush1.bf16.msra.mxu0 0
    %2810 = vmatprep.subr.bf16.mxu0 0
    %2811 = vmatpush1.bf16.msra.mxu0 0
    %2812 = vmatprep.subr.bf16.mxu0 0
    %2813 = vmatpush1.bf16.msra.mxu0 0
    %2814 = vmatprep.subr.bf16.mxu0 0
    %2815 = vmatpush1.bf16.msra.mxu0 0
    %2816 = vmatprep.subr.bf16.mxu0 0
    %2817 = vmatpush1.bf16.msra.mxu0 0
    %2818 = vmatprep.subr.bf16.mxu0 0
    %2819 = vmatpush1.bf16.msra.mxu0 0
    %2820 = vmatprep.subr.bf16.mxu0 0
    %2821 = vmatpush1.bf16.msra.mxu0 0
    %2822 = vmatprep.subr.bf16.mxu0 0
    %2823 = vmatpush1.bf16.msra.mxu0 0
    %2824 = vmatprep.subr.bf16.mxu0 0
    %2825 = vmatpush1.bf16.msra.mxu0 0
    %2826 = vmatprep.subr.bf16.mxu0 0
    %2827 = vmatpush1.bf16.msra.mxu0 0
    %2828 = vmatprep.mubr.bf16.mxu0 0
    %2829 = vmatmul.mubr.bf16.gmra.mrb[0].mxu0 %v2785
    %v2830 = vpop.f32.mrb[0].mxu0
    %v2831 = vadd.f32 0.0, %v2830
    %v2832 = vpop.f32.mrb[0].mxu0
    %v2833 = vpop.f32.mrb[0].mxu0
    %v2834 = vadd.f32 0.0, %v2833
    %v2835 = vpop.f32.mrb[0].mxu0
    %2836 = vmatprep.mubr.bf16.mxu0 0
    %2837 = vmatmul.mubr.bf16.gmra.mrb[0].mxu0 %v2788
    %v2838 = vpop.f32.mrb[0].mxu0
    %v2839 = vadd.f32 0.0, %v2838
    %v2840 = vpop.f32.mrb[0].mxu0
    %v2841 = vpop.f32.mrb[0].mxu0
    %v2842 = vadd.f32 0.0, %v2841
    %v2843 = vpop.f32.mrb[0].mxu0
    %2844 = vmatprep.mubr.bf16.mxu0 0
    %2845 = vmatmul.mubr.bf16.gmra.mrb[0].mxu0 %v2791
    %v2846 = vpop.f32.mrb[0].mxu0
    %v2847 = vadd.f32 0.0, %v2846
    %v2848 = vpop.f32.mrb[0].mxu0
    %v2849 = vpop.f32.mrb[0].mxu0
    %v2850 = vadd.f32 0.0, %v2849
    %v2851 = vpop.f32.mrb[0].mxu0
    %2852 = vmatprep.mubr.bf16.mxu0 0
    %2853 = vmatmul.mubr.bf16.gmra.mrb[0].mxu0 %v2794
    %v2854 = vpop.f32.mrb[0].mxu0
    %v2855 = vadd.f32 0.0, %v2854
    %v2856 = vpop.f32.mrb[0].mxu0
    %v2857 = vpop.f32.mrb[0].mxu0
    %v2858 = vadd.f32 0.0, %v2857
    %v2859 = vpop.f32.mrb[0].mxu0
    %2860 = vdwg.mxu0
    %v2861 = vadd.f32 %v2631, %v2831
    %v2862 = vadd.f32 %v2632, %v2834
    %v2863 = vadd.f32 %v2633, %v2839
    %v2864 = vadd.f32 %v2634, %v2842
    %v2865 = vadd.f32 %v2635, %v2847
    %v2866 = vadd.f32 %v2636, %v2850
    %v2867 = vadd.f32 %v2637, %v2855
    %v2868 = vadd.f32 %v2638, %v2858
    %s2869 = scalar_lea.vmem %s4, 704
    %v2870 = vld [vmem:[%s2869] sm:$0xf]
    %v2871 = vld [vmem:[%s2869 + $0x4] sm:$0xf]
    %v2872 = vld [vmem:[%s2869 + $0x8] sm:$0xf]
    %v2873 = vld [vmem:[%s2869 + $0xc] sm:$0xf]
    %v2874 = vld [vmem:[%s2869 + $0x10] sm:$0xf]
    %v2875 = vld [vmem:[%s2869 + $0x14] sm:$0xf]
    %v2876 = vld [vmem:[%s2869 + $0x18] sm:$0xf]
    %v2877 = vld [vmem:[%s2869 + $0x1c] sm:$0xf]
    %v2878 = vld [vmem:[%s2869 + $0x20] sm:$0xf]
    %v2879 = vld [vmem:[%s2869 + $0x24] sm:$0xf]
    %v2880 = vld [vmem:[%s2869 + $0x28] sm:$0xf]
    %v2881 = vld [vmem:[%s2869 + $0x2c] sm:$0xf]
    %v2882 = vld [vmem:[%s2869 + $0x30] sm:$0xf]
    %v2883 = vld [vmem:[%s2869 + $0x34] sm:$0xf]
    %v2884 = vld [vmem:[%s2869 + $0x38] sm:$0xf]
    %v2885 = vld [vmem:[%s2869 + $0x3c] sm:$0xf]
    %v2902 = vunpack.c.l.b16 %v2870
    %v2903 = vunpack.c.l.b16 %v2871
    %v2904 = vunpack.c.l.b16 %v2872
    %v2905 = vunpack.c.l.b16 %v2873
    %v2906 = vunpack.c.l.b16 %v2874
    %v2907 = vunpack.c.l.b16 %v2875
    %v2908 = vunpack.c.l.b16 %v2876
    %v2909 = vunpack.c.l.b16 %v2877
    %v2910 = vunpack.c.l.b16 %v2878
    %v2911 = vunpack.c.l.b16 %v2879
    %v2912 = vunpack.c.l.b16 %v2880
    %v2913 = vunpack.c.l.b16 %v2881
    %v2914 = vunpack.c.l.b16 %v2882
    %v2915 = vunpack.c.l.b16 %v2883
    %v2916 = vunpack.c.l.b16 %v2884
    %v2917 = vunpack.c.l.b16 %v2885
    %v2918 = vpack.c.b16 %v2903, %v2902
    %v2919 = vpack.c.b16 %v2905, %v2904
    %v2920 = vpack.c.b16 %v2907, %v2906
    %v2921 = vpack.c.b16 %v2909, %v2908
    %v2922 = vpack.c.b16 %v2911, %v2910
    %v2923 = vpack.c.b16 %v2913, %v2912
    %v2924 = vpack.c.b16 %v2915, %v2914
    %v2925 = vpack.c.b16 %v2917, %v2916
    %2934 = vmatprep.subr.bf16.mxu0 0
    %2935 = vmatpush1.bf16.msra.mxu0 %v2918
    %2936 = vmatprep.subr.bf16.mxu0 0
    %2937 = vmatpush1.bf16.msra.mxu0 %v2919
    %2938 = vmatprep.subr.bf16.mxu0 0
    %2939 = vmatpush1.bf16.msra.mxu0 %v2920
    %2940 = vmatprep.subr.bf16.mxu0 0
    %2941 = vmatpush1.bf16.msra.mxu0 %v2921
    %2942 = vmatprep.subr.bf16.mxu0 0
    %2943 = vmatpush1.bf16.msra.mxu0 %v2922
    %2944 = vmatprep.subr.bf16.mxu0 0
    %2945 = vmatpush1.bf16.msra.mxu0 %v2923
    %2946 = vmatprep.subr.bf16.mxu0 0
    %2947 = vmatpush1.bf16.msra.mxu0 %v2924
    %2948 = vmatprep.subr.bf16.mxu0 0
    %2949 = vmatpush1.bf16.msra.mxu0 %v2925
    %2950 = vmatprep.subr.bf16.mxu0 0
    %2951 = vmatpush1.bf16.msra.mxu0 0
    %2952 = vmatprep.subr.bf16.mxu0 0
    %2953 = vmatpush1.bf16.msra.mxu0 0
    %2954 = vmatprep.subr.bf16.mxu0 0
    %2955 = vmatpush1.bf16.msra.mxu0 0
    %2956 = vmatprep.subr.bf16.mxu0 0
    %2957 = vmatpush1.bf16.msra.mxu0 0
    %2958 = vmatprep.subr.bf16.mxu0 0
    %2959 = vmatpush1.bf16.msra.mxu0 0
    %2960 = vmatprep.subr.bf16.mxu0 0
    %2961 = vmatpush1.bf16.msra.mxu0 0
    %2962 = vmatprep.subr.bf16.mxu0 0
    %2963 = vmatpush1.bf16.msra.mxu0 0
    %2964 = vmatprep.subr.bf16.mxu0 0
    %2965 = vmatpush1.bf16.msra.mxu0 0
    %2966 = vmatprep.mubr.bf16.mxu0 0
    %2967 = vmatmul.mubr.bf16.gmra.mrb[0].mxu0 %v354
    %v2968 = vpop.f32.mrb[0].mxu0
    %v2969 = vadd.f32 0.0, %v2968
    %v2970 = vpop.f32.mrb[0].mxu0
    %v2971 = vpop.f32.mrb[0].mxu0
    %v2972 = vadd.f32 0.0, %v2971
    %v2973 = vpop.f32.mrb[0].mxu0
    %2974 = vmatprep.mubr.bf16.mxu0 0
    %2975 = vmatmul.mubr.bf16.gmra.mrb[0].mxu0 %v355
    %v2976 = vpop.f32.mrb[0].mxu0
    %v2977 = vadd.f32 0.0, %v2976
    %v2978 = vpop.f32.mrb[0].mxu0
    %v2979 = vpop.f32.mrb[0].mxu0
    %v2980 = vadd.f32 0.0, %v2979
    %v2981 = vpop.f32.mrb[0].mxu0
    %2982 = vdwg.mxu0
    %s2983 = scalar_lea.vmem %s5, 352
    %v2984 = vld [vmem:[%s2983] sm:$0xf]
    %v2985 = vld [vmem:[%s2983 + $0x4] sm:$0xf]
    %v2986 = vld [vmem:[%s2983 + $0x8] sm:$0xf]
    %v2987 = vld [vmem:[%s2983 + $0xc] sm:$0xf]
    %v2988 = vld [vmem:[%s2983 + $0x10] sm:$0xf]
    %v2989 = vld [vmem:[%s2983 + $0x14] sm:$0xf]
    %v2990 = vld [vmem:[%s2983 + $0x18] sm:$0xf]
    %v2991 = vld [vmem:[%s2983 + $0x1c] sm:$0xf]
    %v2992 = vpack.c.bf16 %v2972, %v2969
    %v2993 = vpack.c.bf16 %v2980, %v2977
    %v3002 = vunpack.c.l.b16 %v2984
    %v3003 = vunpack.c.l.b16 %v2985
    %v3004 = vunpack.c.l.b16 %v2986
    %v3005 = vunpack.c.l.b16 %v2987
    %v3006 = vunpack.c.l.b16 %v2988
    %v3007 = vunpack.c.l.b16 %v2989
    %v3008 = vunpack.c.l.b16 %v2990
    %v3009 = vunpack.c.l.b16 %v2991
    %v3010 = vpack.c.b16 %v3003, %v3002
    %v3011 = vpack.c.b16 %v3005, %v3004
    %v3012 = vpack.c.b16 %v3007, %v3006
    %v3013 = vpack.c.b16 %v3009, %v3008
    %v3015 = vsel %vm624, %v3010, 0
    %v3018 = vsel %vm624, %v3011, 0
    %v3021 = vsel %vm624, %v3012, 0
    %v3024 = vsel %vm624, %v3013, 0
    %3026 = vmatprep.subr.bf16.mxu0 0
    %3027 = vmatpush1.bf16.msra.mxu0 %v2992
    %3028 = vmatprep.subr.bf16.mxu0 0
    %3029 = vmatpush1.bf16.msra.mxu0 %v2993
    %3030 = vmatprep.subr.bf16.mxu0 0
    %3031 = vmatpush1.bf16.msra.mxu0 0
    %3032 = vmatprep.subr.bf16.mxu0 0
    %3033 = vmatpush1.bf16.msra.mxu0 0
    %3034 = vmatprep.subr.bf16.mxu0 0
    %3035 = vmatpush1.bf16.msra.mxu0 0
    %3036 = vmatprep.subr.bf16.mxu0 0
    %3037 = vmatpush1.bf16.msra.mxu0 0
    %3038 = vmatprep.subr.bf16.mxu0 0
    %3039 = vmatpush1.bf16.msra.mxu0 0
    %3040 = vmatprep.subr.bf16.mxu0 0
    %3041 = vmatpush1.bf16.msra.mxu0 0
    %3042 = vmatprep.subr.bf16.mxu0 0
    %3043 = vmatpush1.bf16.msra.mxu0 0
    %3044 = vmatprep.subr.bf16.mxu0 0
    %3045 = vmatpush1.bf16.msra.mxu0 0
    %3046 = vmatprep.subr.bf16.mxu0 0
    %3047 = vmatpush1.bf16.msra.mxu0 0
    %3048 = vmatprep.subr.bf16.mxu0 0
    %3049 = vmatpush1.bf16.msra.mxu0 0
    %3050 = vmatprep.subr.bf16.mxu0 0
    %3051 = vmatpush1.bf16.msra.mxu0 0
    %3052 = vmatprep.subr.bf16.mxu0 0
    %3053 = vmatpush1.bf16.msra.mxu0 0
    %3054 = vmatprep.subr.bf16.mxu0 0
    %3055 = vmatpush1.bf16.msra.mxu0 0
    %3056 = vmatprep.subr.bf16.mxu0 0
    %3057 = vmatpush1.bf16.msra.mxu0 0
    %3058 = vmatprep.mubr.bf16.mxu0 0
    %3059 = vmatmul.mubr.bf16.gmra.mrb[0].mxu0 %v3015
    %v3060 = vpop.f32.mrb[0].mxu0
    %v3061 = vadd.f32 0.0, %v3060
    %v3062 = vpop.f32.mrb[0].mxu0
    %v3063 = vpop.f32.mrb[0].mxu0
    %v3064 = vadd.f32 0.0, %v3063
    %v3065 = vpop.f32.mrb[0].mxu0
    %3066 = vmatprep.mubr.bf16.mxu0 0
    %3067 = vmatmul.mubr.bf16.gmra.mrb[0].mxu0 %v3018
    %v3068 = vpop.f32.mrb[0].mxu0
    %v3069 = vadd.f32 0.0, %v3068
    %v3070 = vpop.f32.mrb[0].mxu0
    %v3071 = vpop.f32.mrb[0].mxu0
    %v3072 = vadd.f32 0.0, %v3071
    %v3073 = vpop.f32.mrb[0].mxu0
    %3074 = vmatprep.mubr.bf16.mxu0 0
    %3075 = vmatmul.mubr.bf16.gmra.mrb[0].mxu0 %v3021
    %v3076 = vpop.f32.mrb[0].mxu0
    %v3077 = vadd.f32 0.0, %v3076
    %v3078 = vpop.f32.mrb[0].mxu0
    %v3079 = vpop.f32.mrb[0].mxu0
    %v3080 = vadd.f32 0.0, %v3079
    %v3081 = vpop.f32.mrb[0].mxu0
    %3082 = vmatprep.mubr.bf16.mxu0 0
    %3083 = vmatmul.mubr.bf16.gmra.mrb[0].mxu0 %v3024
    %v3084 = vpop.f32.mrb[0].mxu0
    %v3085 = vadd.f32 0.0, %v3084
    %v3086 = vpop.f32.mrb[0].mxu0
    %v3087 = vpop.f32.mrb[0].mxu0
    %v3088 = vadd.f32 0.0, %v3087
    %v3089 = vpop.f32.mrb[0].mxu0
    %3090 = vdwg.mxu0
    %v3091 = vadd.f32 %v2861, %v3061
    %v3092 = vadd.f32 %v2862, %v3064
    %v3093 = vadd.f32 %v2863, %v3069
    %v3094 = vadd.f32 %v2864, %v3072
    %v3095 = vadd.f32 %v2865, %v3077
    %v3096 = vadd.f32 %v2866, %v3080
    %v3097 = vadd.f32 %v2867, %v3085
    %v3098 = vadd.f32 %v2868, %v3088
    %s3099 = scalar_lea.vmem %s4, 768
    %v3100 = vld [vmem:[%s3099] sm:$0xf]
    %v3101 = vld [vmem:[%s3099 + $0x4] sm:$0xf]
    %v3102 = vld [vmem:[%s3099 + $0x8] sm:$0xf]
    %v3103 = vld [vmem:[%s3099 + $0xc] sm:$0xf]
    %v3104 = vld [vmem:[%s3099 + $0x10] sm:$0xf]
    %v3105 = vld [vmem:[%s3099 + $0x14] sm:$0xf]
    %v3106 = vld [vmem:[%s3099 + $0x18] sm:$0xf]
    %v3107 = vld [vmem:[%s3099 + $0x1c] sm:$0xf]
    %v3108 = vld [vmem:[%s3099 + $0x20] sm:$0xf]
    %v3109 = vld [vmem:[%s3099 + $0x24] sm:$0xf]
    %v3110 = vld [vmem:[%s3099 + $0x28] sm:$0xf]
    %v3111 = vld [vmem:[%s3099 + $0x2c] sm:$0xf]
    %v3112 = vld [vmem:[%s3099 + $0x30] sm:$0xf]
    %v3113 = vld [vmem:[%s3099 + $0x34] sm:$0xf]
    %v3114 = vld [vmem:[%s3099 + $0x38] sm:$0xf]
    %v3115 = vld [vmem:[%s3099 + $0x3c] sm:$0xf]
    %v3132 = vunpack.c.l.b16 %v3100
    %v3133 = vunpack.c.l.b16 %v3101
    %v3134 = vunpack.c.l.b16 %v3102
    %v3135 = vunpack.c.l.b16 %v3103
    %v3136 = vunpack.c.l.b16 %v3104
    %v3137 = vunpack.c.l.b16 %v3105
    %v3138 = vunpack.c.l.b16 %v3106
    %v3139 = vunpack.c.l.b16 %v3107
    %v3140 = vunpack.c.l.b16 %v3108
    %v3141 = vunpack.c.l.b16 %v3109
    %v3142 = vunpack.c.l.b16 %v3110
    %v3143 = vunpack.c.l.b16 %v3111
    %v3144 = vunpack.c.l.b16 %v3112
    %v3145 = vunpack.c.l.b16 %v3113
    %v3146 = vunpack.c.l.b16 %v3114
    %v3147 = vunpack.c.l.b16 %v3115
    %v3148 = vpack.c.b16 %v3133, %v3132
    %v3149 = vpack.c.b16 %v3135, %v3134
    %v3150 = vpack.c.b16 %v3137, %v3136
    %v3151 = vpack.c.b16 %v3139, %v3138
    %v3152 = vpack.c.b16 %v3141, %v3140
    %v3153 = vpack.c.b16 %v3143, %v3142
    %v3154 = vpack.c.b16 %v3145, %v3144
    %v3155 = vpack.c.b16 %v3147, %v3146
    %3164 = vmatprep.subr.bf16.mxu0 0
    %3165 = vmatpush1.bf16.msra.mxu0 %v3148
    %3166 = vmatprep.subr.bf16.mxu0 0
    %3167 = vmatpush1.bf16.msra.mxu0 %v3149
    %3168 = vmatprep.subr.bf16.mxu0 0
    %3169 = vmatpush1.bf16.msra.mxu0 %v3150
    %3170 = vmatprep.subr.bf16.mxu0 0
    %3171 = vmatpush1.bf16.msra.mxu0 %v3151
    %3172 = vmatprep.subr.bf16.mxu0 0
    %3173 = vmatpush1.bf16.msra.mxu0 %v3152
    %3174 = vmatprep.subr.bf16.mxu0 0
    %3175 = vmatpush1.bf16.msra.mxu0 %v3153
    %3176 = vmatprep.subr.bf16.mxu0 0
    %3177 = vmatpush1.bf16.msra.mxu0 %v3154
    %3178 = vmatprep.subr.bf16.mxu0 0
    %3179 = vmatpush1.bf16.msra.mxu0 %v3155
    %3180 = vmatprep.subr.bf16.mxu0 0
    %3181 = vmatpush1.bf16.msra.mxu0 0
    %3182 = vmatprep.subr.bf16.mxu0 0
    %3183 = vmatpush1.bf16.msra.mxu0 0
    %3184 = vmatprep.subr.bf16.mxu0 0
    %3185 = vmatpush1.bf16.msra.mxu0 0
    %3186 = vmatprep.subr.bf16.mxu0 0
    %3187 = vmatpush1.bf16.msra.mxu0 0
    %3188 = vmatprep.subr.bf16.mxu0 0
    %3189 = vmatpush1.bf16.msra.mxu0 0
    %3190 = vmatprep.subr.bf16.mxu0 0
    %3191 = vmatpush1.bf16.msra.mxu0 0
    %3192 = vmatprep.subr.bf16.mxu0 0
    %3193 = vmatpush1.bf16.msra.mxu0 0
    %3194 = vmatprep.subr.bf16.mxu0 0
    %3195 = vmatpush1.bf16.msra.mxu0 0
    %3196 = vmatprep.mubr.bf16.mxu0 0
    %3197 = vmatmul.mubr.bf16.gmra.mrb[0].mxu0 %v354
    %v3198 = vpop.f32.mrb[0].mxu0
    %v3199 = vadd.f32 0.0, %v3198
    %v3200 = vpop.f32.mrb[0].mxu0
    %v3201 = vpop.f32.mrb[0].mxu0
    %v3202 = vadd.f32 0.0, %v3201
    %v3203 = vpop.f32.mrb[0].mxu0
    %3204 = vmatprep.mubr.bf16.mxu0 0
    %3205 = vmatmul.mubr.bf16.gmra.mrb[0].mxu0 %v355
    %v3206 = vpop.f32.mrb[0].mxu0
    %v3207 = vadd.f32 0.0, %v3206
    %v3208 = vpop.f32.mrb[0].mxu0
    %v3209 = vpop.f32.mrb[0].mxu0
    %v3210 = vadd.f32 0.0, %v3209
    %v3211 = vpop.f32.mrb[0].mxu0
    %3212 = vdwg.mxu0
    %s3213 = scalar_lea.vmem %s5, 384
    %v3214 = vld [vmem:[%s3213] sm:$0xf]
    %v3215 = vld [vmem:[%s3213 + $0x4] sm:$0xf]
    %v3216 = vld [vmem:[%s3213 + $0x8] sm:$0xf]
    %v3217 = vld [vmem:[%s3213 + $0xc] sm:$0xf]
    %v3218 = vld [vmem:[%s3213 + $0x10] sm:$0xf]
    %v3219 = vld [vmem:[%s3213 + $0x14] sm:$0xf]
    %v3220 = vld [vmem:[%s3213 + $0x18] sm:$0xf]
    %v3221 = vld [vmem:[%s3213 + $0x1c] sm:$0xf]
    %v3222 = vpack.c.bf16 %v3202, %v3199
    %v3223 = vpack.c.bf16 %v3210, %v3207
    %v3232 = vunpack.c.l.b16 %v3214
    %v3233 = vunpack.c.l.b16 %v3215
    %v3234 = vunpack.c.l.b16 %v3216
    %v3235 = vunpack.c.l.b16 %v3217
    %v3236 = vunpack.c.l.b16 %v3218
    %v3237 = vunpack.c.l.b16 %v3219
    %v3238 = vunpack.c.l.b16 %v3220
    %v3239 = vunpack.c.l.b16 %v3221
    %v3240 = vpack.c.b16 %v3233, %v3232
    %v3241 = vpack.c.b16 %v3235, %v3234
    %v3242 = vpack.c.b16 %v3237, %v3236
    %v3243 = vpack.c.b16 %v3239, %v3238
    %v3245 = vsel %vm624, %v3240, 0
    %v3248 = vsel %vm624, %v3241, 0
    %v3251 = vsel %vm624, %v3242, 0
    %v3254 = vsel %vm624, %v3243, 0
    %3256 = vmatprep.subr.bf16.mxu0 0
    %3257 = vmatpush1.bf16.msra.mxu0 %v3222
    %3258 = vmatprep.subr.bf16.mxu0 0
    %3259 = vmatpush1.bf16.msra.mxu0 %v3223
    %3260 = vmatprep.subr.bf16.mxu0 0
    %3261 = vmatpush1.bf16.msra.mxu0 0
    %3262 = vmatprep.subr.bf16.mxu0 0
    %3263 = vmatpush1.bf16.msra.mxu0 0
    %3264 = vmatprep.subr.bf16.mxu0 0
    %3265 = vmatpush1.bf16.msra.mxu0 0
    %3266 = vmatprep.subr.bf16.mxu0 0
    %3267 = vmatpush1.bf16.msra.mxu0 0
    %3268 = vmatprep.subr.bf16.mxu0 0
    %3269 = vmatpush1.bf16.msra.mxu0 0
    %3270 = vmatprep.subr.bf16.mxu0 0
    %3271 = vmatpush1.bf16.msra.mxu0 0
    %3272 = vmatprep.subr.bf16.mxu0 0
    %3273 = vmatpush1.bf16.msra.mxu0 0
    %3274 = vmatprep.subr.bf16.mxu0 0
    %3275 = vmatpush1.bf16.msra.mxu0 0
    %3276 = vmatprep.subr.bf16.mxu0 0
    %3277 = vmatpush1.bf16.msra.mxu0 0
    %3278 = vmatprep.subr.bf16.mxu0 0
    %3279 = vmatpush1.bf16.msra.mxu0 0
    %3280 = vmatprep.subr.bf16.mxu0 0
    %3281 = vmatpush1.bf16.msra.mxu0 0
    %3282 = vmatprep.subr.bf16.mxu0 0
    %3283 = vmatpush1.bf16.msra.mxu0 0
    %3284 = vmatprep.subr.bf16.mxu0 0
    %3285 = vmatpush1.bf16.msra.mxu0 0
    %3286 = vmatprep.subr.bf16.mxu0 0
    %3287 = vmatpush1.bf16.msra.mxu0 0
    %3288 = vmatprep.mubr.bf16.mxu0 0
    %3289 = vmatmul.mubr.bf16.gmra.mrb[0].mxu0 %v3245
    %v3290 = vpop.f32.mrb[0].mxu0
    %v3291 = vadd.f32 0.0, %v3290
    %v3292 = vpop.f32.mrb[0].mxu0
    %v3293 = vpop.f32.mrb[0].mxu0
    %v3294 = vadd.f32 0.0, %v3293
    %v3295 = vpop.f32.mrb[0].mxu0
    %3296 = vmatprep.mubr.bf16.mxu0 0
    %3297 = vmatmul.mubr.bf16.gmra.mrb[0].mxu0 %v3248
    %v3298 = vpop.f32.mrb[0].mxu0
    %v3299 = vadd.f32 0.0, %v3298
    %v3300 = vpop.f32.mrb[0].mxu0
    %v3301 = vpop.f32.mrb[0].mxu0
    %v3302 = vadd.f32 0.0, %v3301
    %v3303 = vpop.f32.mrb[0].mxu0
    %3304 = vmatprep.mubr.bf16.mxu0 0
    %3305 = vmatmul.mubr.bf16.gmra.mrb[0].mxu0 %v3251
    %v3306 = vpop.f32.mrb[0].mxu0
    %v3307 = vadd.f32 0.0, %v3306
    %v3308 = vpop.f32.mrb[0].mxu0
    %v3309 = vpop.f32.mrb[0].mxu0
    %v3310 = vadd.f32 0.0, %v3309
    %v3311 = vpop.f32.mrb[0].mxu0
    %3312 = vmatprep.mubr.bf16.mxu0 0
    %3313 = vmatmul.mubr.bf16.gmra.mrb[0].mxu0 %v3254
    %v3314 = vpop.f32.mrb[0].mxu0
    %v3315 = vadd.f32 0.0, %v3314
    %v3316 = vpop.f32.mrb[0].mxu0
    %v3317 = vpop.f32.mrb[0].mxu0
    %v3318 = vadd.f32 0.0, %v3317
    %v3319 = vpop.f32.mrb[0].mxu0
    %3320 = vdwg.mxu0
    %v3321 = vadd.f32 %v3091, %v3291
    %v3322 = vadd.f32 %v3092, %v3294
    %v3323 = vadd.f32 %v3093, %v3299
    %v3324 = vadd.f32 %v3094, %v3302
    %v3325 = vadd.f32 %v3095, %v3307
    %v3326 = vadd.f32 %v3096, %v3310
    %v3327 = vadd.f32 %v3097, %v3315
    %v3328 = vadd.f32 %v3098, %v3318
    %s3329 = scalar_lea.vmem %s4, 832
    %v3330 = vld [vmem:[%s3329] sm:$0xf]
    %v3331 = vld [vmem:[%s3329 + $0x4] sm:$0xf]
    %v3332 = vld [vmem:[%s3329 + $0x8] sm:$0xf]
    %v3333 = vld [vmem:[%s3329 + $0xc] sm:$0xf]
    %v3334 = vld [vmem:[%s3329 + $0x10] sm:$0xf]
    %v3335 = vld [vmem:[%s3329 + $0x14] sm:$0xf]
    %v3336 = vld [vmem:[%s3329 + $0x18] sm:$0xf]
    %v3337 = vld [vmem:[%s3329 + $0x1c] sm:$0xf]
    %v3338 = vld [vmem:[%s3329 + $0x20] sm:$0xf]
    %v3339 = vld [vmem:[%s3329 + $0x24] sm:$0xf]
    %v3340 = vld [vmem:[%s3329 + $0x28] sm:$0xf]
    %v3341 = vld [vmem:[%s3329 + $0x2c] sm:$0xf]
    %v3342 = vld [vmem:[%s3329 + $0x30] sm:$0xf]
    %v3343 = vld [vmem:[%s3329 + $0x34] sm:$0xf]
    %v3344 = vld [vmem:[%s3329 + $0x38] sm:$0xf]
    %v3345 = vld [vmem:[%s3329 + $0x3c] sm:$0xf]
    %v3362 = vunpack.c.l.b16 %v3330
    %v3363 = vunpack.c.l.b16 %v3331
    %v3364 = vunpack.c.l.b16 %v3332
    %v3365 = vunpack.c.l.b16 %v3333
    %v3366 = vunpack.c.l.b16 %v3334
    %v3367 = vunpack.c.l.b16 %v3335
    %v3368 = vunpack.c.l.b16 %v3336
    %v3369 = vunpack.c.l.b16 %v3337
    %v3370 = vunpack.c.l.b16 %v3338
    %v3371 = vunpack.c.l.b16 %v3339
    %v3372 = vunpack.c.l.b16 %v3340
    %v3373 = vunpack.c.l.b16 %v3341
    %v3374 = vunpack.c.l.b16 %v3342
    %v3375 = vunpack.c.l.b16 %v3343
    %v3376 = vunpack.c.l.b16 %v3344
    %v3377 = vunpack.c.l.b16 %v3345
    %v3378 = vpack.c.b16 %v3363, %v3362
    %v3379 = vpack.c.b16 %v3365, %v3364
    %v3380 = vpack.c.b16 %v3367, %v3366
    %v3381 = vpack.c.b16 %v3369, %v3368
    %v3382 = vpack.c.b16 %v3371, %v3370
    %v3383 = vpack.c.b16 %v3373, %v3372
    %v3384 = vpack.c.b16 %v3375, %v3374
    %v3385 = vpack.c.b16 %v3377, %v3376
    %3394 = vmatprep.subr.bf16.mxu0 0
    %3395 = vmatpush1.bf16.msra.mxu0 %v3378
    %3396 = vmatprep.subr.bf16.mxu0 0
    %3397 = vmatpush1.bf16.msra.mxu0 %v3379
    %3398 = vmatprep.subr.bf16.mxu0 0
    %3399 = vmatpush1.bf16.msra.mxu0 %v3380
    %3400 = vmatprep.subr.bf16.mxu0 0
    %3401 = vmatpush1.bf16.msra.mxu0 %v3381
    %3402 = vmatprep.subr.bf16.mxu0 0
    %3403 = vmatpush1.bf16.msra.mxu0 %v3382
    %3404 = vmatprep.subr.bf16.mxu0 0
    %3405 = vmatpush1.bf16.msra.mxu0 %v3383
    %3406 = vmatprep.subr.bf16.mxu0 0
    %3407 = vmatpush1.bf16.msra.mxu0 %v3384
    %3408 = vmatprep.subr.bf16.mxu0 0
    %3409 = vmatpush1.bf16.msra.mxu0 %v3385
    %3410 = vmatprep.subr.bf16.mxu0 0
    %3411 = vmatpush1.bf16.msra.mxu0 0
    %3412 = vmatprep.subr.bf16.mxu0 0
    %3413 = vmatpush1.bf16.msra.mxu0 0
    %3414 = vmatprep.subr.bf16.mxu0 0
    %3415 = vmatpush1.bf16.msra.mxu0 0
    %3416 = vmatprep.subr.bf16.mxu0 0
    %3417 = vmatpush1.bf16.msra.mxu0 0
    %3418 = vmatprep.subr.bf16.mxu0 0
    %3419 = vmatpush1.bf16.msra.mxu0 0
    %3420 = vmatprep.subr.bf16.mxu0 0
    %3421 = vmatpush1.bf16.msra.mxu0 0
    %3422 = vmatprep.subr.bf16.mxu0 0
    %3423 = vmatpush1.bf16.msra.mxu0 0
    %3424 = vmatprep.subr.bf16.mxu0 0
    %3425 = vmatpush1.bf16.msra.mxu0 0
    %3426 = vmatprep.mubr.bf16.mxu0 0
    %3427 = vmatmul.mubr.bf16.gmra.mrb[0].mxu0 %v354
    %v3428 = vpop.f32.mrb[0].mxu0
    %v3429 = vadd.f32 0.0, %v3428
    %v3430 = vpop.f32.mrb[0].mxu0
    %v3431 = vpop.f32.mrb[0].mxu0
    %v3432 = vadd.f32 0.0, %v3431
    %v3433 = vpop.f32.mrb[0].mxu0
    %3434 = vmatprep.mubr.bf16.mxu0 0
    %3435 = vmatmul.mubr.bf16.gmra.mrb[0].mxu0 %v355
    %v3436 = vpop.f32.mrb[0].mxu0
    %v3437 = vadd.f32 0.0, %v3436
    %v3438 = vpop.f32.mrb[0].mxu0
    %v3439 = vpop.f32.mrb[0].mxu0
    %v3440 = vadd.f32 0.0, %v3439
    %v3441 = vpop.f32.mrb[0].mxu0
    %3442 = vdwg.mxu0
    %s3443 = scalar_lea.vmem %s5, 416
    %v3444 = vld [vmem:[%s3443] sm:$0xf]
    %v3445 = vld [vmem:[%s3443 + $0x4] sm:$0xf]
    %v3446 = vld [vmem:[%s3443 + $0x8] sm:$0xf]
    %v3447 = vld [vmem:[%s3443 + $0xc] sm:$0xf]
    %v3448 = vld [vmem:[%s3443 + $0x10] sm:$0xf]
    %v3449 = vld [vmem:[%s3443 + $0x14] sm:$0xf]
    %v3450 = vld [vmem:[%s3443 + $0x18] sm:$0xf]
    %v3451 = vld [vmem:[%s3443 + $0x1c] sm:$0xf]
    %v3452 = vpack.c.bf16 %v3432, %v3429
    %v3453 = vpack.c.bf16 %v3440, %v3437
    %v3462 = vunpack.c.l.b16 %v3444
    %v3463 = vunpack.c.l.b16 %v3445
    %v3464 = vunpack.c.l.b16 %v3446
    %v3465 = vunpack.c.l.b16 %v3447
    %v3466 = vunpack.c.l.b16 %v3448
    %v3467 = vunpack.c.l.b16 %v3449
    %v3468 = vunpack.c.l.b16 %v3450
    %v3469 = vunpack.c.l.b16 %v3451
    %v3470 = vpack.c.b16 %v3463, %v3462
    %v3471 = vpack.c.b16 %v3465, %v3464
    %v3472 = vpack.c.b16 %v3467, %v3466
    %v3473 = vpack.c.b16 %v3469, %v3468
    %v3475 = vsel %vm624, %v3470, 0
    %v3478 = vsel %vm624, %v3471, 0
    %v3481 = vsel %vm624, %v3472, 0
    %v3484 = vsel %vm624, %v3473, 0
    %3486 = vmatprep.subr.bf16.mxu0 0
    %3487 = vmatpush1.bf16.msra.mxu0 %v3452
    %3488 = vmatprep.subr.bf16.mxu0 0
    %3489 = vmatpush1.bf16.msra.mxu0 %v3453
    %3490 = vmatprep.subr.bf16.mxu0 0
    %3491 = vmatpush1.bf16.msra.mxu0 0
    %3492 = vmatprep.subr.bf16.mxu0 0
    %3493 = vmatpush1.bf16.msra.mxu0 0
    %3494 = vmatprep.subr.bf16.mxu0 0
    %3495 = vmatpush1.bf16.msra.mxu0 0
    %3496 = vmatprep.subr.bf16.mxu0 0
    %3497 = vmatpush1.bf16.msra.mxu0 0
    %3498 = vmatprep.subr.bf16.mxu0 0
    %3499 = vmatpush1.bf16.msra.mxu0 0
    %3500 = vmatprep.subr.bf16.mxu0 0
    %3501 = vmatpush1.bf16.msra.mxu0 0
    %3502 = vmatprep.subr.bf16.mxu0 0
    %3503 = vmatpush1.bf16.msra.mxu0 0
    %3504 = vmatprep.subr.bf16.mxu0 0
    %3505 = vmatpush1.bf16.msra.mxu0 0
    %3506 = vmatprep.subr.bf16.mxu0 0
    %3507 = vmatpush1.bf16.msra.mxu0 0
    %3508 = vmatprep.subr.bf16.mxu0 0
    %3509 = vmatpush1.bf16.msra.mxu0 0
    %3510 = vmatprep.subr.bf16.mxu0 0
    %3511 = vmatpush1.bf16.msra.mxu0 0
    %3512 = vmatprep.subr.bf16.mxu0 0
    %3513 = vmatpush1.bf16.msra.mxu0 0
    %3514 = vmatprep.subr.bf16.mxu0 0
    %3515 = vmatpush1.bf16.msra.mxu0 0
    %3516 = vmatprep.subr.bf16.mxu0 0
    %3517 = vmatpush1.bf16.msra.mxu0 0
    %3518 = vmatprep.mubr.bf16.mxu0 0
    %3519 = vmatmul.mubr.bf16.gmra.mrb[0].mxu0 %v3475
    %v3520 = vpop.f32.mrb[0].mxu0
    %v3521 = vadd.f32 0.0, %v3520
    %v3522 = vpop.f32.mrb[0].mxu0
    %v3523 = vpop.f32.mrb[0].mxu0
    %v3524 = vadd.f32 0.0, %v3523
    %v3525 = vpop.f32.mrb[0].mxu0
    %3526 = vmatprep.mubr.bf16.mxu0 0
    %3527 = vmatmul.mubr.bf16.gmra.mrb[0].mxu0 %v3478
    %v3528 = vpop.f32.mrb[0].mxu0
    %v3529 = vadd.f32 0.0, %v3528
    %v3530 = vpop.f32.mrb[0].mxu0
    %v3531 = vpop.f32.mrb[0].mxu0
    %v3532 = vadd.f32 0.0, %v3531
    %v3533 = vpop.f32.mrb[0].mxu0
    %3534 = vmatprep.mubr.bf16.mxu0 0
    %3535 = vmatmul.mubr.bf16.gmra.mrb[0].mxu0 %v3481
    %v3536 = vpop.f32.mrb[0].mxu0
    %v3537 = vadd.f32 0.0, %v3536
    %v3538 = vpop.f32.mrb[0].mxu0
    %v3539 = vpop.f32.mrb[0].mxu0
    %v3540 = vadd.f32 0.0, %v3539
    %v3541 = vpop.f32.mrb[0].mxu0
    %3542 = vmatprep.mubr.bf16.mxu0 0
    %3543 = vmatmul.mubr.bf16.gmra.mrb[0].mxu0 %v3484
    %v3544 = vpop.f32.mrb[0].mxu0
    %v3545 = vadd.f32 0.0, %v3544
    %v3546 = vpop.f32.mrb[0].mxu0
    %v3547 = vpop.f32.mrb[0].mxu0
    %v3548 = vadd.f32 0.0, %v3547
    %v3549 = vpop.f32.mrb[0].mxu0
    %3550 = vdwg.mxu0
    %v3551 = vadd.f32 %v3321, %v3521
    %v3552 = vadd.f32 %v3322, %v3524
    %v3553 = vadd.f32 %v3323, %v3529
    %v3554 = vadd.f32 %v3324, %v3532
    %v3555 = vadd.f32 %v3325, %v3537
    %v3556 = vadd.f32 %v3326, %v3540
    %v3557 = vadd.f32 %v3327, %v3545
    %v3558 = vadd.f32 %v3328, %v3548
    %s3559 = scalar_lea.vmem %s4, 896
    %v3560 = vld [vmem:[%s3559] sm:$0xf]
    %v3561 = vld [vmem:[%s3559 + $0x4] sm:$0xf]
    %v3562 = vld [vmem:[%s3559 + $0x8] sm:$0xf]
    %v3563 = vld [vmem:[%s3559 + $0xc] sm:$0xf]
    %v3564 = vld [vmem:[%s3559 + $0x10] sm:$0xf]
    %v3565 = vld [vmem:[%s3559 + $0x14] sm:$0xf]
    %v3566 = vld [vmem:[%s3559 + $0x18] sm:$0xf]
    %v3567 = vld [vmem:[%s3559 + $0x1c] sm:$0xf]
    %v3568 = vld [vmem:[%s3559 + $0x20] sm:$0xf]
    %v3569 = vld [vmem:[%s3559 + $0x24] sm:$0xf]
    %v3570 = vld [vmem:[%s3559 + $0x28] sm:$0xf]
    %v3571 = vld [vmem:[%s3559 + $0x2c] sm:$0xf]
    %v3572 = vld [vmem:[%s3559 + $0x30] sm:$0xf]
    %v3573 = vld [vmem:[%s3559 + $0x34] sm:$0xf]
    %v3574 = vld [vmem:[%s3559 + $0x38] sm:$0xf]
    %v3575 = vld [vmem:[%s3559 + $0x3c] sm:$0xf]
    %v3592 = vunpack.c.l.b16 %v3560
    %v3593 = vunpack.c.l.b16 %v3561
    %v3594 = vunpack.c.l.b16 %v3562
    %v3595 = vunpack.c.l.b16 %v3563
    %v3596 = vunpack.c.l.b16 %v3564
    %v3597 = vunpack.c.l.b16 %v3565
    %v3598 = vunpack.c.l.b16 %v3566
    %v3599 = vunpack.c.l.b16 %v3567
    %v3600 = vunpack.c.l.b16 %v3568
    %v3601 = vunpack.c.l.b16 %v3569
    %v3602 = vunpack.c.l.b16 %v3570
    %v3603 = vunpack.c.l.b16 %v3571
    %v3604 = vunpack.c.l.b16 %v3572
    %v3605 = vunpack.c.l.b16 %v3573
    %v3606 = vunpack.c.l.b16 %v3574
    %v3607 = vunpack.c.l.b16 %v3575
    %v3608 = vpack.c.b16 %v3593, %v3592
    %v3609 = vpack.c.b16 %v3595, %v3594
    %v3610 = vpack.c.b16 %v3597, %v3596
    %v3611 = vpack.c.b16 %v3599, %v3598
    %v3612 = vpack.c.b16 %v3601, %v3600
    %v3613 = vpack.c.b16 %v3603, %v3602
    %v3614 = vpack.c.b16 %v3605, %v3604
    %v3615 = vpack.c.b16 %v3607, %v3606
    %3624 = vmatprep.subr.bf16.mxu0 0
    %3625 = vmatpush1.bf16.msra.mxu0 %v3608
    %3626 = vmatprep.subr.bf16.mxu0 0
    %3627 = vmatpush1.bf16.msra.mxu0 %v3609
    %3628 = vmatprep.subr.bf16.mxu0 0
    %3629 = vmatpush1.bf16.msra.mxu0 %v3610
    %3630 = vmatprep.subr.bf16.mxu0 0
    %3631 = vmatpush1.bf16.msra.mxu0 %v3611
    %3632 = vmatprep.subr.bf16.mxu0 0
    %3633 = vmatpush1.bf16.msra.mxu0 %v3612
    %3634 = vmatprep.subr.bf16.mxu0 0
    %3635 = vmatpush1.bf16.msra.mxu0 %v3613
    %3636 = vmatprep.subr.bf16.mxu0 0
    %3637 = vmatpush1.bf16.msra.mxu0 %v3614
    %3638 = vmatprep.subr.bf16.mxu0 0
    %3639 = vmatpush1.bf16.msra.mxu0 %v3615
    %3640 = vmatprep.subr.bf16.mxu0 0
    %3641 = vmatpush1.bf16.msra.mxu0 0
    %3642 = vmatprep.subr.bf16.mxu0 0
    %3643 = vmatpush1.bf16.msra.mxu0 0
    %3644 = vmatprep.subr.bf16.mxu0 0
    %3645 = vmatpush1.bf16.msra.mxu0 0
    %3646 = vmatprep.subr.bf16.mxu0 0
    %3647 = vmatpush1.bf16.msra.mxu0 0
    %3648 = vmatprep.subr.bf16.mxu0 0
    %3649 = vmatpush1.bf16.msra.mxu0 0
    %3650 = vmatprep.subr.bf16.mxu0 0
    %3651 = vmatpush1.bf16.msra.mxu0 0
    %3652 = vmatprep.subr.bf16.mxu0 0
    %3653 = vmatpush1.bf16.msra.mxu0 0
    %3654 = vmatprep.subr.bf16.mxu0 0
    %3655 = vmatpush1.bf16.msra.mxu0 0
    %3656 = vmatprep.mubr.bf16.mxu0 0
    %3657 = vmatmul.mubr.bf16.gmra.mrb[0].mxu0 %v354
    %v3658 = vpop.f32.mrb[0].mxu0
    %v3659 = vadd.f32 0.0, %v3658
    %v3660 = vpop.f32.mrb[0].mxu0
    %v3661 = vpop.f32.mrb[0].mxu0
    %v3662 = vadd.f32 0.0, %v3661
    %v3663 = vpop.f32.mrb[0].mxu0
    %3664 = vmatprep.mubr.bf16.mxu0 0
    %3665 = vmatmul.mubr.bf16.gmra.mrb[0].mxu0 %v355
    %v3666 = vpop.f32.mrb[0].mxu0
    %v3667 = vadd.f32 0.0, %v3666
    %v3668 = vpop.f32.mrb[0].mxu0
    %v3669 = vpop.f32.mrb[0].mxu0
    %v3670 = vadd.f32 0.0, %v3669
    %v3671 = vpop.f32.mrb[0].mxu0
    %3672 = vdwg.mxu0
    %s3673 = scalar_lea.vmem %s5, 448
    %v3674 = vld [vmem:[%s3673] sm:$0xf]
    %v3675 = vld [vmem:[%s3673 + $0x4] sm:$0xf]
    %v3676 = vld [vmem:[%s3673 + $0x8] sm:$0xf]
    %v3677 = vld [vmem:[%s3673 + $0xc] sm:$0xf]
    %v3678 = vld [vmem:[%s3673 + $0x10] sm:$0xf]
    %v3679 = vld [vmem:[%s3673 + $0x14] sm:$0xf]
    %v3680 = vld [vmem:[%s3673 + $0x18] sm:$0xf]
    %v3681 = vld [vmem:[%s3673 + $0x1c] sm:$0xf]
    %v3682 = vpack.c.bf16 %v3662, %v3659
    %v3683 = vpack.c.bf16 %v3670, %v3667
    %v3692 = vunpack.c.l.b16 %v3674
    %v3693 = vunpack.c.l.b16 %v3675
    %v3694 = vunpack.c.l.b16 %v3676
    %v3695 = vunpack.c.l.b16 %v3677
    %v3696 = vunpack.c.l.b16 %v3678
    %v3697 = vunpack.c.l.b16 %v3679
    %v3698 = vunpack.c.l.b16 %v3680
    %v3699 = vunpack.c.l.b16 %v3681
    %v3700 = vpack.c.b16 %v3693, %v3692
    %v3701 = vpack.c.b16 %v3695, %v3694
    %v3702 = vpack.c.b16 %v3697, %v3696
    %v3703 = vpack.c.b16 %v3699, %v3698
    %v3705 = vsel %vm624, %v3700, 0
    %v3708 = vsel %vm624, %v3701, 0
    %v3711 = vsel %vm624, %v3702, 0
    %v3714 = vsel %vm624, %v3703, 0
    %3716 = vmatprep.subr.bf16.mxu0 0
    %3717 = vmatpush1.bf16.msra.mxu0 %v3682
    %3718 = vmatprep.subr.bf16.mxu0 0
    %3719 = vmatpush1.bf16.msra.mxu0 %v3683
    %3720 = vmatprep.subr.bf16.mxu0 0
    %3721 = vmatpush1.bf16.msra.mxu0 0
    %3722 = vmatprep.subr.bf16.mxu0 0
    %3723 = vmatpush1.bf16.msra.mxu0 0
    %3724 = vmatprep.subr.bf16.mxu0 0
    %3725 = vmatpush1.bf16.msra.mxu0 0
    %3726 = vmatprep.subr.bf16.mxu0 0
    %3727 = vmatpush1.bf16.msra.mxu0 0
    %3728 = vmatprep.subr.bf16.mxu0 0
    %3729 = vmatpush1.bf16.msra.mxu0 0
    %3730 = vmatprep.subr.bf16.mxu0 0
    %3731 = vmatpush1.bf16.msra.mxu0 0
    %3732 = vmatprep.subr.bf16.mxu0 0
    %3733 = vmatpush1.bf16.msra.mxu0 0
    %3734 = vmatprep.subr.bf16.mxu0 0
    %3735 = vmatpush1.bf16.msra.mxu0 0
    %3736 = vmatprep.subr.bf16.mxu0 0
    %3737 = vmatpush1.bf16.msra.mxu0 0
    %3738 = vmatprep.subr.bf16.mxu0 0
    %3739 = vmatpush1.bf16.msra.mxu0 0
    %3740 = vmatprep.subr.bf16.mxu0 0
    %3741 = vmatpush1.bf16.msra.mxu0 0
    %3742 = vmatprep.subr.bf16.mxu0 0
    %3743 = vmatpush1.bf16.msra.mxu0 0
    %3744 = vmatprep.subr.bf16.mxu0 0
    %3745 = vmatpush1.bf16.msra.mxu0 0
    %3746 = vmatprep.subr.bf16.mxu0 0
    %3747 = vmatpush1.bf16.msra.mxu0 0
    %3748 = vmatprep.mubr.bf16.mxu0 0
    %3749 = vmatmul.mubr.bf16.gmra.mrb[0].mxu0 %v3705
    %v3750 = vpop.f32.mrb[0].mxu0
    %v3751 = vadd.f32 0.0, %v3750
    %v3752 = vpop.f32.mrb[0].mxu0
    %v3753 = vpop.f32.mrb[0].mxu0
    %v3754 = vadd.f32 0.0, %v3753
    %v3755 = vpop.f32.mrb[0].mxu0
    %3756 = vmatprep.mubr.bf16.mxu0 0
    %3757 = vmatmul.mubr.bf16.gmra.mrb[0].mxu0 %v3708
    %v3758 = vpop.f32.mrb[0].mxu0
    %v3759 = vadd.f32 0.0, %v3758
    %v3760 = vpop.f32.mrb[0].mxu0
    %v3761 = vpop.f32.mrb[0].mxu0
    %v3762 = vadd.f32 0.0, %v3761
    %v3763 = vpop.f32.mrb[0].mxu0
    %3764 = vmatprep.mubr.bf16.mxu0 0
    %3765 = vmatmul.mubr.bf16.gmra.mrb[0].mxu0 %v3711
    %v3766 = vpop.f32.mrb[0].mxu0
    %v3767 = vadd.f32 0.0, %v3766
    %v3768 = vpop.f32.mrb[0].mxu0
    %v3769 = vpop.f32.mrb[0].mxu0
    %v3770 = vadd.f32 0.0, %v3769
    %v3771 = vpop.f32.mrb[0].mxu0
    %3772 = vmatprep.mubr.bf16.mxu0 0
    %3773 = vmatmul.mubr.bf16.gmra.mrb[0].mxu0 %v3714
    %v3774 = vpop.f32.mrb[0].mxu0
    %v3775 = vadd.f32 0.0, %v3774
    %v3776 = vpop.f32.mrb[0].mxu0
    %v3777 = vpop.f32.mrb[0].mxu0
    %v3778 = vadd.f32 0.0, %v3777
    %v3779 = vpop.f32.mrb[0].mxu0
    %3780 = vdwg.mxu0
    %v3781 = vadd.f32 %v3551, %v3751
    %v3782 = vadd.f32 %v3552, %v3754
    %v3783 = vadd.f32 %v3553, %v3759
    %v3784 = vadd.f32 %v3554, %v3762
    %v3785 = vadd.f32 %v3555, %v3767
    %v3786 = vadd.f32 %v3556, %v3770
    %v3787 = vadd.f32 %v3557, %v3775
    %v3788 = vadd.f32 %v3558, %v3778
    %s3789 = scalar_lea.vmem %s4, 960
    %v3790 = vld [vmem:[%s3789] sm:$0xf]
    %v3791 = vld [vmem:[%s3789 + $0x4] sm:$0xf]
    %v3792 = vld [vmem:[%s3789 + $0x8] sm:$0xf]
    %v3793 = vld [vmem:[%s3789 + $0xc] sm:$0xf]
    %v3794 = vld [vmem:[%s3789 + $0x10] sm:$0xf]
    %v3795 = vld [vmem:[%s3789 + $0x14] sm:$0xf]
    %v3796 = vld [vmem:[%s3789 + $0x18] sm:$0xf]
    %v3797 = vld [vmem:[%s3789 + $0x1c] sm:$0xf]
    %v3798 = vld [vmem:[%s3789 + $0x20] sm:$0xf]
    %v3799 = vld [vmem:[%s3789 + $0x24] sm:$0xf]
    %v3800 = vld [vmem:[%s3789 + $0x28] sm:$0xf]
    %v3801 = vld [vmem:[%s3789 + $0x2c] sm:$0xf]
    %v3802 = vld [vmem:[%s3789 + $0x30] sm:$0xf]
    %v3803 = vld [vmem:[%s3789 + $0x34] sm:$0xf]
    %v3804 = vld [vmem:[%s3789 + $0x38] sm:$0xf]
    %v3805 = vld [vmem:[%s3789 + $0x3c] sm:$0xf]
    %v3822 = vunpack.c.l.b16 %v3790
    %v3823 = vunpack.c.l.b16 %v3791
    %v3824 = vunpack.c.l.b16 %v3792
    %v3825 = vunpack.c.l.b16 %v3793
    %v3826 = vunpack.c.l.b16 %v3794
    %v3827 = vunpack.c.l.b16 %v3795
    %v3828 = vunpack.c.l.b16 %v3796
    %v3829 = vunpack.c.l.b16 %v3797
    %v3830 = vunpack.c.l.b16 %v3798
    %v3831 = vunpack.c.l.b16 %v3799
    %v3832 = vunpack.c.l.b16 %v3800
    %v3833 = vunpack.c.l.b16 %v3801
    %v3834 = vunpack.c.l.b16 %v3802
    %v3835 = vunpack.c.l.b16 %v3803
    %v3836 = vunpack.c.l.b16 %v3804
    %v3837 = vunpack.c.l.b16 %v3805
    %v3838 = vpack.c.b16 %v3823, %v3822
    %v3839 = vpack.c.b16 %v3825, %v3824
    %v3840 = vpack.c.b16 %v3827, %v3826
    %v3841 = vpack.c.b16 %v3829, %v3828
    %v3842 = vpack.c.b16 %v3831, %v3830
    %v3843 = vpack.c.b16 %v3833, %v3832
    %v3844 = vpack.c.b16 %v3835, %v3834
    %v3845 = vpack.c.b16 %v3837, %v3836
    %3854 = vmatprep.subr.bf16.mxu0 0
    %3855 = vmatpush1.bf16.msra.mxu0 %v3838
    %3856 = vmatprep.subr.bf16.mxu0 0
    %3857 = vmatpush1.bf16.msra.mxu0 %v3839
    %3858 = vmatprep.subr.bf16.mxu0 0
    %3859 = vmatpush1.bf16.msra.mxu0 %v3840
    %3860 = vmatprep.subr.bf16.mxu0 0
    %3861 = vmatpush1.bf16.msra.mxu0 %v3841
    %3862 = vmatprep.subr.bf16.mxu0 0
    %3863 = vmatpush1.bf16.msra.mxu0 %v3842
    %3864 = vmatprep.subr.bf16.mxu0 0
    %3865 = vmatpush1.bf16.msra.mxu0 %v3843
    %3866 = vmatprep.subr.bf16.mxu0 0
    %3867 = vmatpush1.bf16.msra.mxu0 %v3844
    %3868 = vmatprep.subr.bf16.mxu0 0
    %3869 = vmatpush1.bf16.msra.mxu0 %v3845
    %3870 = vmatprep.subr.bf16.mxu0 0
    %3871 = vmatpush1.bf16.msra.mxu0 0
    %3872 = vmatprep.subr.bf16.mxu0 0
    %3873 = vmatpush1.bf16.msra.mxu0 0
    %3874 = vmatprep.subr.bf16.mxu0 0
    %3875 = vmatpush1.bf16.msra.mxu0 0
    %3876 = vmatprep.subr.bf16.mxu0 0
    %3877 = vmatpush1.bf16.msra.mxu0 0
    %3878 = vmatprep.subr.bf16.mxu0 0
    %3879 = vmatpush1.bf16.msra.mxu0 0
    %3880 = vmatprep.subr.bf16.mxu0 0
    %3881 = vmatpush1.bf16.msra.mxu0 0
    %3882 = vmatprep.subr.bf16.mxu0 0
    %3883 = vmatpush1.bf16.msra.mxu0 0
    %3884 = vmatprep.subr.bf16.mxu0 0
    %3885 = vmatpush1.bf16.msra.mxu0 0
    %3886 = vmatprep.mubr.bf16.mxu0 0
    %3887 = vmatmul.mubr.bf16.gmra.mrb[0].mxu0 %v354
    %v3888 = vpop.f32.mrb[0].mxu0
    %v3889 = vadd.f32 0.0, %v3888
    %v3890 = vpop.f32.mrb[0].mxu0
    %v3891 = vpop.f32.mrb[0].mxu0
    %v3892 = vadd.f32 0.0, %v3891
    %v3893 = vpop.f32.mrb[0].mxu0
    %3894 = vmatprep.mubr.bf16.mxu0 0
    %3895 = vmatmul.mubr.bf16.gmra.mrb[0].mxu0 %v355
    %v3896 = vpop.f32.mrb[0].mxu0
    %v3897 = vadd.f32 0.0, %v3896
    %v3898 = vpop.f32.mrb[0].mxu0
    %v3899 = vpop.f32.mrb[0].mxu0
    %v3900 = vadd.f32 0.0, %v3899
    %v3901 = vpop.f32.mrb[0].mxu0
    %3902 = vdwg.mxu0
    %s3903 = scalar_lea.vmem %s5, 480
    %v3904 = vld [vmem:[%s3903] sm:$0xf]
    %v3905 = vld [vmem:[%s3903 + $0x4] sm:$0xf]
    %v3906 = vld [vmem:[%s3903 + $0x8] sm:$0xf]
    %v3907 = vld [vmem:[%s3903 + $0xc] sm:$0xf]
    %v3908 = vld [vmem:[%s3903 + $0x10] sm:$0xf]
    %v3909 = vld [vmem:[%s3903 + $0x14] sm:$0xf]
    %v3910 = vld [vmem:[%s3903 + $0x18] sm:$0xf]
    %v3911 = vld [vmem:[%s3903 + $0x1c] sm:$0xf]
    %v3912 = vpack.c.bf16 %v3892, %v3889
    %v3913 = vpack.c.bf16 %v3900, %v3897
    %v3922 = vunpack.c.l.b16 %v3904
    %v3923 = vunpack.c.l.b16 %v3905
    %v3924 = vunpack.c.l.b16 %v3906
    %v3925 = vunpack.c.l.b16 %v3907
    %v3926 = vunpack.c.l.b16 %v3908
    %v3927 = vunpack.c.l.b16 %v3909
    %v3928 = vunpack.c.l.b16 %v3910
    %v3929 = vunpack.c.l.b16 %v3911
    %v3930 = vpack.c.b16 %v3923, %v3922
    %v3931 = vpack.c.b16 %v3925, %v3924
    %v3932 = vpack.c.b16 %v3927, %v3926
    %v3933 = vpack.c.b16 %v3929, %v3928
    %v3935 = vsel %vm624, %v3930, 0
    %v3938 = vsel %vm624, %v3931, 0
    %v3941 = vsel %vm624, %v3932, 0
    %v3944 = vsel %vm624, %v3933, 0
    %3946 = vmatprep.subr.bf16.mxu0 0
    %3947 = vmatpush1.bf16.msra.mxu0 %v3912
    %3948 = vmatprep.subr.bf16.mxu0 0
    %3949 = vmatpush1.bf16.msra.mxu0 %v3913
    %3950 = vmatprep.subr.bf16.mxu0 0
    %3951 = vmatpush1.bf16.msra.mxu0 0
    %3952 = vmatprep.subr.bf16.mxu0 0
    %3953 = vmatpush1.bf16.msra.mxu0 0
    %3954 = vmatprep.subr.bf16.mxu0 0
    %3955 = vmatpush1.bf16.msra.mxu0 0
    %3956 = vmatprep.subr.bf16.mxu0 0
    %3957 = vmatpush1.bf16.msra.mxu0 0
    %3958 = vmatprep.subr.bf16.mxu0 0
    %3959 = vmatpush1.bf16.msra.mxu0 0
    %3960 = vmatprep.subr.bf16.mxu0 0
    %3961 = vmatpush1.bf16.msra.mxu0 0
    %3962 = vmatprep.subr.bf16.mxu0 0
    %3963 = vmatpush1.bf16.msra.mxu0 0
    %3964 = vmatprep.subr.bf16.mxu0 0
    %3965 = vmatpush1.bf16.msra.mxu0 0
    %3966 = vmatprep.subr.bf16.mxu0 0
    %3967 = vmatpush1.bf16.msra.mxu0 0
    %3968 = vmatprep.subr.bf16.mxu0 0
    %3969 = vmatpush1.bf16.msra.mxu0 0
    %3970 = vmatprep.subr.bf16.mxu0 0
    %3971 = vmatpush1.bf16.msra.mxu0 0
    %3972 = vmatprep.subr.bf16.mxu0 0
    %3973 = vmatpush1.bf16.msra.mxu0 0
    %3974 = vmatprep.subr.bf16.mxu0 0
    %3975 = vmatpush1.bf16.msra.mxu0 0
    %3976 = vmatprep.subr.bf16.mxu0 0
    %3977 = vmatpush1.bf16.msra.mxu0 0
    %3978 = vmatprep.mubr.bf16.mxu0 0
    %3979 = vmatmul.mubr.bf16.gmra.mrb[0].mxu0 %v3935
    %v3980 = vpop.f32.mrb[0].mxu0
    %v3981 = vadd.f32 0.0, %v3980
    %v3982 = vpop.f32.mrb[0].mxu0
    %v3983 = vpop.f32.mrb[0].mxu0
    %v3984 = vadd.f32 0.0, %v3983
    %v3985 = vpop.f32.mrb[0].mxu0
    %3986 = vmatprep.mubr.bf16.mxu0 0
    %3987 = vmatmul.mubr.bf16.gmra.mrb[0].mxu0 %v3938
    %v3988 = vpop.f32.mrb[0].mxu0
    %v3989 = vadd.f32 0.0, %v3988
    %v3990 = vpop.f32.mrb[0].mxu0
    %v3991 = vpop.f32.mrb[0].mxu0
    %v3992 = vadd.f32 0.0, %v3991
    %v3993 = vpop.f32.mrb[0].mxu0
    %3994 = vmatprep.mubr.bf16.mxu0 0
    %3995 = vmatmul.mubr.bf16.gmra.mrb[0].mxu0 %v3941
    %v3996 = vpop.f32.mrb[0].mxu0
    %v3997 = vadd.f32 0.0, %v3996
    %v3998 = vpop.f32.mrb[0].mxu0
    %v3999 = vpop.f32.mrb[0].mxu0
    %v4000 = vadd.f32 0.0, %v3999
    %v4001 = vpop.f32.mrb[0].mxu0
    %4002 = vmatprep.mubr.bf16.mxu0 0
    %4003 = vmatmul.mubr.bf16.gmra.mrb[0].mxu0 %v3944
    %v4004 = vpop.f32.mrb[0].mxu0
    %v4005 = vadd.f32 0.0, %v4004
    %v4006 = vpop.f32.mrb[0].mxu0
    %v4007 = vpop.f32.mrb[0].mxu0
    %v4008 = vadd.f32 0.0, %v4007
    %v4009 = vpop.f32.mrb[0].mxu0
    %4010 = vdwg.mxu0
    %v4011 = vadd.f32 %v3781, %v3981
    %v4012 = vadd.f32 %v3782, %v3984
    %v4013 = vadd.f32 %v3783, %v3989
    %v4014 = vadd.f32 %v3784, %v3992
    %v4015 = vadd.f32 %v3785, %v3997
    %v4016 = vadd.f32 %v3786, %v4000
    %v4017 = vadd.f32 %v3787, %v4005
    %v4018 = vadd.f32 %v3788, %v4008
    %v4019 = vsel %vm624, %v4011, 0.0
    %4020 = vadd.xlane.f32.xlu0 %v4019
    %v4021 = vpop.xlane.xlu0 %4020
    %v4022 = vsel %vm624, %v4012, 0.0
    %4023 = vadd.xlane.f32.xlu0 %v4022
    %v4024 = vpop.xlane.xlu0 %4023
    %v4025 = vsel %vm624, %v4013, 0.0
    %4026 = vadd.xlane.f32.xlu0 %v4025
    %v4027 = vpop.xlane.xlu0 %4026
    %v4028 = vsel %vm624, %v4014, 0.0
    %4029 = vadd.xlane.f32.xlu0 %v4028
    %v4030 = vpop.xlane.xlu0 %4029
    %v4031 = vsel %vm624, %v4015, 0.0
    %4032 = vadd.xlane.f32.xlu0 %v4031
    %v4033 = vpop.xlane.xlu0 %4032
    %v4034 = vsel %vm624, %v4016, 0.0
    %4035 = vadd.xlane.f32.xlu0 %v4034
    %v4036 = vpop.xlane.xlu0 %4035
    %v4037 = vsel %vm624, %v4017, 0.0
    %4038 = vadd.xlane.f32.xlu0 %v4037
    %v4039 = vpop.xlane.xlu0 %4038
    %v4040 = vsel %vm624, %v4018, 0.0
    %4041 = vadd.xlane.f32.xlu0 %v4040
    %v4042 = vpop.xlane.xlu0 %4041
    %v4043 = vrcp.pop 32.0
    %v4044 = vmul.f32 %v4021, %v4043
    %v4045 = vmul.f32 %v4024, %v4043
    %v4046 = vmul.f32 %v4027, %v4043
    %v4047 = vmul.f32 %v4030, %v4043
    %v4048 = vmul.f32 %v4033, %v4043
    %v4049 = vmul.f32 %v4036, %v4043
    %v4050 = vmul.f32 %v4039, %v4043
    %v4051 = vmul.f32 %v4042, %v4043
    %v4052 = vsub.f32 %v4011, %v4044
    %v4053 = vsub.f32 %v4012, %v4045
    %v4054 = vsub.f32 %v4013, %v4046
    %v4055 = vsub.f32 %v4014, %v4047
    %v4056 = vsub.f32 %v4015, %v4048
    %v4057 = vsub.f32 %v4016, %v4049
    %v4058 = vsub.f32 %v4017, %v4050
    %v4059 = vsub.f32 %v4018, %v4051
    %v4060 = vmul.f32 %v4052, %v4052
    %v4061 = vmul.f32 %v4053, %v4053
    %v4062 = vmul.f32 %v4054, %v4054
    %v4063 = vmul.f32 %v4055, %v4055
    %v4064 = vmul.f32 %v4056, %v4056
    %v4065 = vmul.f32 %v4057, %v4057
    %v4066 = vmul.f32 %v4058, %v4058
    %v4067 = vmul.f32 %v4059, %v4059
    %v4068 = vsel %vm624, %v4060, 0.0
    %4069 = vadd.xlane.f32.xlu0 %v4068
    %v4070 = vpop.xlane.xlu0 %4069
    %v4071 = vsel %vm624, %v4061, 0.0
    %4072 = vadd.xlane.f32.xlu0 %v4071
    %v4073 = vpop.xlane.xlu0 %4072
    %v4074 = vsel %vm624, %v4062, 0.0
    %4075 = vadd.xlane.f32.xlu0 %v4074
    %v4076 = vpop.xlane.xlu0 %4075
    %v4077 = vsel %vm624, %v4063, 0.0
    %4078 = vadd.xlane.f32.xlu0 %v4077
    %v4079 = vpop.xlane.xlu0 %4078
    %v4080 = vsel %vm624, %v4064, 0.0
    %4081 = vadd.xlane.f32.xlu0 %v4080
    %v4082 = vpop.xlane.xlu0 %4081
    %v4083 = vsel %vm624, %v4065, 0.0
    %4084 = vadd.xlane.f32.xlu0 %v4083
    %v4085 = vpop.xlane.xlu0 %4084
    %v4086 = vsel %vm624, %v4066, 0.0
    %4087 = vadd.xlane.f32.xlu0 %v4086
    %v4088 = vpop.xlane.xlu0 %4087
    %v4089 = vsel %vm624, %v4067, 0.0
    %4090 = vadd.xlane.f32.xlu0 %v4089
    %v4091 = vpop.xlane.xlu0 %4090
    %v4092 = vmul.f32 %v4070, %v4043
    %v4093 = vmul.f32 %v4073, %v4043
    %v4094 = vmul.f32 %v4076, %v4043
    %v4095 = vmul.f32 %v4079, %v4043
    %v4096 = vmul.f32 %v4082, %v4043
    %v4097 = vmul.f32 %v4085, %v4043
    %v4098 = vmul.f32 %v4088, %v4043
    %v4099 = vmul.f32 %v4091, %v4043
    %v4100 = vadd.f32 %v4092, 1e-05
    %v4101 = vadd.f32 %v4093, 1e-05
    %v4102 = vadd.f32 %v4094, 1e-05
    %v4103 = vadd.f32 %v4095, 1e-05
    %v4104 = vadd.f32 %v4096, 1e-05
    %v4105 = vadd.f32 %v4097, 1e-05
    %v4106 = vadd.f32 %v4098, 1e-05
    %v4107 = vadd.f32 %v4099, 1e-05
    %v4108 = vrsqrt.pop %v4100
    %v4109 = vrsqrt.pop %v4101
    %v4110 = vrsqrt.pop %v4102
    %v4111 = vrsqrt.pop %v4103
    %v4112 = vrsqrt.pop %v4104
    %v4113 = vrsqrt.pop %v4105
    %v4114 = vrsqrt.pop %v4106
    %v4115 = vrsqrt.pop %v4107
    %v4116 = vmul.f32 %v4052, %v4108
    %v4117 = vmul.f32 %v4053, %v4109
    %v4118 = vmul.f32 %v4054, %v4110
    %v4119 = vmul.f32 %v4055, %v4111
    %v4120 = vmul.f32 %v4056, %v4112
    %v4121 = vmul.f32 %v4057, %v4113
    %v4122 = vmul.f32 %v4058, %v4114
    %v4123 = vmul.f32 %v4059, %v4115
    %v4124 = vld [vmem:[%s6] sm:$0xff]
    %v4125 = vld [vmem:[%s6 + $0x8] sm:$0xff]
    %v4126 = vld [vmem:[%s6 + $0x10] sm:$0xff]
    %v4127 = vld [vmem:[%s6 + $0x18] sm:$0xff]
    %v4128 = vld [vmem:[%s6 + $0x20] sm:$0xff]
    %v4129 = vld [vmem:[%s6 + $0x28] sm:$0xff]
    %v4130 = vld [vmem:[%s6 + $0x30] sm:$0xff]
    %v4131 = vld [vmem:[%s6 + $0x38] sm:$0xff]
    %4133 = vset.pattern.permute.xlu0 0
    %4134 = vperm.xlu0 %4133, %v4124
    %v4135 = vpop.permute.xlu0 %4134
    %4138 = vset.pattern.permute.xlu0 0
    %4139 = vperm.xlu0 %4138, %v4125
    %v4140 = vpop.permute.xlu0 %4139
    %4143 = vset.pattern.permute.xlu0 0
    %4144 = vperm.xlu0 %4143, %v4126
    %v4145 = vpop.permute.xlu0 %4144
    %4148 = vset.pattern.permute.xlu0 0
    %4149 = vperm.xlu0 %4148, %v4127
    %v4150 = vpop.permute.xlu0 %4149
    %4153 = vset.pattern.permute.xlu0 0
    %4154 = vperm.xlu0 %4153, %v4128
    %v4155 = vpop.permute.xlu0 %4154
    %4158 = vset.pattern.permute.xlu0 0
    %4159 = vperm.xlu0 %4158, %v4129
    %v4160 = vpop.permute.xlu0 %4159
    %4163 = vset.pattern.permute.xlu0 0
    %4164 = vperm.xlu0 %4163, %v4130
    %v4165 = vpop.permute.xlu0 %4164
    %4168 = vset.pattern.permute.xlu0 0
    %4169 = vperm.xlu0 %4168, %v4131
    %v4170 = vpop.permute.xlu0 %4169
    %v4172 = vmul.f32 %v4116, %v4135
    %v4173 = vmul.f32 %v4117, %v4140
    %v4174 = vmul.f32 %v4118, %v4145
    %v4175 = vmul.f32 %v4119, %v4150
    %v4176 = vmul.f32 %v4120, %v4155
    %v4177 = vmul.f32 %v4121, %v4160
    %v4178 = vmul.f32 %v4122, %v4165
    %v4179 = vmul.f32 %v4123, %v4170
    %v4180 = vld [vmem:[%s7] sm:$0xff]
    %v4181 = vld [vmem:[%s7 + $0x8] sm:$0xff]
    %v4182 = vld [vmem:[%s7 + $0x10] sm:$0xff]
    %v4183 = vld [vmem:[%s7 + $0x18] sm:$0xff]
    %v4184 = vld [vmem:[%s7 + $0x20] sm:$0xff]
    %v4185 = vld [vmem:[%s7 + $0x28] sm:$0xff]
    %v4186 = vld [vmem:[%s7 + $0x30] sm:$0xff]
    %v4187 = vld [vmem:[%s7 + $0x38] sm:$0xff]
    %4189 = vset.pattern.permute.xlu0 0
    %4190 = vperm.xlu0 %4189, %v4180
    %v4191 = vpop.permute.xlu0 %4190
    %4194 = vset.pattern.permute.xlu0 0
    %4195 = vperm.xlu0 %4194, %v4181
    %v4196 = vpop.permute.xlu0 %4195
    %4199 = vset.pattern.permute.xlu0 0
    %4200 = vperm.xlu0 %4199, %v4182
    %v4201 = vpop.permute.xlu0 %4200
    %4204 = vset.pattern.permute.xlu0 0
    %4205 = vperm.xlu0 %4204, %v4183
    %v4206 = vpop.permute.xlu0 %4205
    %4209 = vset.pattern.permute.xlu0 0
    %4210 = vperm.xlu0 %4209, %v4184
    %v4211 = vpop.permute.xlu0 %4210
    %4214 = vset.pattern.permute.xlu0 0
    %4215 = vperm.xlu0 %4214, %v4185
    %v4216 = vpop.permute.xlu0 %4215
    %4219 = vset.pattern.permute.xlu0 0
    %4220 = vperm.xlu0 %4219, %v4186
    %v4221 = vpop.permute.xlu0 %4220
    %4224 = vset.pattern.permute.xlu0 0
    %4225 = vperm.xlu0 %4224, %v4187
    %v4226 = vpop.permute.xlu0 %4225
    %v4228 = vadd.f32 %v4172, %v4191
    %v4229 = vadd.f32 %v4173, %v4196
    %v4230 = vadd.f32 %v4174, %v4201
    %v4231 = vadd.f32 %v4175, %v4206
    %v4232 = vadd.f32 %v4176, %v4211
    %v4233 = vadd.f32 %v4177, %v4216
    %v4234 = vadd.f32 %v4178, %v4221
    %v4235 = vadd.f32 %v4179, %v4226
    %vm4236 = vcmp.gt.f32.partialorder %v4228, 0.0
    %vm4237 = vcmp.gt.f32.partialorder %v4229, 0.0
    %vm4238 = vcmp.gt.f32.partialorder %v4230, 0.0
    %vm4239 = vcmp.gt.f32.partialorder %v4231, 0.0
    %vm4240 = vcmp.gt.f32.partialorder %v4232, 0.0
    %vm4241 = vcmp.gt.f32.partialorder %v4233, 0.0
    %vm4242 = vcmp.gt.f32.partialorder %v4234, 0.0
    %vm4243 = vcmp.gt.f32.partialorder %v4235, 0.0
    %v4244 = vmul.f32 %v4228, 0.2
    %v4245 = vmul.f32 %v4229, 0.2
    %v4246 = vmul.f32 %v4230, 0.2
    %v4247 = vmul.f32 %v4231, 0.2
    %v4248 = vmul.f32 %v4232, 0.2
    %v4249 = vmul.f32 %v4233, 0.2
    %v4250 = vmul.f32 %v4234, 0.2
    %v4251 = vmul.f32 %v4235, 0.2
    %v4252 = vsel %vm4236, %v4228, %v4244
    %v4253 = vsel %vm4237, %v4229, %v4245
    %v4254 = vsel %vm4238, %v4230, %v4246
    %v4255 = vsel %vm4239, %v4231, %v4247
    %v4256 = vsel %vm4240, %v4232, %v4248
    %v4257 = vsel %vm4241, %v4233, %v4249
    %v4258 = vsel %vm4242, %v4234, %v4250
    %v4259 = vsel %vm4243, %v4235, %v4251
    %v4260 = vld [vmem:[%s8] sm:$0xff]
    %v4261 = vld [vmem:[%s8 + $0x8] sm:$0xff]
    %v4262 = vld [vmem:[%s8 + $0x10] sm:$0xff]
    %v4263 = vld [vmem:[%s8 + $0x18] sm:$0xff]
    %v4264 = vld [vmem:[%s8 + $0x20] sm:$0xff]
    %v4265 = vld [vmem:[%s8 + $0x28] sm:$0xff]
    %v4266 = vld [vmem:[%s8 + $0x30] sm:$0xff]
    %v4267 = vld [vmem:[%s8 + $0x38] sm:$0xff]
    %v4268 = vld [vmem:[%s9] sm:$0x1]
    %v4269 = vld [vmem:[%s10] sm:$0xff]
    %v4270 = vld [vmem:[%s10 + $0x8] sm:$0xff]
    %vm4271 = vcmask 130048
    %v4273 = vsel %vm4271, %v4268, 0
    %4275 = vmatprep.subr.mxu0 0.0
    %4276 = vmatpush1.msra.mxu0 %v4269
    %4277 = vmatprep.subr.mxu0 0.0
    %4278 = vmatpush1.msra.mxu0 %v4270
    %4279 = vmatprep.subr.mxu0 0.0
    %4280 = vmatpush1.msra.mxu0 0.0
    %4281 = vmatprep.subr.mxu0 0.0
    %4282 = vmatpush1.msra.mxu0 0.0
    %4283 = vmatprep.subr.mxu0 0.0
    %4284 = vmatpush1.msra.mxu0 0.0
    %4285 = vmatprep.subr.mxu0 0.0
    %4286 = vmatpush1.msra.mxu0 0.0
    %4287 = vmatprep.subr.mxu0 0.0
    %4288 = vmatpush1.msra.mxu0 0.0
    %4289 = vmatprep.subr.mxu0 0.0
    %4290 = vmatpush1.msra.mxu0 0.0
    %4291 = vmatprep.subr.mxu0 0.0
    %4292 = vmatpush1.msra.mxu0 0.0
    %4293 = vmatprep.subr.mxu0 0.0
    %4294 = vmatpush1.msra.mxu0 0.0
    %4295 = vmatprep.subr.mxu0 0.0
    %4296 = vmatpush1.msra.mxu0 0.0
    %4297 = vmatprep.subr.mxu0 0.0
    %4298 = vmatpush1.msra.mxu0 0.0
    %4299 = vmatprep.subr.mxu0 0.0
    %4300 = vmatpush1.msra.mxu0 0.0
    %4301 = vmatprep.subr.mxu0 0.0
    %4302 = vmatpush1.msra.mxu0 0.0
    %4303 = vmatprep.subr.mxu0 0.0
    %4304 = vmatpush1.msra.mxu0 0.0
    %4305 = vmatprep.subr.mxu0 0.0
    %4306 = vmatpush1.msra.mxu0 0.0
    %4307 = vmatprep.subr.mxu0 0.0
    %4308 = vmatpush1.msra.mxu0 0.0
    %4309 = vmatprep.subr.mxu0 0.0
    %4310 = vmatpush1.msra.mxu0 0.0
    %4311 = vmatprep.subr.mxu0 0.0
    %4312 = vmatpush1.msra.mxu0 0.0
    %4313 = vmatprep.subr.mxu0 0.0
    %4314 = vmatpush1.msra.mxu0 0.0
    %4315 = vmatprep.subr.mxu0 0.0
    %4316 = vmatpush1.msra.mxu0 0.0
    %4317 = vmatprep.subr.mxu0 0.0
    %4318 = vmatpush1.msra.mxu0 0.0
    %4319 = vmatprep.subr.mxu0 0.0
    %4320 = vmatpush1.msra.mxu0 0.0
    %4321 = vmatprep.subr.mxu0 0.0
    %4322 = vmatpush1.msra.mxu0 0.0
    %4323 = vmatprep.subr.mxu0 0.0
    %4324 = vmatpush1.msra.mxu0 0.0
    %4325 = vmatprep.subr.mxu0 0.0
    %4326 = vmatpush1.msra.mxu0 0.0
    %4327 = vmatprep.subr.mxu0 0.0
    %4328 = vmatpush1.msra.mxu0 0.0
    %4329 = vmatprep.subr.mxu0 0.0
    %4330 = vmatpush1.msra.mxu0 0.0
    %4331 = vmatprep.subr.mxu0 0.0
    %4332 = vmatpush1.msra.mxu0 0.0
    %4333 = vmatprep.subr.mxu0 0.0
    %4334 = vmatpush1.msra.mxu0 0.0
    %4335 = vmatprep.subr.mxu0 0.0
    %4336 = vmatpush1.msra.mxu0 0.0
    %4337 = vmatprep.subr.mxu0 0.0
    %4338 = vmatpush1.msra.mxu0 0.0
    %4339 = vmatprep.mubr.f32.mxu0 0.0
    %4340 = vmatmul.mubr.f32.gmra.mrb[0].mxu0 %v4273
    %v4341 = vpop.f32.mrb[0].mxu0
    %v4342 = vadd.f32 0.0, %v4341
    %v4343 = vpop.f32.mrb[0].mxu0
    %4344 = vdwg.mxu0
    %v4345 = vlaneseq
    %v4346 = vand.u32 %v4345, 127
    %v4347 = vmul.f32 %v4252, %v4260
    %v4348 = vmul.f32 %v4253, %v4261
    %v4349 = vmul.f32 %v4254, %v4262
    %v4350 = vmul.f32 %v4255, %v4263
    %v4351 = vmul.f32 %v4256, %v4264
    %v4352 = vmul.f32 %v4257, %v4265
    %v4353 = vmul.f32 %v4258, %v4266
    %v4354 = vmul.f32 %v4259, %v4267
    %v4355 = vsel %vm4271, %v4347, 0.0
    %4356 = vadd.xlane.f32.xlu0 %v4355
    %v4357 = vpop.xlane.xlu0 %4356
    %v4358 = vsel %vm4271, %v4348, 0.0
    %4359 = vadd.xlane.f32.xlu0 %v4358
    %v4360 = vpop.xlane.xlu0 %4359
    %v4361 = vsel %vm4271, %v4349, 0.0
    %4362 = vadd.xlane.f32.xlu0 %v4361
    %v4363 = vpop.xlane.xlu0 %4362
    %v4364 = vsel %vm4271, %v4350, 0.0
    %4365 = vadd.xlane.f32.xlu0 %v4364
    %v4366 = vpop.xlane.xlu0 %4365
    %v4367 = vsel %vm4271, %v4351, 0.0
    %4368 = vadd.xlane.f32.xlu0 %v4367
    %v4369 = vpop.xlane.xlu0 %4368
    %v4370 = vsel %vm4271, %v4352, 0.0
    %4371 = vadd.xlane.f32.xlu0 %v4370
    %v4372 = vpop.xlane.xlu0 %4371
    %v4373 = vsel %vm4271, %v4353, 0.0
    %4374 = vadd.xlane.f32.xlu0 %v4373
    %v4375 = vpop.xlane.xlu0 %4374
    %v4376 = vsel %vm4271, %v4354, 0.0
    %4377 = vadd.xlane.f32.xlu0 %v4376
    %v4378 = vpop.xlane.xlu0 %4377
    %v4379 = vadd.f32 %v4357, %v4360
    %v4380 = vadd.f32 %v4379, %v4363
    %v4381 = vadd.f32 %v4380, %v4366
    %v4382 = vadd.f32 %v4381, %v4369
    %v4383 = vadd.f32 %v4382, %v4372
    %v4384 = vadd.f32 %v4383, %v4375
    %v4385 = vadd.f32 %v4384, %v4378
    %v4386 = vrot.slane %v4385, 4
    %v4387 = vadd.f32 %v4385, %v4386
    %v4388 = vrot.slane %v4387, 2
    %v4389 = vadd.f32 %v4387, %v4388
    %v4390 = vrot.slane %v4389, 1
    %v4391 = vadd.f32 %v4389, %v4390
    %vm4392 = vcmp.eq.s32.totalorder %v4346, 0
    %v4393 = vsel %vm4392, %v4391, 0.0
    %4402 = vrot.lane.b32.xlu0 %v4260, 16
    %v4403 = vpop.permute.xlu0 %4402
    %4404 = vrot.lane.b32.xlu0 %v4261, 16
    %v4405 = vpop.permute.xlu0 %4404
    %4406 = vrot.lane.b32.xlu0 %v4262, 16
    %v4407 = vpop.permute.xlu0 %4406
    %4408 = vrot.lane.b32.xlu0 %v4263, 16
    %v4409 = vpop.permute.xlu0 %4408
    %4410 = vrot.lane.b32.xlu0 %v4264, 16
    %v4411 = vpop.permute.xlu0 %4410
    %4412 = vrot.lane.b32.xlu0 %v4265, 16
    %v4413 = vpop.permute.xlu0 %4412
    %4414 = vrot.lane.b32.xlu0 %v4266, 16
    %v4415 = vpop.permute.xlu0 %4414
    %4416 = vrot.lane.b32.xlu0 %v4267, 16
    %v4417 = vpop.permute.xlu0 %4416
    %v4426 = vmul.f32 %v4252, %v4403
    %v4427 = vmul.f32 %v4253, %v4405
    %v4428 = vmul.f32 %v4254, %v4407
    %v4429 = vmul.f32 %v4255, %v4409
    %v4430 = vmul.f32 %v4256, %v4411
    %v4431 = vmul.f32 %v4257, %v4413
    %v4432 = vmul.f32 %v4258, %v4415
    %v4433 = vmul.f32 %v4259, %v4417
    %4442 = vrot.lane.b32.xlu0 %v4426, 112
    %v4443 = vpop.permute.xlu0 %4442
    %4444 = vrot.lane.b32.xlu0 %v4427, 112
    %v4445 = vpop.permute.xlu0 %4444
    %4446 = vrot.lane.b32.xlu0 %v4428, 112
    %v4447 = vpop.permute.xlu0 %4446
    %4448 = vrot.lane.b32.xlu0 %v4429, 112
    %v4449 = vpop.permute.xlu0 %4448
    %4450 = vrot.lane.b32.xlu0 %v4430, 112
    %v4451 = vpop.permute.xlu0 %4450
    %4452 = vrot.lane.b32.xlu0 %v4431, 112
    %v4453 = vpop.permute.xlu0 %4452
    %4454 = vrot.lane.b32.xlu0 %v4432, 112
    %v4455 = vpop.permute.xlu0 %4454
    %4456 = vrot.lane.b32.xlu0 %v4433, 112
    %v4457 = vpop.permute.xlu0 %4456
    %v4466 = vsel %vm4271, %v4443, 0.0
    %4467 = vadd.xlane.f32.xlu0 %v4466
    %v4468 = vpop.xlane.xlu0 %4467
    %v4469 = vsel %vm4271, %v4445, 0.0
    %4470 = vadd.xlane.f32.xlu0 %v4469
    %v4471 = vpop.xlane.xlu0 %4470
    %v4472 = vsel %vm4271, %v4447, 0.0
    %4473 = vadd.xlane.f32.xlu0 %v4472
    %v4474 = vpop.xlane.xlu0 %4473
    %v4475 = vsel %vm4271, %v4449, 0.0
    %4476 = vadd.xlane.f32.xlu0 %v4475
    %v4477 = vpop.xlane.xlu0 %4476
    %v4478 = vsel %vm4271, %v4451, 0.0
    %4479 = vadd.xlane.f32.xlu0 %v4478
    %v4480 = vpop.xlane.xlu0 %4479
    %v4481 = vsel %vm4271, %v4453, 0.0
    %4482 = vadd.xlane.f32.xlu0 %v4481
    %v4483 = vpop.xlane.xlu0 %4482
    %v4484 = vsel %vm4271, %v4455, 0.0
    %4485 = vadd.xlane.f32.xlu0 %v4484
    %v4486 = vpop.xlane.xlu0 %4485
    %v4487 = vsel %vm4271, %v4457, 0.0
    %4488 = vadd.xlane.f32.xlu0 %v4487
    %v4489 = vpop.xlane.xlu0 %4488
    %v4490 = vadd.f32 %v4468, %v4471
    %v4491 = vadd.f32 %v4490, %v4474
    %v4492 = vadd.f32 %v4491, %v4477
    %v4493 = vadd.f32 %v4492, %v4480
    %v4494 = vadd.f32 %v4493, %v4483
    %v4495 = vadd.f32 %v4494, %v4486
    %v4496 = vadd.f32 %v4495, %v4489
    %v4497 = vrot.slane %v4496, 4
    %v4498 = vadd.f32 %v4496, %v4497
    %v4499 = vrot.slane %v4498, 2
    %v4500 = vadd.f32 %v4498, %v4499
    %v4501 = vrot.slane %v4500, 1
    %v4502 = vadd.f32 %v4500, %v4501
    %vm4503 = vcmp.eq.s32.totalorder %v4346, 1
    %v4504 = vsel %vm4503, %v4502, %v4393
    %v4505 = vadd.f32 %v4504, %v4342
    %v4506 = vxor.u32 %v4505, 2147483648
    %v4507 = vmul.f32 %v4506, 1.442695
    %v4508 = vpow.pop %v4507
    %v4509 = vadd.f32 %v4508, 1.0
    %v4510 = vrcp.pop %v4509
    %v4511 = vmul.f32 1.0, %v4510
    %vm4512 = vcmask 8192
    %4513 = vst.msk [vmem:[#allocation2] sm:$0x1] %vm4512, %v4511
    // Predicated region
    $region46: #{discriminator_forward.5} parent=1 // pred_check
      _
    $region47: #{discriminator_forward.5} parent=1 // pred_check_branch
      %4515 = sbr.rel (0) target = $region49
    $region48: #{discriminator_forward.5} parent=1 // pred_region
      %s4517 = ssub.s32 16, 16
      %4518 = vsyncadd [#allocation3], %s4517
      %s4520 = sshll.u32 [#allocation2], 4
      %s4521 = int_to_ptr.vmem [resolvable:$true] %s4520
      %4523 = dma.vmem_to_hbm [thread:$0]  %s4521, 16, %s11, [#allocation3]
    $region49: #{discriminator_forward.5} parent=1 // pred_fallthru
      _
    // Predicated region
    $region50: #{discriminator_forward.5} parent=1 // pred_check
      _
    $region51: #{discriminator_forward.5} parent=1 // pred_check_branch
      %4525 = sbr.rel (0) target = $region53
    $region52: #{discriminator_forward.5} parent=1 // pred_region
      %4526 = dma.done [#allocation3], 16
    $region53: #{discriminator_forward.5} parent=1 // pred_fallthru
      _
    %4527 = vsyncpa [#allocation3], 1

</llo_original>
